<compile_context>
chip_gen: v7x
topology: tpu7x:2x2x1
jax: 0.10.0
libtpu: 0.0.40
codegen_flags: <defaults>
</compile_context>

<pallas_src>
import functools

import jax
import jax.numpy as jnp
from jax import lax
from jax.experimental import pallas as pl
from jax.experimental.pallas import tpu as pltpu


def _round_up(x, m):
    return (x + m - 1) // m * m


# -----------------------------------------------------------------------------
# Pallas kernels: 3x3 conv as 9 shifted-row matmuls (+ fused residual for conv2)
# -----------------------------------------------------------------------------
def _conv3x3_kernel(x_ref, w_ref, b_ref, o_ref, acc_ref, *, offsets, relu):
    """x_ref: (R, K) bf16 flat padded-grid rows of one image; w_ref: (9, K, Nt)
    bf16 (BN scale folded); b_ref: (1, Nt) f32 folded BN bias; o_ref: (P, Nt);
    acc_ref: (P, Nt) f32 VMEM scratch."""
    pout = acc_ref.shape[0]
    acc_ref[...] = jnp.zeros_like(acc_ref) + b_ref[...]        # bias in acc init
    for t, off in enumerate(offsets):                          # 9 static taps
        acc_ref[...] += jnp.dot(x_ref[pl.ds(off, pout), :], w_ref[t],
                                preferred_element_type=jnp.float32)
    y = acc_ref[...]
    if relu:
        y = jnp.maximum(y, 0.0)
    o_ref[...] = y.astype(o_ref.dtype)


def _conv3x3_res_kernel(x_ref, w_ref, b_ref, r_ref, wsc_ref, o_ref, acc_ref, *,
                        offsets):
    """Conv2 variant: also fuses the residual branch (projection 1x1-conv+BN or
    identity-as-eye) as one extra matmul, then relu."""
    pout = acc_ref.shape[0]
    acc_ref[...] = jnp.zeros_like(acc_ref) + b_ref[...]
    acc_ref[...] += jnp.dot(r_ref[...], wsc_ref[...],
                            preferred_element_type=jnp.float32)
    for t, off in enumerate(offsets):
        acc_ref[...] += jnp.dot(x_ref[pl.ds(off, pout), :], w_ref[t],
                                preferred_element_type=jnp.float32)
    o_ref[...] = jnp.maximum(acc_ref[...], 0.0).astype(o_ref.dtype)


def _conv3x3_pallas(rows, w_taps, bias, offsets, pout_pad, cp, *, relu,
                    out_dtype, res_rows=None, wsc=None):
    """rows: (N, R, Kp) bf16; w_taps: (9, Kp, cp) bf16; bias: (1, cp) f32;
    optional res_rows: (N, pout_pad, Crp) bf16 and wsc: (Crp, cp) bf16.
    Returns (N, pout_pad, cp) in out_dtype."""
    n, r, kp = rows.shape
    nt = 256 if cp % 256 == 0 else 128                 # lane-dense output tiles
    grid = (cp // nt, n)                               # weights resident over n

    in_specs = [
        pl.BlockSpec((None, r, kp), lambda j, b: (b, 0, 0)),
        pl.BlockSpec((9, kp, nt), lambda j, b: (0, 0, j)),
        pl.BlockSpec((1, nt), lambda j, b: (0, j)),
    ]
    args = [rows, w_taps, bias]
    if res_rows is None:
        kern = functools.partial(_conv3x3_kernel, offsets=tuple(offsets),
                                 relu=relu)
    else:
        pp, crp = res_rows.shape[1:]
        in_specs += [
            pl.BlockSpec((None, pp, crp), lambda j, b: (b, 0, 0)),
            pl.BlockSpec((crp, nt), lambda j, b: (0, j)),
        ]
        args += [res_rows, wsc]
        kern = functools.partial(_conv3x3_res_kernel, offsets=tuple(offsets))

    return pl.pallas_call(
        kern,
        out_shape=jax.ShapeDtypeStruct((n, pout_pad, cp), out_dtype),
        grid_spec=pltpu.PrefetchScalarGridSpec(
            num_scalar_prefetch=0,
            grid=grid,
            in_specs=in_specs,
            out_specs=pl.BlockSpec((None, pout_pad, nt), lambda j, b: (b, 0, j)),
            scratch_shapes=[pltpu.VMEM((pout_pad, nt), jnp.float32)],
        ),
        compiler_params=pltpu.CompilerParams(
            dimension_semantics=("parallel", "parallel"),
            vmem_limit_bytes=32 * 1024 * 1024,
        ),
    )(*args)


# -----------------------------------------------------------------------------
# Glue: flat padded-grid row layout, BN folding, weight reshaping.
# -----------------------------------------------------------------------------
def _build_conv_input(x, stride):
    """x: (N, H, W, C) bf16.  Returns (rows, offsets, pout_pad, (Hp, Wp)).

    rows[n, q + offsets[t], :] is the pixel that tap t of a 3x3/pad-1/stride-s
    conv needs for the output at flat position q on the (Hp, Wp) top-left-
    aligned output grid.  Valid outputs are q = i*Wp + j with i < Ho, j < Wo;
    the remaining grid rows are border garbage discarded by the caller."""
    n, h, w, c = x.shape
    s = stride
    xp = jnp.pad(x, ((0, 0), (1, 1), (1, 1), (0, 0)))            # spatial zero-pad
    hp = -(-(h + 2) // s)
    wp = -(-(w + 2) // s)
    xp = jnp.pad(xp, ((0, 0), (0, hp * s - (h + 2)),
                      (0, wp * s - (w + 2)), (0, 0)))
    # Parity split (turns stride s into stride 1): plane(py,px)[i,j] = xp[s*i+py, s*j+px]
    par = jnp.transpose(xp.reshape(n, hp, s, wp, s, c), (0, 2, 4, 1, 3, 5))
    par = par.reshape(n, s * s * hp * wp, c)
    plane = hp * wp
    pout_pad = _round_up(plane, 16)
    offsets = [((ky % s) * s + (kx % s)) * plane + (ky // s) * wp + (kx // s)
               for ky in range(3) for kx in range(3)]
    rtot = max(_round_up(max(offsets) + pout_pad, 16), s * s * plane)
    cpad = _round_up(c, 16)
    rows = jnp.pad(par, ((0, 0), (0, rtot - s * s * plane), (0, cpad - c)))
    return rows, offsets, pout_pad, (hp, wp)


def _fold_bn(gamma, beta, mean, var, eps=1e-5):
    scale = gamma / jnp.sqrt(var + eps)
    return scale, beta - mean * scale


def _w3x3_to_taps(w_oihw, scale, k_pad, cout_pad):
    """(Cout, Cin, 3, 3) -> (9, k_pad, cout_pad) bf16, BN scale folded in."""
    cout, cin = w_oihw.shape[:2]
    w = jnp.transpose(w_oihw, (2, 3, 1, 0)).reshape(9, cin, cout)
    w = w * scale[None, None, :]
    w = jnp.pad(w, ((0, 0), (0, k_pad - cin), (0, cout_pad - cout)))
    return w.astype(jnp.bfloat16)


@functools.partial(jax.jit, static_argnums=(2,))
def basic_block_forward(x_nchw, params, stride):
    x = jnp.transpose(x_nchw, (0, 2, 3, 1)).astype(jnp.bfloat16)  # NCHW->NHWC, bf16 early
    n, h, w, cin = x.shape
    planes = params["conv1_w"].shape[0]
    cp = _round_up(planes, 128)                        # lane-dense output channels
    ho = (h - 1) // stride + 1
    wo = (w - 1) // stride + 1

    # ---- conv1 (3x3, stride s, pad 1) + bn1 + relu  -> bf16, cp channels ----
    rows1, offs1, pout1, (hp1, wp1) = _build_conv_input(x, stride)
    s1, b1 = _fold_bn(params["bn1_gamma"], params["bn1_beta"],
                      params["bn1_mean"], params["bn1_var"])
    w1 = _w3x3_to_taps(params["conv1_w"], s1, rows1.shape[2], cp)
    b1p = jnp.pad(b1, (0, cp - planes)).reshape(1, cp).astype(jnp.float32)
    out1 = _conv3x3_pallas(rows1, w1, b1p, offs1, pout1, cp,
                           relu=True, out_dtype=jnp.bfloat16)
    y1 = out1[:, :hp1 * wp1, :].reshape(n, hp1, wp1, cp)[:, :ho, :wo, :]

    # ---- conv2 inputs (stride 1, pad 1) on the conv1 output ----
    rows2, offs2, pout2, (hp2, wp2) = _build_conv_input(y1, 1)
    s2, b2 = _fold_bn(params["bn2_gamma"], params["bn2_beta"],
                      params["bn2_mean"], params["bn2_var"])
    w2 = _w3x3_to_taps(params["conv2_w"], s2, rows2.shape[2], cp)
    bias2 = jnp.pad(b2, (0, cp - planes))

    # ---- shortcut, fused into the conv2 kernel as one extra matmul ----
    #   projection: (x strided) @ (BN-scaled 1x1 weights) [+ its BN bias]
    #   identity:   x @ eye   (exact in bf16, keeps residual at native channels)
    crp = _round_up(cin, 16)
    if stride != 1 or cin != planes:
        ss, bs = _fold_bn(params["sc_bn_gamma"], params["sc_bn_beta"],
                          params["sc_bn_mean"], params["sc_bn_var"])
        wsc = params["sc_conv_w"][:, :, 0, 0].T * ss[None, :]     # (cin, planes)
        bias2 = bias2 + jnp.pad(bs, (0, cp - planes))
    else:
        wsc = jnp.eye(cin, dtype=jnp.float32)
    wsc = jnp.pad(wsc, ((0, crp - cin), (0, cp - planes))).astype(jnp.bfloat16)
    xs = x[:, ::stride, ::stride, :]                              # (n, ho, wo, cin)
    res = jnp.pad(xs, ((0, 0), (0, hp2 - ho), (0, wp2 - wo), (0, crp - cin)))
    res = res.reshape(n, hp2 * wp2, crp)
    res = jnp.pad(res, ((0, 0), (0, pout2 - hp2 * wp2), (0, 0)))
    bias2 = bias2.reshape(1, cp).astype(jnp.float32)

    # ---- conv2 (3x3) + bn2 + shortcut + relu — single fused kernel ----
    out2 = _conv3x3_pallas(rows2, w2, bias2, offs2, pout2, cp,
                           relu=True, out_dtype=jnp.float32,
                           res_rows=res, wsc=wsc)
    y = out2[:, :hp2 * wp2, :].reshape(n, hp2, wp2, cp)[:, :ho, :wo, :planes]
    return jnp.transpose(y, (0, 3, 1, 2))              # NHWC -> NCHW


# -----------------------------------------------------------------------------
# Deterministic parameter init + pure-JAX reference.
# -----------------------------------------------------------------------------
def init_params(key, in_planes, planes, stride):
    ks = jax.random.split(key, 12)
    p = {
        "conv1_w": 0.1 * jax.random.normal(ks[0], (planes, in_planes, 3, 3), jnp.float32),
        "bn1_gamma": 1.0 + 0.1 * jax.random.normal(ks[1], (planes,), jnp.float32),
        "bn1_beta": 0.1 * jax.random.normal(ks[2], (planes,), jnp.float32),
        "bn1_mean": 0.05 * jax.random.normal(ks[3], (planes,), jnp.float32),
        "bn1_var": 0.9 + 0.1 * jax.random.uniform(ks[4], (planes,), jnp.float32),
        "conv2_w": 0.1 * jax.random.normal(ks[5], (planes, planes, 3, 3), jnp.float32),
        "bn2_gamma": 1.0 + 0.1 * jax.random.normal(ks[6], (planes,), jnp.float32),
        "bn2_beta": 0.1 * jax.random.normal(ks[7], (planes,), jnp.float32),
        "bn2_mean": 0.05 * jax.random.normal(ks[8], (planes,), jnp.float32),
        "bn2_var": 0.9 + 0.1 * jax.random.uniform(ks[9], (planes,), jnp.float32),
    }
    if stride != 1 or in_planes != planes:
        p["sc_conv_w"] = 0.1 * jax.random.normal(ks[10], (planes, in_planes, 1, 1), jnp.float32)
        p["sc_bn_gamma"] = jnp.ones((planes,), jnp.float32)
        p["sc_bn_beta"] = jnp.zeros((planes,), jnp.float32)
        p["sc_bn_mean"] = 0.05 * jax.random.normal(ks[11], (planes,), jnp.float32)
        p["sc_bn_var"] = jnp.full((planes,), 0.95, jnp.float32)
    return p


def reference_forward(x_nchw, params, stride, eps=1e-5):
    def conv(x, w, s, pad):
        return lax.conv_general_dilated(
            x, w, (s, s), [(pad, pad), (pad, pad)],
            dimension_numbers=("NCHW", "OIHW", "NCHW"))

    def bn(x, g, b, m, v):
        g, b, m, v = (t[None, :, None, None] for t in (g, b, m, v))
        return g * (x - m) / jnp.sqrt(v + eps) + b

    out = jax.nn.relu(bn(conv(x_nchw, params["conv1_w"], stride, 1),
                         params["bn1_gamma"], params["bn1_beta"],
                         params["bn1_mean"], params["bn1_var"]))
    out = bn(conv(out, params["conv2_w"], 1, 1),
             params["bn2_gamma"], params["bn2_beta"],
             params["bn2_mean"], params["bn2_var"])
    if "sc_conv_w" in params:
        sc = bn(conv(x_nchw, params["sc_conv_w"], stride, 0),
                params["sc_bn_gamma"], params["sc_bn_beta"],
                params["sc_bn_mean"], params["sc_bn_var"])
    else:
        sc = x_nchw
    return jax.nn.relu(out + sc)


# -----------------------------------------------------------------------------
if __name__ == "__main__":
    key = jax.random.PRNGKey(0)
    k_x1, k_p1, k_x2, k_p2 = jax.random.split(key, 4)

    # Case 1: projection shortcut (stride 2, channel change).
    in_planes, planes, stride = 4, 8, 2
    N, H, W = 2, 16, 16
    x1 = jax.random.normal(k_x1, (N, in_planes, H, W), jnp.float32)
    params1 = init_params(k_p1, in_planes, planes, stride)
    out1 = jax.block_until_ready(basic_block_forward(x1, params1, stride))
    ref1 = jax.block_until_ready(reference_forward(x1, params1, stride))
    assert out1.shape == ref1.shape == (N, planes, H // stride, W // stride)
    assert jnp.allclose(out1, ref1, rtol=3e-2, atol=3e-2), (
        float(jnp.max(jnp.abs(out1 - ref1))))

    # Case 2: identity shortcut (stride 1, same channels).
    in_planes, planes, stride = 8, 8, 1
    x2 = jax.random.normal(k_x2, (N, in_planes, H, W), jnp.float32)
    params2 = init_params(k_p2, in_planes, planes, stride)
    out2 = jax.block_until_ready(basic_block_forward(x2, params2, stride))
    ref2 = jax.block_until_ready(reference_forward(x2, params2, stride))
    assert out2.shape == ref2.shape == (N, planes, H, W)
    assert jnp.allclose(out2, ref2, rtol=3e-2, atol=3e-2), (
        float(jnp.max(jnp.abs(out2 - ref2))))

    print("KERNEL_OK")
</pallas_src>

<mosaic_0001>
module attributes {stable_mosaic.version = 11 : i64} {
  func.func @_conv3x3_kernel(%arg0: i32, %arg1: i32, %arg2: memref<1x352x16xbf16, #tpu.memory_space<vmem>>, %arg3: memref<9x16x128xbf16, #tpu.memory_space<vmem>>, %arg4: memref<1x128xf32, #tpu.memory_space<vmem>>, %arg5: memref<1x96x128xbf16, #tpu.memory_space<vmem>>, %arg6: memref<96x128xf32, #tpu.memory_space<vmem>>) attributes {dimension_semantics = [#tpu.dimension_semantics<parallel>, #tpu.dimension_semantics<parallel>], iteration_bounds = array<i64: 1, 2>, scalar_prefetch = 0 : i64, scratch_operands = 1 : i64, tpu.core_type = #tpu.core_type<tc>, window_params = [{transform_indices = @transform_0, window_bounds = array<i64: 1, 352, 16>}, {transform_indices = @transform_1, window_bounds = array<i64: 9, 16, 128>}, {transform_indices = @transform_2, window_bounds = array<i64: 1, 128>}, {transform_indices = @transform_3, window_bounds = array<i64: 1, 96, 128>}]} {
    %cst = arith.constant 0.000000e+00 : f32
    %0 = vector.broadcast %cst : f32 to vector<96x128xf32>
    %c0 = arith.constant 0 : index
    %c0_0 = arith.constant 0 : index
    %1 = vector.load %arg4[%c0, %c0_0] : memref<1x128xf32, #tpu.memory_space<vmem>>, vector<1x128xf32>
    %2 = vector.broadcast %1 : vector<1x128xf32> to vector<96x128xf32>
    %3 = arith.addf %0, %2 : vector<96x128xf32>
    %c0_1 = arith.constant 0 : index
    %c0_2 = arith.constant 0 : index
    %4 = vector.load %arg6[%c0_1, %c0_2] : memref<96x128xf32, #tpu.memory_space<vmem>>, vector<96x128xf32>
    tpu.vector_store %arg6[%c0_1, %c0_2], %3 {strides = array<i32>} : memref<96x128xf32, #tpu.memory_space<vmem>>, vector<96x128xf32>,
    %c0_3 = arith.constant 0 : index
    %c0_4 = arith.constant 0 : index
    %5 = vector.load %arg6[%c0_3, %c0_4] : memref<96x128xf32, #tpu.memory_space<vmem>>, vector<96x128xf32>
    %c0_5 = arith.constant 0 : index
    %c0_6 = arith.constant 0 : index
    %c0_7 = arith.constant 0 : index
    %6 = vector.load %arg2[%c0_5, %c0_6, %c0_7] : memref<1x352x16xbf16, #tpu.memory_space<vmem>>, vector<1x96x16xbf16>
    %7 = vector.shape_cast %6 : vector<1x96x16xbf16> to vector<96x16xbf16>
    %c0_8 = arith.constant 0 : index
    %c0_9 = arith.constant 0 : index
    %c0_10 = arith.constant 0 : index
    %8 = vector.load %arg3[%c0_8, %c0_9, %c0_10] : memref<9x16x128xbf16, #tpu.memory_space<vmem>>, vector<1x16x128xbf16>
    %9 = vector.shape_cast %8 : vector<1x16x128xbf16> to vector<16x128xbf16>
    %cst_11 = arith.constant dense<0.000000e+00> : vector<96x128xf32>
    %10 = tpu.matmul %7, %9, %cst_11 {dimension_numbers = #tpu.dot_dimension_numbers<[1], [0], [0], [1], [0, 0, 1, 1], [], []>} : vector<96x16xbf16>, vector<16x128xbf16>, vector<96x128xf32> -> vector<96x128xf32>
    %11 = arith.addf %5, %10 : vector<96x128xf32>
    %c0_12 = arith.constant 0 : index
    %c0_13 = arith.constant 0 : index
    %12 = vector.load %arg6[%c0_12, %c0_13] : memref<96x128xf32, #tpu.memory_space<vmem>>, vector<96x128xf32>
    tpu.vector_store %arg6[%c0_12, %c0_13], %11 {strides = array<i32>} : memref<96x128xf32, #tpu.memory_space<vmem>>, vector<96x128xf32>,
    %c0_14 = arith.constant 0 : index
    %c0_15 = arith.constant 0 : index
    %13 = vector.load %arg6[%c0_14, %c0_15] : memref<96x128xf32, #tpu.memory_space<vmem>>, vector<96x128xf32>
    %c0_16 = arith.constant 0 : index
    %c81 = arith.constant 81 : index
    %c0_17 = arith.constant 0 : index
    %14 = vector.load %arg2[%c0_16, %c81, %c0_17] : memref<1x352x16xbf16, #tpu.memory_space<vmem>>, vector<1x96x16xbf16>
    %15 = vector.shape_cast %14 : vector<1x96x16xbf16> to vector<96x16xbf16>
    %c1 = arith.constant 1 : index
    %c0_18 = arith.constant 0 : index
    %c0_19 = arith.constant 0 : index
    %16 = vector.load %arg3[%c1, %c0_18, %c0_19] : memref<9x16x128xbf16, #tpu.memory_space<vmem>>, vector<1x16x128xbf16>
    %17 = vector.shape_cast %16 : vector<1x16x128xbf16> to vector<16x128xbf16>
    %cst_20 = arith.constant dense<0.000000e+00> : vector<96x128xf32>
    %18 = tpu.matmul %15, %17, %cst_20 {dimension_numbers = #tpu.dot_dimension_numbers<[1], [0], [0], [1], [0, 0, 1, 1], [], []>} : vector<96x16xbf16>, vector<16x128xbf16>, vector<96x128xf32> -> vector<96x128xf32>
    %19 = arith.addf %13, %18 : vector<96x128xf32>
    %c0_21 = arith.constant 0 : index
    %c0_22 = arith.constant 0 : index
    %20 = vector.load %arg6[%c0_21, %c0_22] : memref<96x128xf32, #tpu.memory_space<vmem>>, vector<96x128xf32>
    tpu.vector_store %arg6[%c0_21, %c0_22], %19 {strides = array<i32>} : memref<96x128xf32, #tpu.memory_space<vmem>>, vector<96x128xf32>,
    %c0_23 = arith.constant 0 : index
    %c0_24 = arith.constant 0 : index
    %21 = vector.load %arg6[%c0_23, %c0_24] : memref<96x128xf32, #tpu.memory_space<vmem>>, vector<96x128xf32>
    %c0_25 = arith.constant 0 : index
    %c1_26 = arith.constant 1 : index
    %c0_27 = arith.constant 0 : index
    %22 = vector.load %arg2[%c0_25, %c1_26, %c0_27] : memref<1x352x16xbf16, #tpu.memory_space<vmem>>, vector<1x96x16xbf16>
    %23 = vector.shape_cast %22 : vector<1x96x16xbf16> to vector<96x16xbf16>
    %c2 = arith.constant 2 : index
    %c0_28 = arith.constant 0 : index
    %c0_29 = arith.constant 0 : index
    %24 = vector.load %arg3[%c2, %c0_28, %c0_29] : memref<9x16x128xbf16, #tpu.memory_space<vmem>>, vector<1x16x128xbf16>
    %25 = vector.shape_cast %24 : vector<1x16x128xbf16> to vector<16x128xbf16>
    %cst_30 = arith.constant dense<0.000000e+00> : vector<96x128xf32>
    %26 = tpu.matmul %23, %25, %cst_30 {dimension_numbers = #tpu.dot_dimension_numbers<[1], [0], [0], [1], [0, 0, 1, 1], [], []>} : vector<96x16xbf16>, vector<16x128xbf16>, vector<96x128xf32> -> vector<96x128xf32>
    %27 = arith.addf %21, %26 : vector<96x128xf32>
    %c0_31 = arith.constant 0 : index
    %c0_32 = arith.constant 0 : index
    %28 = vector.load %arg6[%c0_31, %c0_32] : memref<96x128xf32, #tpu.memory_space<vmem>>, vector<96x128xf32>
    tpu.vector_store %arg6[%c0_31, %c0_32], %27 {strides = array<i32>} : memref<96x128xf32, #tpu.memory_space<vmem>>, vector<96x128xf32>,
    %c0_33 = arith.constant 0 : index
    %c0_34 = arith.constant 0 : index
    %29 = vector.load %arg6[%c0_33, %c0_34] : memref<96x128xf32, #tpu.memory_space<vmem>>, vector<96x128xf32>
    %c0_35 = arith.constant 0 : index
    %c162 = arith.constant 162 : index
    %c0_36 = arith.constant 0 : index
    %30 = vector.load %arg2[%c0_35, %c162, %c0_36] : memref<1x352x16xbf16, #tpu.memory_space<vmem>>, vector<1x96x16xbf16>
    %31 = vector.shape_cast %30 : vector<1x96x16xbf16> to vector<96x16xbf16>
    %c3 = arith.constant 3 : index
    %c0_37 = arith.constant 0 : index
    %c0_38 = arith.constant 0 : index
    %32 = vector.load %arg3[%c3, %c0_37, %c0_38] : memref<9x16x128xbf16, #tpu.memory_space<vmem>>, vector<1x16x128xbf16>
    %33 = vector.shape_cast %32 : vector<1x16x128xbf16> to vector<16x128xbf16>
    %cst_39 = arith.constant dense<0.000000e+00> : vector<96x128xf32>
    %34 = tpu.matmul %31, %33, %cst_39 {dimension_numbers = #tpu.dot_dimension_numbers<[1], [0], [0], [1], [0, 0, 1, 1], [], []>} : vector<96x16xbf16>, vector<16x128xbf16>, vector<96x128xf32> -> vector<96x128xf32>
    %35 = arith.addf %29, %34 : vector<96x128xf32>
    %c0_40 = arith.constant 0 : index
    %c0_41 = arith.constant 0 : index
    %36 = vector.load %arg6[%c0_40, %c0_41] : memref<96x128xf32, #tpu.memory_space<vmem>>, vector<96x128xf32>
    tpu.vector_store %arg6[%c0_40, %c0_41], %35 {strides = array<i32>} : memref<96x128xf32, #tpu.memory_space<vmem>>, vector<96x128xf32>,
    %c0_42 = arith.constant 0 : index
    %c0_43 = arith.constant 0 : index
    %37 = vector.load %arg6[%c0_42, %c0_43] : memref<96x128xf32, #tpu.memory_space<vmem>>, vector<96x128xf32>
    %c0_44 = arith.constant 0 : index
    %c243 = arith.constant 243 : index
    %c0_45 = arith.constant 0 : index
    %38 = vector.load %arg2[%c0_44, %c243, %c0_45] : memref<1x352x16xbf16, #tpu.memory_space<vmem>>, vector<1x96x16xbf16>
    %39 = vector.shape_cast %38 : vector<1x96x16xbf16> to vector<96x16xbf16>
    %c4 = arith.constant 4 : index
    %c0_46 = arith.constant 0 : index
    %c0_47 = arith.constant 0 : index
    %40 = vector.load %arg3[%c4, %c0_46, %c0_47] : memref<9x16x128xbf16, #tpu.memory_space<vmem>>, vector<1x16x128xbf16>
    %41 = vector.shape_cast %40 : vector<1x16x128xbf16> to vector<16x128xbf16>
    %cst_48 = arith.constant dense<0.000000e+00> : vector<96x128xf32>
    %42 = tpu.matmul %39, %41, %cst_48 {dimension_numbers = #tpu.dot_dimension_numbers<[1], [0], [0], [1], [0, 0, 1, 1], [], []>} : vector<96x16xbf16>, vector<16x128xbf16>, vector<96x128xf32> -> vector<96x128xf32>
    %43 = arith.addf %37, %42 : vector<96x128xf32>
    %c0_49 = arith.constant 0 : index
    %c0_50 = arith.constant 0 : index
    %44 = vector.load %arg6[%c0_49, %c0_50] : memref<96x128xf32, #tpu.memory_space<vmem>>, vector<96x128xf32>
    tpu.vector_store %arg6[%c0_49, %c0_50], %43 {strides = array<i32>} : memref<96x128xf32, #tpu.memory_space<vmem>>, vector<96x128xf32>,
    %c0_51 = arith.constant 0 : index
    %c0_52 = arith.constant 0 : index
    %45 = vector.load %arg6[%c0_51, %c0_52] : memref<96x128xf32, #tpu.memory_space<vmem>>, vector<96x128xf32>
    %c0_53 = arith.constant 0 : index
    %c163 = arith.constant 163 : index
    %c0_54 = arith.constant 0 : index
    %46 = vector.load %arg2[%c0_53, %c163, %c0_54] : memref<1x352x16xbf16, #tpu.memory_space<vmem>>, vector<1x96x16xbf16>
    %47 = vector.shape_cast %46 : vector<1x96x16xbf16> to vector<96x16xbf16>
    %c5 = arith.constant 5 : index
    %c0_55 = arith.constant 0 : index
    %c0_56 = arith.constant 0 : index
    %48 = vector.load %arg3[%c5, %c0_55, %c0_56] : memref<9x16x128xbf16, #tpu.memory_space<vmem>>, vector<1x16x128xbf16>
    %49 = vector.shape_cast %48 : vector<1x16x128xbf16> to vector<16x128xbf16>
    %cst_57 = arith.constant dense<0.000000e+00> : vector<96x128xf32>
    %50 = tpu.matmul %47, %49, %cst_57 {dimension_numbers = #tpu.dot_dimension_numbers<[1], [0], [0], [1], [0, 0, 1, 1], [], []>} : vector<96x16xbf16>, vector<16x128xbf16>, vector<96x128xf32> -> vector<96x128xf32>
    %51 = arith.addf %45, %50 : vector<96x128xf32>
    %c0_58 = arith.constant 0 : index
    %c0_59 = arith.constant 0 : index
    %52 = vector.load %arg6[%c0_58, %c0_59] : memref<96x128xf32, #tpu.memory_space<vmem>>, vector<96x128xf32>
    tpu.vector_store %arg6[%c0_58, %c0_59], %51 {strides = array<i32>} : memref<96x128xf32, #tpu.memory_space<vmem>>, vector<96x128xf32>,
    %c0_60 = arith.constant 0 : index
    %c0_61 = arith.constant 0 : index
    %53 = vector.load %arg6[%c0_60, %c0_61] : memref<96x128xf32, #tpu.memory_space<vmem>>, vector<96x128xf32>
    %c0_62 = arith.constant 0 : index
    %c9 = arith.constant 9 : index
    %c0_63 = arith.constant 0 : index
    %54 = vector.load %arg2[%c0_62, %c9, %c0_63] : memref<1x352x16xbf16, #tpu.memory_space<vmem>>, vector<1x96x16xbf16>
    %55 = vector.shape_cast %54 : vector<1x96x16xbf16> to vector<96x16xbf16>
    %c6 = arith.constant 6 : index
    %c0_64 = arith.constant 0 : index
    %c0_65 = arith.constant 0 : index
    %56 = vector.load %arg3[%c6, %c0_64, %c0_65] : memref<9x16x128xbf16, #tpu.memory_space<vmem>>, vector<1x16x128xbf16>
    %57 = vector.shape_cast %56 : vector<1x16x128xbf16> to vector<16x128xbf16>
    %cst_66 = arith.constant dense<0.000000e+00> : vector<96x128xf32>
    %58 = tpu.matmul %55, %57, %cst_66 {dimension_numbers = #tpu.dot_dimension_numbers<[1], [0], [0], [1], [0, 0, 1, 1], [], []>} : vector<96x16xbf16>, vector<16x128xbf16>, vector<96x128xf32> -> vector<96x128xf32>
    %59 = arith.addf %53, %58 : vector<96x128xf32>
    %c0_67 = arith.constant 0 : index
    %c0_68 = arith.constant 0 : index
    %60 = vector.load %arg6[%c0_67, %c0_68] : memref<96x128xf32, #tpu.memory_space<vmem>>, vector<96x128xf32>
    tpu.vector_store %arg6[%c0_67, %c0_68], %59 {strides = array<i32>} : memref<96x128xf32, #tpu.memory_space<vmem>>, vector<96x128xf32>,
    %c0_69 = arith.constant 0 : index
    %c0_70 = arith.constant 0 : index
    %61 = vector.load %arg6[%c0_69, %c0_70] : memref<96x128xf32, #tpu.memory_space<vmem>>, vector<96x128xf32>
    %c0_71 = arith.constant 0 : index
    %c90 = arith.constant 90 : index
    %c0_72 = arith.constant 0 : index
    %62 = vector.load %arg2[%c0_71, %c90, %c0_72] : memref<1x352x16xbf16, #tpu.memory_space<vmem>>, vector<1x96x16xbf16>
    %63 = vector.shape_cast %62 : vector<1x96x16xbf16> to vector<96x16xbf16>
    %c7 = arith.constant 7 : index
    %c0_73 = arith.constant 0 : index
    %c0_74 = arith.constant 0 : index
    %64 = vector.load %arg3[%c7, %c0_73, %c0_74] : memref<9x16x128xbf16, #tpu.memory_space<vmem>>, vector<1x16x128xbf16>
    %65 = vector.shape_cast %64 : vector<1x16x128xbf16> to vector<16x128xbf16>
    %cst_75 = arith.constant dense<0.000000e+00> : vector<96x128xf32>
    %66 = tpu.matmul %63, %65, %cst_75 {dimension_numbers = #tpu.dot_dimension_numbers<[1], [0], [0], [1], [0, 0, 1, 1], [], []>} : vector<96x16xbf16>, vector<16x128xbf16>, vector<96x128xf32> -> vector<96x128xf32>
    %67 = arith.addf %61, %66 : vector<96x128xf32>
    %c0_76 = arith.constant 0 : index
    %c0_77 = arith.constant 0 : index
    %68 = vector.load %arg6[%c0_76, %c0_77] : memref<96x128xf32, #tpu.memory_space<vmem>>, vector<96x128xf32>
    tpu.vector_store %arg6[%c0_76, %c0_77], %67 {strides = array<i32>} : memref<96x128xf32, #tpu.memory_space<vmem>>, vector<96x128xf32>,
    %c0_78 = arith.constant 0 : index
    %c0_79 = arith.constant 0 : index
    %69 = vector.load %arg6[%c0_78, %c0_79] : memref<96x128xf32, #tpu.memory_space<vmem>>, vector<96x128xf32>
    %c0_80 = arith.constant 0 : index
    %c10 = arith.constant 10 : index
    %c0_81 = arith.constant 0 : index
    %70 = vector.load %arg2[%c0_80, %c10, %c0_81] : memref<1x352x16xbf16, #tpu.memory_space<vmem>>, vector<1x96x16xbf16>
    %71 = vector.shape_cast %70 : vector<1x96x16xbf16> to vector<96x16xbf16>
    %c8 = arith.constant 8 : index
    %c0_82 = arith.constant 0 : index
    %c0_83 = arith.constant 0 : index
    %72 = vector.load %arg3[%c8, %c0_82, %c0_83] : memref<9x16x128xbf16, #tpu.memory_space<vmem>>, vector<1x16x128xbf16>
    %73 = vector.shape_cast %72 : vector<1x16x128xbf16> to vector<16x128xbf16>
    %cst_84 = arith.constant dense<0.000000e+00> : vector<96x128xf32>
    %74 = tpu.matmul %71, %73, %cst_84 {dimension_numbers = #tpu.dot_dimension_numbers<[1], [0], [0], [1], [0, 0, 1, 1], [], []>} : vector<96x16xbf16>, vector<16x128xbf16>, vector<96x128xf32> -> vector<96x128xf32>
    %75 = arith.addf %69, %74 : vector<96x128xf32>
    %c0_85 = arith.constant 0 : index
    %c0_86 = arith.constant 0 : index
    %76 = vector.load %arg6[%c0_85, %c0_86] : memref<96x128xf32, #tpu.memory_space<vmem>>, vector<96x128xf32>
    tpu.vector_store %arg6[%c0_85, %c0_86], %75 {strides = array<i32>} : memref<96x128xf32, #tpu.memory_space<vmem>>, vector<96x128xf32>,
    %c0_87 = arith.constant 0 : index
    %c0_88 = arith.constant 0 : index
    %77 = vector.load %arg6[%c0_87, %c0_88] : memref<96x128xf32, #tpu.memory_space<vmem>>, vector<96x128xf32>
    %cst_89 = arith.constant 0.000000e+00 : f32
    %78 = vector.broadcast %cst_89 : f32 to vector<96x128xf32>
    %79 = arith.maximumf %77, %78 : vector<96x128xf32>
    %80 = arith.truncf %79 : vector<96x128xf32> to vector<96x128xbf16>
    %c0_90 = arith.constant 0 : index
    %c0_91 = arith.constant 0 : index
    %c0_92 = arith.constant 0 : index
    %81 = vector.load %arg5[%c0_90, %c0_91, %c0_92] : memref<1x96x128xbf16, #tpu.memory_space<vmem>>, vector<1x96x128xbf16>
    %82 = vector.shape_cast %81 : vector<1x96x128xbf16> to vector<96x128xbf16>
    %83 = vector.shape_cast %80 : vector<96x128xbf16> to vector<1x96x128xbf16>
    tpu.vector_store %arg5[%c0_90, %c0_91, %c0_92], %83 {strides = array<i32>} : memref<1x96x128xbf16, #tpu.memory_space<vmem>>, vector<1x96x128xbf16>,
    return
  }
  func.func @transform_0(%arg0: i32, %arg1: i32) -> (i32, i32, i32) {
    %c0_i32 = arith.constant 0 : i32
    %c0_i32_0 = arith.constant 0 : i32
    %c0_i32_1 = arith.constant 0 : i32
    return %arg1, %c0_i32, %c0_i32_0 : i32, i32, i32
  }
  func.func @transform_1(%arg0: i32, %arg1: i32) -> (i32, i32, i32) {
    %c0_i32 = arith.constant 0 : i32
    %c0_i32_0 = arith.constant 0 : i32
    %c0_i32_1 = arith.constant 0 : i32
    return %c0_i32, %c0_i32_0, %arg0 : i32, i32, i32
  }
  func.func @transform_2(%arg0: i32, %arg1: i32) -> (i32, i32) {
    %c0_i32 = arith.constant 0 : i32
    %c0_i32_0 = arith.constant 0 : i32
    return %c0_i32, %arg0 : i32, i32
  }
  func.func @transform_3(%arg0: i32, %arg1: i32) -> (i32, i32, i32) {
    %c0_i32 = arith.constant 0 : i32
    %c0_i32_0 = arith.constant 0 : i32
    return %arg1, %c0_i32, %arg0 : i32, i32, i32
  }
}

module attributes {stable_mosaic.version = 11 : i64} {
  func.func @_conv3x3_res_kernel(%arg0: i32, %arg1: i32, %arg2: memref<1x144x128xbf16, #tpu.memory_space<vmem>>, %arg3: memref<9x128x128xbf16, #tpu.memory_space<vmem>>, %arg4: memref<1x128xf32, #tpu.memory_space<vmem>>, %arg5: memref<1x112x16xbf16, #tpu.memory_space<vmem>>, %arg6: memref<16x128xbf16, #tpu.memory_space<vmem>>, %arg7: memref<1x112x128xf32, #tpu.memory_space<vmem>>, %arg8: memref<112x128xf32, #tpu.memory_space<vmem>>) attributes {dimension_semantics = [#tpu.dimension_semantics<parallel>, #tpu.dimension_semantics<parallel>], iteration_bounds = array<i64: 1, 2>, scalar_prefetch = 0 : i64, scratch_operands = 1 : i64, tpu.core_type = #tpu.core_type<tc>, window_params = [{transform_indices = @transform_0, window_bounds = array<i64: 1, 144, 128>}, {transform_indices = @transform_1, window_bounds = array<i64: 9, 128, 128>}, {transform_indices = @transform_2, window_bounds = array<i64: 1, 128>}, {transform_indices = @transform_3, window_bounds = array<i64: 1, 112, 16>}, {transform_indices = @transform_4, window_bounds = array<i64: 16, 128>}, {transform_indices = @transform_5, window_bounds = array<i64: 1, 112, 128>}]} {
    %cst = arith.constant 0.000000e+00 : f32
    %0 = vector.broadcast %cst : f32 to vector<112x128xf32>
    %c0 = arith.constant 0 : index
    %c0_0 = arith.constant 0 : index
    %1 = vector.load %arg4[%c0, %c0_0] : memref<1x128xf32, #tpu.memory_space<vmem>>, vector<1x128xf32>
    %2 = vector.broadcast %1 : vector<1x128xf32> to vector<112x128xf32>
    %3 = arith.addf %0, %2 : vector<112x128xf32>
    %c0_1 = arith.constant 0 : index
    %c0_2 = arith.constant 0 : index
    %4 = vector.load %arg8[%c0_1, %c0_2] : memref<112x128xf32, #tpu.memory_space<vmem>>, vector<112x128xf32>
    tpu.vector_store %arg8[%c0_1, %c0_2], %3 {strides = array<i32>} : memref<112x128xf32, #tpu.memory_space<vmem>>, vector<112x128xf32>,
    %c0_3 = arith.constant 0 : index
    %c0_4 = arith.constant 0 : index
    %5 = vector.load %arg8[%c0_3, %c0_4] : memref<112x128xf32, #tpu.memory_space<vmem>>, vector<112x128xf32>
    %c0_5 = arith.constant 0 : index
    %c0_6 = arith.constant 0 : index
    %c0_7 = arith.constant 0 : index
    %6 = vector.load %arg5[%c0_5, %c0_6, %c0_7] : memref<1x112x16xbf16, #tpu.memory_space<vmem>>, vector<1x112x16xbf16>
    %7 = vector.shape_cast %6 : vector<1x112x16xbf16> to vector<112x16xbf16>
    %c0_8 = arith.constant 0 : index
    %c0_9 = arith.constant 0 : index
    %8 = vector.load %arg6[%c0_8, %c0_9] : memref<16x128xbf16, #tpu.memory_space<vmem>>, vector<16x128xbf16>
    %cst_10 = arith.constant dense<0.000000e+00> : vector<112x128xf32>
    %9 = tpu.matmul %7, %8, %cst_10 {dimension_numbers = #tpu.dot_dimension_numbers<[1], [0], [0], [1], [0, 0, 1, 1], [], []>} : vector<112x16xbf16>, vector<16x128xbf16>, vector<112x128xf32> -> vector<112x128xf32>
    %10 = arith.addf %5, %9 : vector<112x128xf32>
    %c0_11 = arith.constant 0 : index
    %c0_12 = arith.constant 0 : index
    %11 = vector.load %arg8[%c0_11, %c0_12] : memref<112x128xf32, #tpu.memory_space<vmem>>, vector<112x128xf32>
    tpu.vector_store %arg8[%c0_11, %c0_12], %10 {strides = array<i32>} : memref<112x128xf32, #tpu.memory_space<vmem>>, vector<112x128xf32>,
    %c0_13 = arith.constant 0 : index
    %c0_14 = arith.constant 0 : index
    %12 = vector.load %arg8[%c0_13, %c0_14] : memref<112x128xf32, #tpu.memory_space<vmem>>, vector<112x128xf32>
    %c0_15 = arith.constant 0 : index
    %c0_16 = arith.constant 0 : index
    %c0_17 = arith.constant 0 : index
    %13 = vector.load %arg2[%c0_15, %c0_16, %c0_17] : memref<1x144x128xbf16, #tpu.memory_space<vmem>>, vector<1x112x128xbf16>
    %14 = vector.shape_cast %13 : vector<1x112x128xbf16> to vector<112x128xbf16>
    %c0_18 = arith.constant 0 : index
    %c0_19 = arith.constant 0 : index
    %c0_20 = arith.constant 0 : index
    %15 = vector.load %arg3[%c0_18, %c0_19, %c0_20] : memref<9x128x128xbf16, #tpu.memory_space<vmem>>, vector<1x128x128xbf16>
    %16 = vector.shape_cast %15 : vector<1x128x128xbf16> to vector<128x128xbf16>
    %cst_21 = arith.constant dense<0.000000e+00> : vector<112x128xf32>
    %17 = tpu.matmul %14, %16, %cst_21 {dimension_numbers = #tpu.dot_dimension_numbers<[1], [0], [0], [1], [0, 0, 1, 1], [], []>} : vector<112x128xbf16>, vector<128x128xbf16>, vector<112x128xf32> -> vector<112x128xf32>
    %18 = arith.addf %12, %17 : vector<112x128xf32>
    %c0_22 = arith.constant 0 : index
    %c0_23 = arith.constant 0 : index
    %19 = vector.load %arg8[%c0_22, %c0_23] : memref<112x128xf32, #tpu.memory_space<vmem>>, vector<112x128xf32>
    tpu.vector_store %arg8[%c0_22, %c0_23], %18 {strides = array<i32>} : memref<112x128xf32, #tpu.memory_space<vmem>>, vector<112x128xf32>,
    %c0_24 = arith.constant 0 : index
    %c0_25 = arith.constant 0 : index
    %20 = vector.load %arg8[%c0_24, %c0_25] : memref<112x128xf32, #tpu.memory_space<vmem>>, vector<112x128xf32>
    %c0_26 = arith.constant 0 : index
    %c1 = arith.constant 1 : index
    %c0_27 = arith.constant 0 : index
    %21 = vector.load %arg2[%c0_26, %c1, %c0_27] : memref<1x144x128xbf16, #tpu.memory_space<vmem>>, vector<1x112x128xbf16>
    %22 = vector.shape_cast %21 : vector<1x112x128xbf16> to vector<112x128xbf16>
    %c1_28 = arith.constant 1 : index
    %c0_29 = arith.constant 0 : index
    %c0_30 = arith.constant 0 : index
    %23 = vector.load %arg3[%c1_28, %c0_29, %c0_30] : memref<9x128x128xbf16, #tpu.memory_space<vmem>>, vector<1x128x128xbf16>
    %24 = vector.shape_cast %23 : vector<1x128x128xbf16> to vector<128x128xbf16>
    %cst_31 = arith.constant dense<0.000000e+00> : vector<112x128xf32>
    %25 = tpu.matmul %22, %24, %cst_31 {dimension_numbers = #tpu.dot_dimension_numbers<[1], [0], [0], [1], [0, 0, 1, 1], [], []>} : vector<112x128xbf16>, vector<128x128xbf16>, vector<112x128xf32> -> vector<112x128xf32>
    %26 = arith.addf %20, %25 : vector<112x128xf32>
    %c0_32 = arith.constant 0 : index
    %c0_33 = arith.constant 0 : index
    %27 = vector.load %arg8[%c0_32, %c0_33] : memref<112x128xf32, #tpu.memory_space<vmem>>, vector<112x128xf32>
    tpu.vector_store %arg8[%c0_32, %c0_33], %26 {strides = array<i32>} : memref<112x128xf32, #tpu.memory_space<vmem>>, vector<112x128xf32>,
    %c0_34 = arith.constant 0 : index
    %c0_35 = arith.constant 0 : index
    %28 = vector.load %arg8[%c0_34, %c0_35] : memref<112x128xf32, #tpu.memory_space<vmem>>, vector<112x128xf32>
    %c0_36 = arith.constant 0 : index
    %c2 = arith.constant 2 : index
    %c0_37 = arith.constant 0 : index
    %29 = vector.load %arg2[%c0_36, %c2, %c0_37] : memref<1x144x128xbf16, #tpu.memory_space<vmem>>, vector<1x112x128xbf16>
    %30 = vector.shape_cast %29 : vector<1x112x128xbf16> to vector<112x128xbf16>
    %c2_38 = arith.constant 2 : index
    %c0_39 = arith.constant 0 : index
    %c0_40 = arith.constant 0 : index
    %31 = vector.load %arg3[%c2_38, %c0_39, %c0_40] : memref<9x128x128xbf16, #tpu.memory_space<vmem>>, vector<1x128x128xbf16>
    %32 = vector.shape_cast %31 : vector<1x128x128xbf16> to vector<128x128xbf16>
    %cst_41 = arith.constant dense<0.000000e+00> : vector<112x128xf32>
    %33 = tpu.matmul %30, %32, %cst_41 {dimension_numbers = #tpu.dot_dimension_numbers<[1], [0], [0], [1], [0, 0, 1, 1], [], []>} : vector<112x128xbf16>, vector<128x128xbf16>, vector<112x128xf32> -> vector<112x128xf32>
    %34 = arith.addf %28, %33 : vector<112x128xf32>
    %c0_42 = arith.constant 0 : index
    %c0_43 = arith.constant 0 : index
    %35 = vector.load %arg8[%c0_42, %c0_43] : memref<112x128xf32, #tpu.memory_space<vmem>>, vector<112x128xf32>
    tpu.vector_store %arg8[%c0_42, %c0_43], %34 {strides = array<i32>} : memref<112x128xf32, #tpu.memory_space<vmem>>, vector<112x128xf32>,
    %c0_44 = arith.constant 0 : index
    %c0_45 = arith.constant 0 : index
    %36 = vector.load %arg8[%c0_44, %c0_45] : memref<112x128xf32, #tpu.memory_space<vmem>>, vector<112x128xf32>
    %c0_46 = arith.constant 0 : index
    %c10 = arith.constant 10 : index
    %c0_47 = arith.constant 0 : index
    %37 = vector.load %arg2[%c0_46, %c10, %c0_47] : memref<1x144x128xbf16, #tpu.memory_space<vmem>>, vector<1x112x128xbf16>
    %38 = vector.shape_cast %37 : vector<1x112x128xbf16> to vector<112x128xbf16>
    %c3 = arith.constant 3 : index
    %c0_48 = arith.constant 0 : index
    %c0_49 = arith.constant 0 : index
    %39 = vector.load %arg3[%c3, %c0_48, %c0_49] : memref<9x128x128xbf16, #tpu.memory_space<vmem>>, vector<1x128x128xbf16>
    %40 = vector.shape_cast %39 : vector<1x128x128xbf16> to vector<128x128xbf16>
    %cst_50 = arith.constant dense<0.000000e+00> : vector<112x128xf32>
    %41 = tpu.matmul %38, %40, %cst_50 {dimension_numbers = #tpu.dot_dimension_numbers<[1], [0], [0], [1], [0, 0, 1, 1], [], []>} : vector<112x128xbf16>, vector<128x128xbf16>, vector<112x128xf32> -> vector<112x128xf32>
    %42 = arith.addf %36, %41 : vector<112x128xf32>
    %c0_51 = arith.constant 0 : index
    %c0_52 = arith.constant 0 : index
    %43 = vector.load %arg8[%c0_51, %c0_52] : memref<112x128xf32, #tpu.memory_space<vmem>>, vector<112x128xf32>
    tpu.vector_store %arg8[%c0_51, %c0_52], %42 {strides = array<i32>} : memref<112x128xf32, #tpu.memory_space<vmem>>, vector<112x128xf32>,
    %c0_53 = arith.constant 0 : index
    %c0_54 = arith.constant 0 : index
    %44 = vector.load %arg8[%c0_53, %c0_54] : memref<112x128xf32, #tpu.memory_space<vmem>>, vector<112x128xf32>
    %c0_55 = arith.constant 0 : index
    %c11 = arith.constant 11 : index
    %c0_56 = arith.constant 0 : index
    %45 = vector.load %arg2[%c0_55, %c11, %c0_56] : memref<1x144x128xbf16, #tpu.memory_space<vmem>>, vector<1x112x128xbf16>
    %46 = vector.shape_cast %45 : vector<1x112x128xbf16> to vector<112x128xbf16>
    %c4 = arith.constant 4 : index
    %c0_57 = arith.constant 0 : index
    %c0_58 = arith.constant 0 : index
    %47 = vector.load %arg3[%c4, %c0_57, %c0_58] : memref<9x128x128xbf16, #tpu.memory_space<vmem>>, vector<1x128x128xbf16>
    %48 = vector.shape_cast %47 : vector<1x128x128xbf16> to vector<128x128xbf16>
    %cst_59 = arith.constant dense<0.000000e+00> : vector<112x128xf32>
    %49 = tpu.matmul %46, %48, %cst_59 {dimension_numbers = #tpu.dot_dimension_numbers<[1], [0], [0], [1], [0, 0, 1, 1], [], []>} : vector<112x128xbf16>, vector<128x128xbf16>, vector<112x128xf32> -> vector<112x128xf32>
    %50 = arith.addf %44, %49 : vector<112x128xf32>
    %c0_60 = arith.constant 0 : index
    %c0_61 = arith.constant 0 : index
    %51 = vector.load %arg8[%c0_60, %c0_61] : memref<112x128xf32, #tpu.memory_space<vmem>>, vector<112x128xf32>
    tpu.vector_store %arg8[%c0_60, %c0_61], %50 {strides = array<i32>} : memref<112x128xf32, #tpu.memory_space<vmem>>, vector<112x128xf32>,
    %c0_62 = arith.constant 0 : index
    %c0_63 = arith.constant 0 : index
    %52 = vector.load %arg8[%c0_62, %c0_63] : memref<112x128xf32, #tpu.memory_space<vmem>>, vector<112x128xf32>
    %c0_64 = arith.constant 0 : index
    %c12 = arith.constant 12 : index
    %c0_65 = arith.constant 0 : index
    %53 = vector.load %arg2[%c0_64, %c12, %c0_65] : memref<1x144x128xbf16, #tpu.memory_space<vmem>>, vector<1x112x128xbf16>
    %54 = vector.shape_cast %53 : vector<1x112x128xbf16> to vector<112x128xbf16>
    %c5 = arith.constant 5 : index
    %c0_66 = arith.constant 0 : index
    %c0_67 = arith.constant 0 : index
    %55 = vector.load %arg3[%c5, %c0_66, %c0_67] : memref<9x128x128xbf16, #tpu.memory_space<vmem>>, vector<1x128x128xbf16>
    %56 = vector.shape_cast %55 : vector<1x128x128xbf16> to vector<128x128xbf16>
    %cst_68 = arith.constant dense<0.000000e+00> : vector<112x128xf32>
    %57 = tpu.matmul %54, %56, %cst_68 {dimension_numbers = #tpu.dot_dimension_numbers<[1], [0], [0], [1], [0, 0, 1, 1], [], []>} : vector<112x128xbf16>, vector<128x128xbf16>, vector<112x128xf32> -> vector<112x128xf32>
    %58 = arith.addf %52, %57 : vector<112x128xf32>
    %c0_69 = arith.constant 0 : index
    %c0_70 = arith.constant 0 : index
    %59 = vector.load %arg8[%c0_69, %c0_70] : memref<112x128xf32, #tpu.memory_space<vmem>>, vector<112x128xf32>
    tpu.vector_store %arg8[%c0_69, %c0_70], %58 {strides = array<i32>} : memref<112x128xf32, #tpu.memory_space<vmem>>, vector<112x128xf32>,
    %c0_71 = arith.constant 0 : index
    %c0_72 = arith.constant 0 : index
    %60 = vector.load %arg8[%c0_71, %c0_72] : memref<112x128xf32, #tpu.memory_space<vmem>>, vector<112x128xf32>
    %c0_73 = arith.constant 0 : index
    %c20 = arith.constant 20 : index
    %c0_74 = arith.constant 0 : index
    %61 = vector.load %arg2[%c0_73, %c20, %c0_74] : memref<1x144x128xbf16, #tpu.memory_space<vmem>>, vector<1x112x128xbf16>
    %62 = vector.shape_cast %61 : vector<1x112x128xbf16> to vector<112x128xbf16>
    %c6 = arith.constant 6 : index
    %c0_75 = arith.constant 0 : index
    %c0_76 = arith.constant 0 : index
    %63 = vector.load %arg3[%c6, %c0_75, %c0_76] : memref<9x128x128xbf16, #tpu.memory_space<vmem>>, vector<1x128x128xbf16>
    %64 = vector.shape_cast %63 : vector<1x128x128xbf16> to vector<128x128xbf16>
    %cst_77 = arith.constant dense<0.000000e+00> : vector<112x128xf32>
    %65 = tpu.matmul %62, %64, %cst_77 {dimension_numbers = #tpu.dot_dimension_numbers<[1], [0], [0], [1], [0, 0, 1, 1], [], []>} : vector<112x128xbf16>, vector<128x128xbf16>, vector<112x128xf32> -> vector<112x128xf32>
    %66 = arith.addf %60, %65 : vector<112x128xf32>
    %c0_78 = arith.constant 0 : index
    %c0_79 = arith.constant 0 : index
    %67 = vector.load %arg8[%c0_78, %c0_79] : memref<112x128xf32, #tpu.memory_space<vmem>>, vector<112x128xf32>
    tpu.vector_store %arg8[%c0_78, %c0_79], %66 {strides = array<i32>} : memref<112x128xf32, #tpu.memory_space<vmem>>, vector<112x128xf32>,
    %c0_80 = arith.constant 0 : index
    %c0_81 = arith.constant 0 : index
    %68 = vector.load %arg8[%c0_80, %c0_81] : memref<112x128xf32, #tpu.memory_space<vmem>>, vector<112x128xf32>
    %c0_82 = arith.constant 0 : index
    %c21 = arith.constant 21 : index
    %c0_83 = arith.constant 0 : index
    %69 = vector.load %arg2[%c0_82, %c21, %c0_83] : memref<1x144x128xbf16, #tpu.memory_space<vmem>>, vector<1x112x128xbf16>
    %70 = vector.shape_cast %69 : vector<1x112x128xbf16> to vector<112x128xbf16>
    %c7 = arith.constant 7 : index
    %c0_84 = arith.constant 0 : index
    %c0_85 = arith.constant 0 : index
    %71 = vector.load %arg3[%c7, %c0_84, %c0_85] : memref<9x128x128xbf16, #tpu.memory_space<vmem>>, vector<1x128x128xbf16>
    %72 = vector.shape_cast %71 : vector<1x128x128xbf16> to vector<128x128xbf16>
    %cst_86 = arith.constant dense<0.000000e+00> : vector<112x128xf32>
    %73 = tpu.matmul %70, %72, %cst_86 {dimension_numbers = #tpu.dot_dimension_numbers<[1], [0], [0], [1], [0, 0, 1, 1], [], []>} : vector<112x128xbf16>, vector<128x128xbf16>, vector<112x128xf32> -> vector<112x128xf32>
    %74 = arith.addf %68, %73 : vector<112x128xf32>
    %c0_87 = arith.constant 0 : index
    %c0_88 = arith.constant 0 : index
    %75 = vector.load %arg8[%c0_87, %c0_88] : memref<112x128xf32, #tpu.memory_space<vmem>>, vector<112x128xf32>
    tpu.vector_store %arg8[%c0_87, %c0_88], %74 {strides = array<i32>} : memref<112x128xf32, #tpu.memory_space<vmem>>, vector<112x128xf32>,
    %c0_89 = arith.constant 0 : index
    %c0_90 = arith.constant 0 : index
    %76 = vector.load %arg8[%c0_89, %c0_90] : memref<112x128xf32, #tpu.memory_space<vmem>>, vector<112x128xf32>
    %c0_91 = arith.constant 0 : index
    %c22 = arith.constant 22 : index
    %c0_92 = arith.constant 0 : index
    %77 = vector.load %arg2[%c0_91, %c22, %c0_92] : memref<1x144x128xbf16, #tpu.memory_space<vmem>>, vector<1x112x128xbf16>
    %78 = vector.shape_cast %77 : vector<1x112x128xbf16> to vector<112x128xbf16>
    %c8 = arith.constant 8 : index
    %c0_93 = arith.constant 0 : index
    %c0_94 = arith.constant 0 : index
    %79 = vector.load %arg3[%c8, %c0_93, %c0_94] : memref<9x128x128xbf16, #tpu.memory_space<vmem>>, vector<1x128x128xbf16>
    %80 = vector.shape_cast %79 : vector<1x128x128xbf16> to vector<128x128xbf16>
    %cst_95 = arith.constant dense<0.000000e+00> : vector<112x128xf32>
    %81 = tpu.matmul %78, %80, %cst_95 {dimension_numbers = #tpu.dot_dimension_numbers<[1], [0], [0], [1], [0, 0, 1, 1], [], []>} : vector<112x128xbf16>, vector<128x128xbf16>, vector<112x128xf32> -> vector<112x128xf32>
    %82 = arith.addf %76, %81 : vector<112x128xf32>
    %c0_96 = arith.constant 0 : index
    %c0_97 = arith.constant 0 : index
    %83 = vector.load %arg8[%c0_96, %c0_97] : memref<112x128xf32, #tpu.memory_space<vmem>>, vector<112x128xf32>
    tpu.vector_store %arg8[%c0_96, %c0_97], %82 {strides = array<i32>} : memref<112x128xf32, #tpu.memory_space<vmem>>, vector<112x128xf32>,
    %c0_98 = arith.constant 0 : index
    %c0_99 = arith.constant 0 : index
    %84 = vector.load %arg8[%c0_98, %c0_99] : memref<112x128xf32, #tpu.memory_space<vmem>>, vector<112x128xf32>
    %cst_100 = arith.constant 0.000000e+00 : f32
    %85 = vector.broadcast %cst_100 : f32 to vector<112x128xf32>
    %86 = arith.maximumf %84, %85 : vector<112x128xf32>
    %c0_101 = arith.constant 0 : index
    %c0_102 = arith.constant 0 : index
    %c0_103 = arith.constant 0 : index
    %87 = vector.load %arg7[%c0_101, %c0_102, %c0_103] : memref<1x112x128xf32, #tpu.memory_space<vmem>>, vector<1x112x128xf32>
    %88 = vector.shape_cast %87 : vector<1x112x128xf32> to vector<112x128xf32>
    %89 = vector.shape_cast %86 : vector<112x128xf32> to vector<1x112x128xf32>
    tpu.vector_store %arg7[%c0_101, %c0_102, %c0_103], %89 {strides = array<i32>} : memref<1x112x128xf32, #tpu.memory_space<vmem>>, vector<1x112x128xf32>,
    return
  }
  func.func @transform_0(%arg0: i32, %arg1: i32) -> (i32, i32, i32) {
    %c0_i32 = arith.constant 0 : i32
    %c0_i32_0 = arith.constant 0 : i32
    %c0_i32_1 = arith.constant 0 : i32
    return %arg1, %c0_i32, %c0_i32_0 : i32, i32, i32
  }
  func.func @transform_1(%arg0: i32, %arg1: i32) -> (i32, i32, i32) {
    %c0_i32 = arith.constant 0 : i32
    %c0_i32_0 = arith.constant 0 : i32
    %c0_i32_1 = arith.constant 0 : i32
    return %c0_i32, %c0_i32_0, %arg0 : i32, i32, i32
  }
  func.func @transform_2(%arg0: i32, %arg1: i32) -> (i32, i32) {
    %c0_i32 = arith.constant 0 : i32
    %c0_i32_0 = arith.constant 0 : i32
    return %c0_i32, %arg0 : i32, i32
  }
  func.func @transform_3(%arg0: i32, %arg1: i32) -> (i32, i32, i32) {
    %c0_i32 = arith.constant 0 : i32
    %c0_i32_0 = arith.constant 0 : i32
    %c0_i32_1 = arith.constant 0 : i32
    return %arg1, %c0_i32, %c0_i32_0 : i32, i32, i32
  }
  func.func @transform_4(%arg0: i32, %arg1: i32) -> (i32, i32) {
    %c0_i32 = arith.constant 0 : i32
    %c0_i32_0 = arith.constant 0 : i32
    return %c0_i32, %arg0 : i32, i32
  }
  func.func @transform_5(%arg0: i32, %arg1: i32) -> (i32, i32, i32) {
    %c0_i32 = arith.constant 0 : i32
    %c0_i32_0 = arith.constant 0 : i32
    return %arg1, %c0_i32, %arg0 : i32, i32, i32
  }
}

</mosaic_0001>

<llo_original>
// kernel: basic_block_forward.2
$region0: #{basic_block_forward.2}
  #allocation0 [shape = 'u32[]', space=smem, size = 0x4, offset = 0x4, fixed_abs, tag = 'smem constant byte address 0x4 - core index']
  #allocation1 [shape = 'u32[144,128]{1,0:T(1,128)}', space=vmem, size = 0x12000, scoped, tag = 'internal scratch']
  #allocation2 [shape = 'f32[96,128]{1,0:T(8,128)}', space=vmem, size = 0xc000, scoped, tag = 'scratch operand']
  %s0 = inlined_call_operand.vmem [shape: bf16[2,352,16], index: 0, kind: input, shape index: {}]
  %s1 = inlined_call_operand.vmem [shape: bf16[9,16,128], index: 1, kind: input, shape index: {}]
  %s2 = inlined_call_operand.vmem [shape: f32[1,128], index: 2, kind: input, shape index: {}]
  %s3 = inlined_call_operand.vmem [shape: bf16[2,96,128], index: 3, kind: output, shape index: {}]
  %s4 = sld [smem:[#allocation0]]
  $region45: #{basic_block_forward.2} parent=0
    _
  %s6 = ssub.s32 1, %s4
  %s7 = scalar_select 0, %s6, %s4
  loop: start=0, step=1, limit=4
  $region2: #{basic_block_forward.2} parent=0 // loop_pre_header
    _
  $region3: #{basic_block_forward.2} parent=0 // loop_header
    %s9 = sphi 0, %s13
    %p10 = scmp.ge.s32.totalorder %s9, 4
    %s16 = sphi 0, %s28
    %s17 = sphi 0, %s24
    %s18 = sphi 0, %s16
    %s19 = sphi 0, %s17
    %s20 = sphi 0, %s18
    %s21 = sphi 0, %s19
    %s31 = sphi 0, %s33
    %s34 = sphi 0, %s31
    %s35 = sphi 0, %s34
    %s51 = sphi 0, %s35
    %s57 = sphi 0, %s59
    %s60 = sphi 0, %s57
    %s61 = sphi 0, %s60
    %s77 = sphi 0, %s61
    %s83 = sphi 0, %s85
    %s86 = sphi 0, %s83
    %s87 = sphi 0, %s86
    %s103 = sphi 0, %s87
    %s111 = sphi 0, %s113
    %s114 = sphi 0, %s111
    %s115 = sphi 0, %s114
    %s131 = sphi 0, %s115
  $region4: #{basic_block_forward.2} parent=0 // loop_header_branch
    %12 = sbr.rel (%p10) target = $region8
  $region5: #{basic_block_forward.2} parent=0 // loop_body
    %s14 = ssub.s32 %s9, 1
    %s15 = ssub.s32 %s9, 2
    %s22 = sadd.s32 1, %s17
    %p23 = scmp.ge.s32.totalorder %s22, 2
    %s24 = scalar_select %p23, 0, %s22
    %s25 = sadd.s32 1, %s16
    %s26 = scalar_select %p23, %s25, %s16
    %p27 = scmp.ge.s32.totalorder %s26, 1
    %s28 = scalar_select %p27, 0, %s26
    %s29 = ssub.s32 %s17, %s24
    %p30 = scmp.eq.s32.totalorder %s29, 0
    %s32 = sadd.s32 %s31, 1
    %s33 = scalar_select %p30, %s31, %s32
    %p36 = pneg %p30
    %p37 = scmp.eq.s32.totalorder %s9, 1
    %p38 = por %p36, %p37
    %p39 = scmp.ne.s32.totalorder %s31, %s34
    %p40 = scmp.eq.s32.totalorder %s9, 0
    %p41 = por %p39, %p40
    %p42 = scmp.ne.s32.totalorder %s31, %s34
    %p43 = scmp.eq.s32.totalorder %s14, 1
    %p44 = por %p42, %p43
    %p45 = scmp.ne.s32.totalorder %s34, %s35
    %p46 = scmp.eq.s32.totalorder %s14, 0
    %p47 = por %p45, %p46
    %p48 = scmp.ne.s32.totalorder %s34, %s35
    %p49 = scmp.eq.s32.totalorder %s15, 1
    %p50 = por %p48, %p49
    %p52 = scmp.ne.s32.totalorder %s35, %s51
    %p53 = scmp.eq.s32.totalorder %s15, 0
    %p54 = por %p52, %p53
    %s55 = ssub.s32 %s16, %s28
    %p56 = scmp.eq.s32.totalorder %s55, 0
    %s58 = sadd.s32 %s57, 1
    %s59 = scalar_select %p56, %s57, %s58
    %p62 = pneg %p56
    %p63 = scmp.eq.s32.totalorder %s9, 1
    %p64 = por %p62, %p63
    %p65 = scmp.ne.s32.totalorder %s57, %s60
    %p66 = scmp.eq.s32.totalorder %s9, 0
    %p67 = por %p65, %p66
    %p68 = scmp.ne.s32.totalorder %s57, %s60
    %p69 = scmp.eq.s32.totalorder %s14, 1
    %p70 = por %p68, %p69
    %p71 = scmp.ne.s32.totalorder %s60, %s61
    %p72 = scmp.eq.s32.totalorder %s14, 0
    %p73 = por %p71, %p72
    %p74 = scmp.ne.s32.totalorder %s60, %s61
    %p75 = scmp.eq.s32.totalorder %s15, 1
    %p76 = por %p74, %p75
    %p78 = scmp.ne.s32.totalorder %s61, %s77
    %p79 = scmp.eq.s32.totalorder %s15, 0
    %p80 = por %p78, %p79
    %s81 = ssub.s32 %s16, %s28
    %p82 = scmp.eq.s32.totalorder %s81, 0
    %s84 = sadd.s32 %s83, 1
    %s85 = scalar_select %p82, %s83, %s84
    %p88 = pneg %p82
    %p89 = scmp.eq.s32.totalorder %s9, 1
    %p90 = por %p88, %p89
    %p91 = scmp.ne.s32.totalorder %s83, %s86
    %p92 = scmp.eq.s32.totalorder %s9, 0
    %p93 = por %p91, %p92
    %p94 = scmp.ne.s32.totalorder %s83, %s86
    %p95 = scmp.eq.s32.totalorder %s14, 1
    %p96 = por %p94, %p95
    %p97 = scmp.ne.s32.totalorder %s86, %s87
    %p98 = scmp.eq.s32.totalorder %s14, 0
    %p99 = por %p97, %p98
    %p100 = scmp.ne.s32.totalorder %s86, %s87
    %p101 = scmp.eq.s32.totalorder %s15, 1
    %p102 = por %p100, %p101
    %p104 = scmp.ne.s32.totalorder %s87, %s103
    %p105 = scmp.eq.s32.totalorder %s15, 0
    %p106 = por %p104, %p105
    %s107 = ssub.s32 %s17, %s24
    %s108 = ssub.s32 %s16, %s28
    %s109 = sor.u32 %s107, %s108
    %p110 = scmp.eq.s32.totalorder %s109, 0
    %s112 = sadd.s32 %s111, 1
    %s113 = scalar_select %p110, %s111, %s112
    %p116 = pneg %p110
    %p117 = scmp.eq.s32.totalorder %s9, 1
    %p118 = por %p116, %p117
    %p119 = scmp.ne.s32.totalorder %s111, %s114
    %p120 = scmp.eq.s32.totalorder %s9, 0
    %p121 = por %p119, %p120
    %p122 = scmp.ne.s32.totalorder %s111, %s114
    %p123 = scmp.eq.s32.totalorder %s14, 1
    %p124 = por %p122, %p123
    %p125 = scmp.ne.s32.totalorder %s114, %s115
    %p126 = scmp.eq.s32.totalorder %s14, 0
    %p127 = por %p125, %p126
    %p128 = scmp.ne.s32.totalorder %s114, %s115
    %p129 = scmp.eq.s32.totalorder %s15, 1
    %p130 = por %p128, %p129
    %p132 = scmp.ne.s32.totalorder %s115, %s131
    %p133 = scmp.eq.s32.totalorder %s15, 0
    %p134 = por %p132, %p133
    %p135 = scmp.le.s32.totalorder 1, %s9
    %p136 = scmp.lt.s32.totalorder %s9, 3
    %p137 = pnand %p135, %p136
    %p138 = pneg %p137
    // Predicated region
    $region9: #{basic_block_forward.2} parent=5 // pred_check
      _
    $region10: #{basic_block_forward.2} parent=5 // pred_check_branch
      %140 = sbr.rel (%p137) target = $region12
    $region11: #{basic_block_forward.2} parent=5 // pred_region
      %s141 = ssub.s32 %s9, 1
      // Predicated region
      $region13: #{basic_block_forward.2} parent=11 // pred_check
        %p142 = pneg %p73
      $region14: #{basic_block_forward.2} parent=11 // pred_check_branch
        %144 = sbr.rel (%p142) target = $region16
      $region15: #{basic_block_forward.2} parent=11 // pred_region
        %p145 = scmp.lt.s32.totalorder %s18, 0
        %s146 = scalar_select %p145, %s18, 0
        %s147 = smul.addr %s146, 4
        %s148 = scalar_lea.vmem %s1, %s147
      $region16: #{basic_block_forward.2} parent=11 // pred_fallthru
        _
      // Predicated region
      $region17: #{basic_block_forward.2} parent=11 // pred_check
        %p149 = pneg %p99
      $region18: #{basic_block_forward.2} parent=11 // pred_check_branch
        %151 = sbr.rel (%p149) target = $region20
      $region19: #{basic_block_forward.2} parent=11 // pred_region
        %p152 = scmp.lt.s32.totalorder %s18, 0
        %s153 = scalar_select %p152, %s18, 0
        %s154 = scalar_lea.vmem %s2, %s153
      $region20: #{basic_block_forward.2} parent=11 // pred_fallthru
        _
    $region12: #{basic_block_forward.2} parent=5 // pred_fallthru
      _
    %p155 = scmp.lt.s32.totalorder %s9, 2
    // Predicated region
    $region21: #{basic_block_forward.2} parent=5 // pred_check
      %p156 = pneg %p155
    $region22: #{basic_block_forward.2} parent=5 // pred_check_branch
      %158 = sbr.rel (%p156) target = $region24
    $region23: #{basic_block_forward.2} parent=5 // pred_region
      // Predicated region
      $region25: #{basic_block_forward.2} parent=23 // pred_check
        %p159 = pneg %p41
      $region26: #{basic_block_forward.2} parent=23 // pred_check_branch
        %161 = sbr.rel (%p159) target = $region28
      $region27: #{basic_block_forward.2} parent=23 // pred_region
        %p162 = scmp.lt.s32.totalorder %s17, 1
        %s163 = scalar_select %p162, %s17, 1
        %s164 = smul.addr %s163, 44
        %s165 = smul.addr %s164, 4
        %s166 = scalar_lea.vmem %s0, %s165
      $region28: #{basic_block_forward.2} parent=23 // pred_fallthru
        _
    $region24: #{basic_block_forward.2} parent=5 // pred_fallthru
      _
    %p167 = scmp.le.s32.totalorder 1, %s9
    %p168 = scmp.lt.s32.totalorder %s9, 3
    %p169 = pnand %p167, %p168
    %p170 = pneg %p169
    // Predicated region
    $region29: #{basic_block_forward.2} parent=5 // pred_check
      _
    $region30: #{basic_block_forward.2} parent=5 // pred_check_branch
      %172 = sbr.rel (%p169) target = $region32
    $region31: #{basic_block_forward.2} parent=5 // pred_region
      %s173 = ssub.s32 %s9, 1
      %p174 = scmp.lt.s32.totalorder %s19, 1
      %s175 = scalar_select %p174, %s19, 1
      %s176 = smul.addr %s175, 44
      %s177 = smul.addr %s176, 4
      %s178 = scalar_lea.vmem %s0, %s177
      %p179 = pneg %p47
      %p180 = pneg %p44
      %p181 = scmp.lt.s32.totalorder %s18, 0
      %s182 = scalar_select %p181, %s18, 0
      %s183 = smul.addr %s182, 4
      %s184 = scalar_lea.vmem %s1, %s183
      %p185 = pneg %p73
      %p186 = pneg %p70
      %p187 = scmp.lt.s32.totalorder %s18, 0
      %s188 = scalar_select %p187, %s18, 0
      %s189 = scalar_lea.vmem %s2, %s188
      %p190 = pneg %p99
      %p191 = pneg %p96
      %p192 = pneg %p127
      %p193 = pneg %p124
      %p194 = scmp.lt.s32.totalorder %s19, 1
      %s195 = scalar_select %p194, %s19, 1
      %p196 = scmp.lt.s32.totalorder %s18, 0
      %s197 = scalar_select %p196, %s18, 0
      %s198 = smul.addr %s195, 12
      %s199 = sadd.s32 %s197, %s198
      %s200 = smul.addr %s199, 4
      %s201 = scalar_lea.vmem %s3, %s200
      %p202 = scmp.lt.s32.totalorder %s19, 1
      %s203 = scalar_select %p202, %s19, 1
      %s204 = smul.addr %s203, 44
      %s205 = smul.addr %s204, 4
      %s206 = scalar_lea.vmem %s0, %s205
      %p207 = scmp.lt.s32.totalorder %s18, 0
      %s208 = scalar_select %p207, %s18, 0
      %s209 = smul.addr %s208, 4
      %s210 = scalar_lea.vmem %s1, %s209
      %p211 = scmp.lt.s32.totalorder %s18, 0
      %s212 = scalar_select %p211, %s18, 0
      %s213 = scalar_lea.vmem %s2, %s212
      %p214 = scmp.lt.s32.totalorder %s19, 1
      %s215 = scalar_select %p214, %s19, 1
      %p216 = scmp.lt.s32.totalorder %s18, 0
      %s217 = scalar_select %p216, %s18, 0
      %s218 = smul.addr %s215, 12
      %s219 = sadd.s32 %s217, %s218
      %s220 = smul.addr %s219, 4
      %s221 = scalar_lea.vmem %s3, %s220
      %v223 = vld [vmem:[%s213] sm:$0x1]
      %v225 = vlaneseq
      %v226 = vshrl.u32 %v225, 7
      %v227 = vsub.s32 0, %v226
      %v228 = vrot.slane %v223, %v227
      %v230 = vadd.f32 %v228, 0.0
      %231 = vst [vmem:[#allocation2] sm:$0xff] %v230
      %232 = vst [vmem:[#allocation2 + $0x8] sm:$0xff] %v230
      %233 = vst [vmem:[#allocation2 + $0x10] sm:$0xff] %v230
      %234 = vst [vmem:[#allocation2 + $0x18] sm:$0xff] %v230
      %235 = vst [vmem:[#allocation2 + $0x20] sm:$0xff] %v230
      %236 = vst [vmem:[#allocation2 + $0x28] sm:$0xff] %v230
      %237 = vst [vmem:[#allocation2 + $0x30] sm:$0xff] %v230
      %238 = vst [vmem:[#allocation2 + $0x38] sm:$0xff] %v230
      %239 = vst [vmem:[#allocation2 + $0x40] sm:$0xff] %v230
      %240 = vst [vmem:[#allocation2 + $0x48] sm:$0xff] %v230
      %241 = vst [vmem:[#allocation2 + $0x50] sm:$0xff] %v230
      %242 = vst [vmem:[#allocation2 + $0x58] sm:$0xff] %v230
      %v243 = vld [vmem:[#allocation2] sm:$0xff]
      %v244 = vld [vmem:[#allocation2 + $0x8] sm:$0xff]
      %v245 = vld [vmem:[#allocation2 + $0x10] sm:$0xff]
      %v246 = vld [vmem:[#allocation2 + $0x18] sm:$0xff]
      %v247 = vld [vmem:[#allocation2 + $0x20] sm:$0xff]
      %v248 = vld [vmem:[#allocation2 + $0x28] sm:$0xff]
      %v249 = vld [vmem:[#allocation2 + $0x30] sm:$0xff]
      %v250 = vld [vmem:[#allocation2 + $0x38] sm:$0xff]
      %v251 = vld [vmem:[#allocation2 + $0x40] sm:$0xff]
      %v252 = vld [vmem:[#allocation2 + $0x48] sm:$0xff]
      %v253 = vld [vmem:[#allocation2 + $0x50] sm:$0xff]
      %v254 = vld [vmem:[#allocation2 + $0x58] sm:$0xff]
      %v255 = vld [vmem:[%s206] sm:$0xf]
      %v256 = vld [vmem:[%s206 + $0x4] sm:$0xf]
      %v257 = vld [vmem:[%s206 + $0x8] sm:$0xf]
      %v258 = vld [vmem:[%s206 + $0xc] sm:$0xf]
      %v259 = vld [vmem:[%s206 + $0x10] sm:$0xf]
      %v260 = vld [vmem:[%s206 + $0x14] sm:$0xf]
      %v261 = vld [vmem:[%s206 + $0x18] sm:$0xf]
      %v262 = vld [vmem:[%s206 + $0x1c] sm:$0xf]
      %v263 = vld [vmem:[%s206 + $0x20] sm:$0xf]
      %v264 = vld [vmem:[%s206 + $0x24] sm:$0xf]
      %v265 = vld [vmem:[%s206 + $0x28] sm:$0xf]
      %v266 = vld [vmem:[%s206 + $0x2c] sm:$0xf]
      %v267 = vld [vmem:[%s210] sm:$0xf]
      %v268 = vld [vmem:[%s210 + $0x4] sm:$0xf]
      %v281 = vunpack.c.l.b16 %v255
      %v282 = vunpack.c.l.b16 %v256
      %v283 = vunpack.c.l.b16 %v257
      %v284 = vunpack.c.l.b16 %v258
      %v285 = vunpack.c.l.b16 %v259
      %v286 = vunpack.c.l.b16 %v260
      %v287 = vunpack.c.l.b16 %v261
      %v288 = vunpack.c.l.b16 %v262
      %v289 = vunpack.c.l.b16 %v263
      %v290 = vunpack.c.l.b16 %v264
      %v291 = vunpack.c.l.b16 %v265
      %v292 = vunpack.c.l.b16 %v266
      %v293 = vpack.c.b16 %v282, %v281
      %v294 = vpack.c.b16 %v284, %v283
      %v295 = vpack.c.b16 %v286, %v285
      %v296 = vpack.c.b16 %v288, %v287
      %v297 = vpack.c.b16 %v290, %v289
      %v298 = vpack.c.b16 %v292, %v291
      %v301 = vunpack.c.l.b16 %v267
      %v302 = vunpack.c.l.b16 %v268
      %v303 = vpack.c.b16 %v302, %v301
      %vm305 = vcmask 130048
      %v307 = vsel %vm305, %v293, 0
      %v310 = vsel %vm305, %v294, 0
      %v313 = vsel %vm305, %v295, 0
      %v316 = vsel %vm305, %v296, 0
      %v319 = vsel %vm305, %v297, 0
      %v322 = vsel %vm305, %v298, 0
      %324 = vmatprep.subr.bf16.mxu0 0
      %325 = vmatpush1.bf16.msra.mxu0 %v303
      %326 = vmatprep.subr.bf16.mxu0 0
      %327 = vmatpush1.bf16.msra.mxu0 0
      %328 = vmatprep.subr.bf16.mxu0 0
      %329 = vmatpush1.bf16.msra.mxu0 0
      %330 = vmatprep.subr.bf16.mxu0 0
      %331 = vmatpush1.bf16.msra.mxu0 0
      %332 = vmatprep.subr.bf16.mxu0 0
      %333 = vmatpush1.bf16.msra.mxu0 0
      %334 = vmatprep.subr.bf16.mxu0 0
      %335 = vmatpush1.bf16.msra.mxu0 0
      %336 = vmatprep.subr.bf16.mxu0 0
      %337 = vmatpush1.bf16.msra.mxu0 0
      %338 = vmatprep.subr.bf16.mxu0 0
      %339 = vmatpush1.bf16.msra.mxu0 0
      %340 = vmatprep.subr.bf16.mxu0 0
      %341 = vmatpush1.bf16.msra.mxu0 0
      %342 = vmatprep.subr.bf16.mxu0 0
      %343 = vmatpush1.bf16.msra.mxu0 0
      %344 = vmatprep.subr.bf16.mxu0 0
      %345 = vmatpush1.bf16.msra.mxu0 0
      %346 = vmatprep.subr.bf16.mxu0 0
      %347 = vmatpush1.bf16.msra.mxu0 0
      %348 = vmatprep.subr.bf16.mxu0 0
      %349 = vmatpush1.bf16.msra.mxu0 0
      %350 = vmatprep.subr.bf16.mxu0 0
      %351 = vmatpush1.bf16.msra.mxu0 0
      %352 = vmatprep.subr.bf16.mxu0 0
      %353 = vmatpush1.bf16.msra.mxu0 0
      %354 = vmatprep.subr.bf16.mxu0 0
      %355 = vmatpush1.bf16.msra.mxu0 0
      %356 = vmatprep.mubr.bf16.mxu0 0
      %357 = vmatmul.mubr.bf16.gmra.mrb[0].mxu0 %v307
      %v358 = vpop.f32.mrb[0].mxu0
      %v359 = vadd.f32 0.0, %v358
      %v360 = vpop.f32.mrb[0].mxu0
      %v361 = vpop.f32.mrb[0].mxu0
      %v362 = vadd.f32 0.0, %v361
      %v363 = vpop.f32.mrb[0].mxu0
      %364 = vmatprep.mubr.bf16.mxu0 0
      %365 = vmatmul.mubr.bf16.gmra.mrb[0].mxu0 %v310
      %v366 = vpop.f32.mrb[0].mxu0
      %v367 = vadd.f32 0.0, %v366
      %v368 = vpop.f32.mrb[0].mxu0
      %v369 = vpop.f32.mrb[0].mxu0
      %v370 = vadd.f32 0.0, %v369
      %v371 = vpop.f32.mrb[0].mxu0
      %372 = vmatprep.mubr.bf16.mxu0 0
      %373 = vmatmul.mubr.bf16.gmra.mrb[0].mxu0 %v313
      %v374 = vpop.f32.mrb[0].mxu0
      %v375 = vadd.f32 0.0, %v374
      %v376 = vpop.f32.mrb[0].mxu0
      %v377 = vpop.f32.mrb[0].mxu0
      %v378 = vadd.f32 0.0, %v377
      %v379 = vpop.f32.mrb[0].mxu0
      %380 = vmatprep.mubr.bf16.mxu0 0
      %381 = vmatmul.mubr.bf16.gmra.mrb[0].mxu0 %v316
      %v382 = vpop.f32.mrb[0].mxu0
      %v383 = vadd.f32 0.0, %v382
      %v384 = vpop.f32.mrb[0].mxu0
      %v385 = vpop.f32.mrb[0].mxu0
      %v386 = vadd.f32 0.0, %v385
      %v387 = vpop.f32.mrb[0].mxu0
      %388 = vmatprep.mubr.bf16.mxu0 0
      %389 = vmatmul.mubr.bf16.gmra.mrb[0].mxu0 %v319
      %v390 = vpop.f32.mrb[0].mxu0
      %v391 = vadd.f32 0.0, %v390
      %v392 = vpop.f32.mrb[0].mxu0
      %v393 = vpop.f32.mrb[0].mxu0
      %v394 = vadd.f32 0.0, %v393
      %v395 = vpop.f32.mrb[0].mxu0
      %396 = vmatprep.mubr.bf16.mxu0 0
      %397 = vmatmul.mubr.bf16.gmra.mrb[0].mxu0 %v322
      %v398 = vpop.f32.mrb[0].mxu0
      %v399 = vadd.f32 0.0, %v398
      %v400 = vpop.f32.mrb[0].mxu0
      %v401 = vpop.f32.mrb[0].mxu0
      %v402 = vadd.f32 0.0, %v401
      %v403 = vpop.f32.mrb[0].mxu0
      %404 = vdwg.mxu0
      %v405 = vadd.f32 %v243, %v359
      %v406 = vadd.f32 %v244, %v362
      %v407 = vadd.f32 %v245, %v367
      %v408 = vadd.f32 %v246, %v370
      %v409 = vadd.f32 %v247, %v375
      %v410 = vadd.f32 %v248, %v378
      %v411 = vadd.f32 %v249, %v383
      %v412 = vadd.f32 %v250, %v386
      %v413 = vadd.f32 %v251, %v391
      %v414 = vadd.f32 %v252, %v394
      %v415 = vadd.f32 %v253, %v399
      %v416 = vadd.f32 %v254, %v402
      %417 = vst [vmem:[#allocation2] sm:$0xff] %v405
      %418 = vst [vmem:[#allocation2 + $0x8] sm:$0xff] %v406
      %419 = vst [vmem:[#allocation2 + $0x10] sm:$0xff] %v407
      %420 = vst [vmem:[#allocation2 + $0x18] sm:$0xff] %v408
      %421 = vst [vmem:[#allocation2 + $0x20] sm:$0xff] %v409
      %422 = vst [vmem:[#allocation2 + $0x28] sm:$0xff] %v410
      %423 = vst [vmem:[#allocation2 + $0x30] sm:$0xff] %v411
      %424 = vst [vmem:[#allocation2 + $0x38] sm:$0xff] %v412
      %425 = vst [vmem:[#allocation2 + $0x40] sm:$0xff] %v413
      %426 = vst [vmem:[#allocation2 + $0x48] sm:$0xff] %v414
      %427 = vst [vmem:[#allocation2 + $0x50] sm:$0xff] %v415
      %428 = vst [vmem:[#allocation2 + $0x58] sm:$0xff] %v416
      %v429 = vld [vmem:[#allocation2] sm:$0xff]
      %v430 = vld [vmem:[#allocation2 + $0x8] sm:$0xff]
      %v431 = vld [vmem:[#allocation2 + $0x10] sm:$0xff]
      %v432 = vld [vmem:[#allocation2 + $0x18] sm:$0xff]
      %v433 = vld [vmem:[#allocation2 + $0x20] sm:$0xff]
      %v434 = vld [vmem:[#allocation2 + $0x28] sm:$0xff]
      %v435 = vld [vmem:[#allocation2 + $0x30] sm:$0xff]
      %v436 = vld [vmem:[#allocation2 + $0x38] sm:$0xff]
      %v437 = vld [vmem:[#allocation2 + $0x40] sm:$0xff]
      %v438 = vld [vmem:[#allocation2 + $0x48] sm:$0xff]
      %v439 = vld [vmem:[#allocation2 + $0x50] sm:$0xff]
      %v440 = vld [vmem:[#allocation2 + $0x58] sm:$0xff]
      %v441 = vld [vmem:[%s206 + $0x28] sm:$0xf]
      %v442 = vld [vmem:[%s206 + $0x2c] sm:$0xf]
      %v443 = vld [vmem:[%s206 + $0x30] sm:$0xf]
      %v444 = vld [vmem:[%s206 + $0x34] sm:$0xf]
      %v445 = vld [vmem:[%s206 + $0x38] sm:$0xf]
      %v446 = vld [vmem:[%s206 + $0x3c] sm:$0xf]
      %v447 = vld [vmem:[%s206 + $0x40] sm:$0xf]
      %v448 = vld [vmem:[%s206 + $0x44] sm:$0xf]
      %v449 = vld [vmem:[%s206 + $0x48] sm:$0xf]
      %v450 = vld [vmem:[%s206 + $0x4c] sm:$0xf]
      %v451 = vld [vmem:[%s206 + $0x50] sm:$0xf]
      %v452 = vld [vmem:[%s206 + $0x54] sm:$0xf]
      %v453 = vld [vmem:[%s206 + $0x58] sm:$0x1]
      %s454 = scalar_lea.vmem %s210, 8
      %v455 = vld [vmem:[%s454] sm:$0xf]
      %v456 = vld [vmem:[%s454 + $0x4] sm:$0xf]
      %v470 = vunpack.c.l.b16 %v441
      %v471 = vunpack.c.l.b16 %v442
      %v472 = vunpack.c.l.b16 %v443
      %v473 = vunpack.c.l.b16 %v444
      %v474 = vunpack.c.l.b16 %v445
      %v475 = vunpack.c.l.b16 %v446
      %v476 = vunpack.c.l.b16 %v447
      %v477 = vunpack.c.l.b16 %v448
      %v478 = vunpack.c.l.b16 %v449
      %v479 = vunpack.c.l.b16 %v450
      %v480 = vunpack.c.l.b16 %v451
      %v481 = vunpack.c.l.b16 %v452
      %v482 = vunpack.c.l.b16 %v453
      %v483 = vpack.c.b16 %v471, %v470
      %v484 = vpack.c.b16 %v473, %v472
      %v485 = vpack.c.b16 %v475, %v474
      %v486 = vpack.c.b16 %v477, %v476
      %v487 = vpack.c.b16 %v479, %v478
      %v488 = vpack.c.b16 %v481, %v480
      %v489 = vpack.c.b16 %v482, %v482
      %vm490 = vsmask.f32 7424
      %v492 = vshrl.u32 %v483, 16
      %v494 = vshll.u32 %v483, 16
      %v496 = vrot.slane %v494, 1
      %v497 = vor.u32 %v492, %v496
      %v499 = vshll.u32 %v484, 16
      %v501 = vrot.slane %v499, 1
      %v502 = vsel %vm490, %v497, %v501
      %v503 = vshrl.u32 %v484, 16
      %v505 = vor.u32 %v503, %v501
      %v507 = vshll.u32 %v485, 16
      %v509 = vrot.slane %v507, 1
      %v510 = vsel %vm490, %v505, %v509
      %v511 = vshrl.u32 %v485, 16
      %v513 = vor.u32 %v511, %v509
      %v515 = vshll.u32 %v486, 16
      %v517 = vrot.slane %v515, 1
      %v518 = vsel %vm490, %v513, %v517
      %v519 = vshrl.u32 %v486, 16
      %v521 = vor.u32 %v519, %v517
      %v523 = vshll.u32 %v487, 16
      %v525 = vrot.slane %v523, 1
      %v526 = vsel %vm490, %v521, %v525
      %v527 = vshrl.u32 %v487, 16
      %v529 = vor.u32 %v527, %v525
      %v531 = vshll.u32 %v488, 16
      %v533 = vrot.slane %v531, 1
      %v534 = vsel %vm490, %v529, %v533
      %v535 = vshrl.u32 %v488, 16
      %v537 = vor.u32 %v535, %v533
      %v539 = vshll.u32 %v489, 16
      %v541 = vrot.slane %v539, 1
      %v542 = vsel %vm490, %v537, %v541
      %v545 = vunpack.c.l.b16 %v455
      %v546 = vunpack.c.l.b16 %v456
      %v547 = vpack.c.b16 %v546, %v545
      %v550 = vsel %vm305, %v502, 0
      %v553 = vsel %vm305, %v510, 0
      %v556 = vsel %vm305, %v518, 0
      %v559 = vsel %vm305, %v526, 0
      %v562 = vsel %vm305, %v534, 0
      %v565 = vsel %vm305, %v542, 0
      %567 = vmatprep.subr.bf16.mxu0 0
      %568 = vmatpush1.bf16.msra.mxu0 %v547
      %569 = vmatprep.subr.bf16.mxu0 0
      %570 = vmatpush1.bf16.msra.mxu0 0
      %571 = vmatprep.subr.bf16.mxu0 0
      %572 = vmatpush1.bf16.msra.mxu0 0
      %573 = vmatprep.subr.bf16.mxu0 0
      %574 = vmatpush1.bf16.msra.mxu0 0
      %575 = vmatprep.subr.bf16.mxu0 0
      %576 = vmatpush1.bf16.msra.mxu0 0
      %577 = vmatprep.subr.bf16.mxu0 0
      %578 = vmatpush1.bf16.msra.mxu0 0
      %579 = vmatprep.subr.bf16.mxu0 0
      %580 = vmatpush1.bf16.msra.mxu0 0
      %581 = vmatprep.subr.bf16.mxu0 0
      %582 = vmatpush1.bf16.msra.mxu0 0
      %583 = vmatprep.subr.bf16.mxu0 0
      %584 = vmatpush1.bf16.msra.mxu0 0
      %585 = vmatprep.subr.bf16.mxu0 0
      %586 = vmatpush1.bf16.msra.mxu0 0
      %587 = vmatprep.subr.bf16.mxu0 0
      %588 = vmatpush1.bf16.msra.mxu0 0
      %589 = vmatprep.subr.bf16.mxu0 0
      %590 = vmatpush1.bf16.msra.mxu0 0
      %591 = vmatprep.subr.bf16.mxu0 0
      %592 = vmatpush1.bf16.msra.mxu0 0
      %593 = vmatprep.subr.bf16.mxu0 0
      %594 = vmatpush1.bf16.msra.mxu0 0
      %595 = vmatprep.subr.bf16.mxu0 0
      %596 = vmatpush1.bf16.msra.mxu0 0
      %597 = vmatprep.subr.bf16.mxu0 0
      %598 = vmatpush1.bf16.msra.mxu0 0
      %599 = vmatprep.mubr.bf16.mxu0 0
      %600 = vmatmul.mubr.bf16.gmra.mrb[0].mxu0 %v550
      %v601 = vpop.f32.mrb[0].mxu0
      %v602 = vadd.f32 0.0, %v601
      %v603 = vpop.f32.mrb[0].mxu0
      %v604 = vpop.f32.mrb[0].mxu0
      %v605 = vadd.f32 0.0, %v604
      %v606 = vpop.f32.mrb[0].mxu0
      %607 = vmatprep.mubr.bf16.mxu0 0
      %608 = vmatmul.mubr.bf16.gmra.mrb[0].mxu0 %v553
      %v609 = vpop.f32.mrb[0].mxu0
      %v610 = vadd.f32 0.0, %v609
      %v611 = vpop.f32.mrb[0].mxu0
      %v612 = vpop.f32.mrb[0].mxu0
      %v613 = vadd.f32 0.0, %v612
      %v614 = vpop.f32.mrb[0].mxu0
      %615 = vmatprep.mubr.bf16.mxu0 0
      %616 = vmatmul.mubr.bf16.gmra.mrb[0].mxu0 %v556
      %v617 = vpop.f32.mrb[0].mxu0
      %v618 = vadd.f32 0.0, %v617
      %v619 = vpop.f32.mrb[0].mxu0
      %v620 = vpop.f32.mrb[0].mxu0
      %v621 = vadd.f32 0.0, %v620
      %v622 = vpop.f32.mrb[0].mxu0
      %623 = vmatprep.mubr.bf16.mxu0 0
      %624 = vmatmul.mubr.bf16.gmra.mrb[0].mxu0 %v559
      %v625 = vpop.f32.mrb[0].mxu0
      %v626 = vadd.f32 0.0, %v625
      %v627 = vpop.f32.mrb[0].mxu0
      %v628 = vpop.f32.mrb[0].mxu0
      %v629 = vadd.f32 0.0, %v628
      %v630 = vpop.f32.mrb[0].mxu0
      %631 = vmatprep.mubr.bf16.mxu0 0
      %632 = vmatmul.mubr.bf16.gmra.mrb[0].mxu0 %v562
      %v633 = vpop.f32.mrb[0].mxu0
      %v634 = vadd.f32 0.0, %v633
      %v635 = vpop.f32.mrb[0].mxu0
      %v636 = vpop.f32.mrb[0].mxu0
      %v637 = vadd.f32 0.0, %v636
      %v638 = vpop.f32.mrb[0].mxu0
      %639 = vmatprep.mubr.bf16.mxu0 0
      %640 = vmatmul.mubr.bf16.gmra.mrb[0].mxu0 %v565
      %v641 = vpop.f32.mrb[0].mxu0
      %v642 = vadd.f32 0.0, %v641
      %v643 = vpop.f32.mrb[0].mxu0
      %v644 = vpop.f32.mrb[0].mxu0
      %v645 = vadd.f32 0.0, %v644
      %v646 = vpop.f32.mrb[0].mxu0
      %647 = vdwg.mxu0
      %v648 = vadd.f32 %v429, %v602
      %v649 = vadd.f32 %v430, %v605
      %v650 = vadd.f32 %v431, %v610
      %v651 = vadd.f32 %v432, %v613
      %v652 = vadd.f32 %v433, %v618
      %v653 = vadd.f32 %v434, %v621
      %v654 = vadd.f32 %v435, %v626
      %v655 = vadd.f32 %v436, %v629
      %v656 = vadd.f32 %v437, %v634
      %v657 = vadd.f32 %v438, %v637
      %v658 = vadd.f32 %v439, %v642
      %v659 = vadd.f32 %v440, %v645
      %660 = vst [vmem:[#allocation2] sm:$0xff] %v648
      %661 = vst [vmem:[#allocation2 + $0x8] sm:$0xff] %v649
      %662 = vst [vmem:[#allocation2 + $0x10] sm:$0xff] %v650
      %663 = vst [vmem:[#allocation2 + $0x18] sm:$0xff] %v651
      %664 = vst [vmem:[#allocation2 + $0x20] sm:$0xff] %v652
      %665 = vst [vmem:[#allocation2 + $0x28] sm:$0xff] %v653
      %666 = vst [vmem:[#allocation2 + $0x30] sm:$0xff] %v654
      %667 = vst [vmem:[#allocation2 + $0x38] sm:$0xff] %v655
      %668 = vst [vmem:[#allocation2 + $0x40] sm:$0xff] %v656
      %669 = vst [vmem:[#allocation2 + $0x48] sm:$0xff] %v657
      %670 = vst [vmem:[#allocation2 + $0x50] sm:$0xff] %v658
      %671 = vst [vmem:[#allocation2 + $0x58] sm:$0xff] %v659
      %v672 = vld [vmem:[#allocation2] sm:$0xff]
      %v673 = vld [vmem:[#allocation2 + $0x8] sm:$0xff]
      %v674 = vld [vmem:[#allocation2 + $0x10] sm:$0xff]
      %v675 = vld [vmem:[#allocation2 + $0x18] sm:$0xff]
      %v676 = vld [vmem:[#allocation2 + $0x20] sm:$0xff]
      %v677 = vld [vmem:[#allocation2 + $0x28] sm:$0xff]
      %v678 = vld [vmem:[#allocation2 + $0x30] sm:$0xff]
      %v679 = vld [vmem:[#allocation2 + $0x38] sm:$0xff]
      %v680 = vld [vmem:[#allocation2 + $0x40] sm:$0xff]
      %v681 = vld [vmem:[#allocation2 + $0x48] sm:$0xff]
      %v682 = vld [vmem:[#allocation2 + $0x50] sm:$0xff]
      %v683 = vld [vmem:[#allocation2 + $0x58] sm:$0xff]
      %v684 = vld [vmem:[%s206] sm:$0xf]
      %v685 = vld [vmem:[%s206 + $0x4] sm:$0xf]
      %v686 = vld [vmem:[%s206 + $0x8] sm:$0xf]
      %v687 = vld [vmem:[%s206 + $0xc] sm:$0xf]
      %v688 = vld [vmem:[%s206 + $0x10] sm:$0xf]
      %v689 = vld [vmem:[%s206 + $0x14] sm:$0xf]
      %v690 = vld [vmem:[%s206 + $0x18] sm:$0xf]
      %v691 = vld [vmem:[%s206 + $0x1c] sm:$0xf]
      %v692 = vld [vmem:[%s206 + $0x20] sm:$0xf]
      %v693 = vld [vmem:[%s206 + $0x24] sm:$0xf]
      %v694 = vld [vmem:[%s206 + $0x28] sm:$0xf]
      %v695 = vld [vmem:[%s206 + $0x2c] sm:$0xf]
      %v696 = vld [vmem:[%s206 + $0x30] sm:$0x1]
      %s697 = scalar_lea.vmem %s210, 16
      %v698 = vld [vmem:[%s697] sm:$0xf]
      %v699 = vld [vmem:[%s697 + $0x4] sm:$0xf]
      %v713 = vunpack.c.l.b16 %v684
      %v714 = vunpack.c.l.b16 %v685
      %v715 = vunpack.c.l.b16 %v686
      %v716 = vunpack.c.l.b16 %v687
      %v717 = vunpack.c.l.b16 %v688
      %v718 = vunpack.c.l.b16 %v689
      %v719 = vunpack.c.l.b16 %v690
      %v720 = vunpack.c.l.b16 %v691
      %v721 = vunpack.c.l.b16 %v692
      %v722 = vunpack.c.l.b16 %v693
      %v723 = vunpack.c.l.b16 %v694
      %v724 = vunpack.c.l.b16 %v695
      %v725 = vunpack.c.l.b16 %v696
      %v726 = vpack.c.b16 %v714, %v713
      %v727 = vpack.c.b16 %v716, %v715
      %v728 = vpack.c.b16 %v718, %v717
      %v729 = vpack.c.b16 %v720, %v719
      %v730 = vpack.c.b16 %v722, %v721
      %v731 = vpack.c.b16 %v724, %v723
      %v732 = vpack.c.b16 %v725, %v725
      %v734 = vshrl.u32 %v726, 16
      %v736 = vshll.u32 %v726, 16
      %v738 = vrot.slane %v736, 1
      %v739 = vor.u32 %v734, %v738
      %v741 = vshll.u32 %v727, 16
      %v743 = vrot.slane %v741, 1
      %v744 = vsel %vm490, %v739, %v743
      %v745 = vshrl.u32 %v727, 16
      %v747 = vor.u32 %v745, %v743
      %v749 = vshll.u32 %v728, 16
      %v751 = vrot.slane %v749, 1
      %v752 = vsel %vm490, %v747, %v751
      %v753 = vshrl.u32 %v728, 16
      %v755 = vor.u32 %v753, %v751
      %v757 = vshll.u32 %v729, 16
      %v759 = vrot.slane %v757, 1
      %v760 = vsel %vm490, %v755, %v759
      %v761 = vshrl.u32 %v729, 16
      %v763 = vor.u32 %v761, %v759
      %v765 = vshll.u32 %v730, 16
      %v767 = vrot.slane %v765, 1
      %v768 = vsel %vm490, %v763, %v767
      %v769 = vshrl.u32 %v730, 16
      %v771 = vor.u32 %v769, %v767
      %v773 = vshll.u32 %v731, 16
      %v775 = vrot.slane %v773, 1
      %v776 = vsel %vm490, %v771, %v775
      %v777 = vshrl.u32 %v731, 16
      %v779 = vor.u32 %v777, %v775
      %v781 = vshll.u32 %v732, 16
      %v783 = vrot.slane %v781, 1
      %v784 = vsel %vm490, %v779, %v783
      %v787 = vunpack.c.l.b16 %v698
      %v788 = vunpack.c.l.b16 %v699
      %v789 = vpack.c.b16 %v788, %v787
      %v792 = vsel %vm305, %v744, 0
      %v795 = vsel %vm305, %v752, 0
      %v798 = vsel %vm305, %v760, 0
      %v801 = vsel %vm305, %v768, 0
      %v804 = vsel %vm305, %v776, 0
      %v807 = vsel %vm305, %v784, 0
      %809 = vmatprep.subr.bf16.mxu0 0
      %810 = vmatpush1.bf16.msra.mxu0 %v789
      %811 = vmatprep.subr.bf16.mxu0 0
      %812 = vmatpush1.bf16.msra.mxu0 0
      %813 = vmatprep.subr.bf16.mxu0 0
      %814 = vmatpush1.bf16.msra.mxu0 0
      %815 = vmatprep.subr.bf16.mxu0 0
      %816 = vmatpush1.bf16.msra.mxu0 0
      %817 = vmatprep.subr.bf16.mxu0 0
      %818 = vmatpush1.bf16.msra.mxu0 0
      %819 = vmatprep.subr.bf16.mxu0 0
      %820 = vmatpush1.bf16.msra.mxu0 0
      %821 = vmatprep.subr.bf16.mxu0 0
      %822 = vmatpush1.bf16.msra.mxu0 0
      %823 = vmatprep.subr.bf16.mxu0 0
      %824 = vmatpush1.bf16.msra.mxu0 0
      %825 = vmatprep.subr.bf16.mxu0 0
      %826 = vmatpush1.bf16.msra.mxu0 0
      %827 = vmatprep.subr.bf16.mxu0 0
      %828 = vmatpush1.bf16.msra.mxu0 0
      %829 = vmatprep.subr.bf16.mxu0 0
      %830 = vmatpush1.bf16.msra.mxu0 0
      %831 = vmatprep.subr.bf16.mxu0 0
      %832 = vmatpush1.bf16.msra.mxu0 0
      %833 = vmatprep.subr.bf16.mxu0 0
      %834 = vmatpush1.bf16.msra.mxu0 0
      %835 = vmatprep.subr.bf16.mxu0 0
      %836 = vmatpush1.bf16.msra.mxu0 0
      %837 = vmatprep.subr.bf16.mxu0 0
      %838 = vmatpush1.bf16.msra.mxu0 0
      %839 = vmatprep.subr.bf16.mxu0 0
      %840 = vmatpush1.bf16.msra.mxu0 0
      %841 = vmatprep.mubr.bf16.mxu0 0
      %842 = vmatmul.mubr.bf16.gmra.mrb[0].mxu0 %v792
      %v843 = vpop.f32.mrb[0].mxu0
      %v844 = vadd.f32 0.0, %v843
      %v845 = vpop.f32.mrb[0].mxu0
      %v846 = vpop.f32.mrb[0].mxu0
      %v847 = vadd.f32 0.0, %v846
      %v848 = vpop.f32.mrb[0].mxu0
      %849 = vmatprep.mubr.bf16.mxu0 0
      %850 = vmatmul.mubr.bf16.gmra.mrb[0].mxu0 %v795
      %v851 = vpop.f32.mrb[0].mxu0
      %v852 = vadd.f32 0.0, %v851
      %v853 = vpop.f32.mrb[0].mxu0
      %v854 = vpop.f32.mrb[0].mxu0
      %v855 = vadd.f32 0.0, %v854
      %v856 = vpop.f32.mrb[0].mxu0
      %857 = vmatprep.mubr.bf16.mxu0 0
      %858 = vmatmul.mubr.bf16.gmra.mrb[0].mxu0 %v798
      %v859 = vpop.f32.mrb[0].mxu0
      %v860 = vadd.f32 0.0, %v859
      %v861 = vpop.f32.mrb[0].mxu0
      %v862 = vpop.f32.mrb[0].mxu0
      %v863 = vadd.f32 0.0, %v862
      %v864 = vpop.f32.mrb[0].mxu0
      %865 = vmatprep.mubr.bf16.mxu0 0
      %866 = vmatmul.mubr.bf16.gmra.mrb[0].mxu0 %v801
      %v867 = vpop.f32.mrb[0].mxu0
      %v868 = vadd.f32 0.0, %v867
      %v869 = vpop.f32.mrb[0].mxu0
      %v870 = vpop.f32.mrb[0].mxu0
      %v871 = vadd.f32 0.0, %v870
      %v872 = vpop.f32.mrb[0].mxu0
      %873 = vmatprep.mubr.bf16.mxu0 0
      %874 = vmatmul.mubr.bf16.gmra.mrb[0].mxu0 %v804
      %v875 = vpop.f32.mrb[0].mxu0
      %v876 = vadd.f32 0.0, %v875
      %v877 = vpop.f32.mrb[0].mxu0
      %v878 = vpop.f32.mrb[0].mxu0
      %v879 = vadd.f32 0.0, %v878
      %v880 = vpop.f32.mrb[0].mxu0
      %881 = vmatprep.mubr.bf16.mxu0 0
      %882 = vmatmul.mubr.bf16.gmra.mrb[0].mxu0 %v807
      %v883 = vpop.f32.mrb[0].mxu0
      %v884 = vadd.f32 0.0, %v883
      %v885 = vpop.f32.mrb[0].mxu0
      %v886 = vpop.f32.mrb[0].mxu0
      %v887 = vadd.f32 0.0, %v886
      %v888 = vpop.f32.mrb[0].mxu0
      %889 = vdwg.mxu0
      %v890 = vadd.f32 %v672, %v844
      %v891 = vadd.f32 %v673, %v847
      %v892 = vadd.f32 %v674, %v852
      %v893 = vadd.f32 %v675, %v855
      %v894 = vadd.f32 %v676, %v860
      %v895 = vadd.f32 %v677, %v863
      %v896 = vadd.f32 %v678, %v868
      %v897 = vadd.f32 %v679, %v871
      %v898 = vadd.f32 %v680, %v876
      %v899 = vadd.f32 %v681, %v879
      %v900 = vadd.f32 %v682, %v884
      %v901 = vadd.f32 %v683, %v887
      %902 = vst [vmem:[#allocation2] sm:$0xff] %v890
      %903 = vst [vmem:[#allocation2 + $0x8] sm:$0xff] %v891
      %904 = vst [vmem:[#allocation2 + $0x10] sm:$0xff] %v892
      %905 = vst [vmem:[#allocation2 + $0x18] sm:$0xff] %v893
      %906 = vst [vmem:[#allocation2 + $0x20] sm:$0xff] %v894
      %907 = vst [vmem:[#allocation2 + $0x28] sm:$0xff] %v895
      %908 = vst [vmem:[#allocation2 + $0x30] sm:$0xff] %v896
      %909 = vst [vmem:[#allocation2 + $0x38] sm:$0xff] %v897
      %910 = vst [vmem:[#allocation2 + $0x40] sm:$0xff] %v898
      %911 = vst [vmem:[#allocation2 + $0x48] sm:$0xff] %v899
      %912 = vst [vmem:[#allocation2 + $0x50] sm:$0xff] %v900
      %913 = vst [vmem:[#allocation2 + $0x58] sm:$0xff] %v901
      %v914 = vld [vmem:[#allocation2] sm:$0xff]
      %v915 = vld [vmem:[#allocation2 + $0x8] sm:$0xff]
      %v916 = vld [vmem:[#allocation2 + $0x10] sm:$0xff]
      %v917 = vld [vmem:[#allocation2 + $0x18] sm:$0xff]
      %v918 = vld [vmem:[#allocation2 + $0x20] sm:$0xff]
      %v919 = vld [vmem:[#allocation2 + $0x28] sm:$0xff]
      %v920 = vld [vmem:[#allocation2 + $0x30] sm:$0xff]
      %v921 = vld [vmem:[#allocation2 + $0x38] sm:$0xff]
      %v922 = vld [vmem:[#allocation2 + $0x40] sm:$0xff]
      %v923 = vld [vmem:[#allocation2 + $0x48] sm:$0xff]
      %v924 = vld [vmem:[#allocation2 + $0x50] sm:$0xff]
      %v925 = vld [vmem:[#allocation2 + $0x58] sm:$0xff]
      %v926 = vld [vmem:[%s206 + $0x50] sm:$0xe]
      %v927 = vld [vmem:[%s206 + $0x54] sm:$0xf]
      %v928 = vld [vmem:[%s206 + $0x58] sm:$0xf]
      %v929 = vld [vmem:[%s206 + $0x5c] sm:$0xf]
      %v930 = vld [vmem:[%s206 + $0x60] sm:$0xf]
      %v931 = vld [vmem:[%s206 + $0x64] sm:$0xf]
      %v932 = vld [vmem:[%s206 + $0x68] sm:$0xf]
      %v933 = vld [vmem:[%s206 + $0x6c] sm:$0xf]
      %v934 = vld [vmem:[%s206 + $0x70] sm:$0xf]
      %v935 = vld [vmem:[%s206 + $0x74] sm:$0xf]
      %v936 = vld [vmem:[%s206 + $0x78] sm:$0xf]
      %v937 = vld [vmem:[%s206 + $0x7c] sm:$0xf]
      %v938 = vld [vmem:[%s206 + $0x80] sm:$0x1]
      %s939 = scalar_lea.vmem %s210, 24
      %v940 = vld [vmem:[%s939] sm:$0xf]
      %v941 = vld [vmem:[%s939 + $0x4] sm:$0xf]
      %v955 = vunpack.c.l.b16 %v926
      %v956 = vunpack.c.l.b16 %v927
      %v957 = vunpack.c.l.b16 %v928
      %v958 = vunpack.c.l.b16 %v929
      %v959 = vunpack.c.l.b16 %v930
      %v960 = vunpack.c.l.b16 %v931
      %v961 = vunpack.c.l.b16 %v932
      %v962 = vunpack.c.l.b16 %v933
      %v963 = vunpack.c.l.b16 %v934
      %v964 = vunpack.c.l.b16 %v935
      %v965 = vunpack.c.l.b16 %v936
      %v966 = vunpack.c.l.b16 %v937
      %v967 = vunpack.c.l.b16 %v938
      %v968 = vpack.c.b16 %v956, %v955
      %v969 = vpack.c.b16 %v958, %v957
      %v970 = vpack.c.b16 %v960, %v959
      %v971 = vpack.c.b16 %v962, %v961
      %v972 = vpack.c.b16 %v964, %v963
      %v973 = vpack.c.b16 %v966, %v965
      %v974 = vpack.c.b16 %v967, %v967
      %vm975 = vcmask 1046528
      %v976 = vrot.slane %v968, 1
      %v977 = vrot.slane %v969, 1
      %v978 = vsel %vm975, %v976, %v977
      %v979 = vrot.slane %v970, 1
      %v980 = vsel %vm975, %v977, %v979
      %v981 = vrot.slane %v971, 1
      %v982 = vsel %vm975, %v979, %v981
      %v983 = vrot.slane %v972, 1
      %v984 = vsel %vm975, %v981, %v983
      %v985 = vrot.slane %v973, 1
      %v986 = vsel %vm975, %v983, %v985
      %v987 = vrot.slane %v974, 1
      %v988 = vsel %vm975, %v985, %v987
      %v991 = vunpack.c.l.b16 %v940
      %v992 = vunpack.c.l.b16 %v941
      %v993 = vpack.c.b16 %v992, %v991
      %v996 = vsel %vm305, %v978, 0
      %v999 = vsel %vm305, %v980, 0
      %v1002 = vsel %vm305, %v982, 0
      %v1005 = vsel %vm305, %v984, 0
      %v1008 = vsel %vm305, %v986, 0
      %v1011 = vsel %vm305, %v988, 0
      %1013 = vmatprep.subr.bf16.mxu0 0
      %1014 = vmatpush1.bf16.msra.mxu0 %v993
      %1015 = vmatprep.subr.bf16.mxu0 0
      %1016 = vmatpush1.bf16.msra.mxu0 0
      %1017 = vmatprep.subr.bf16.mxu0 0
      %1018 = vmatpush1.bf16.msra.mxu0 0
      %1019 = vmatprep.subr.bf16.mxu0 0
      %1020 = vmatpush1.bf16.msra.mxu0 0
      %1021 = vmatprep.subr.bf16.mxu0 0
      %1022 = vmatpush1.bf16.msra.mxu0 0
      %1023 = vmatprep.subr.bf16.mxu0 0
      %1024 = vmatpush1.bf16.msra.mxu0 0
      %1025 = vmatprep.subr.bf16.mxu0 0
      %1026 = vmatpush1.bf16.msra.mxu0 0
      %1027 = vmatprep.subr.bf16.mxu0 0
      %1028 = vmatpush1.bf16.msra.mxu0 0
      %1029 = vmatprep.subr.bf16.mxu0 0
      %1030 = vmatpush1.bf16.msra.mxu0 0
      %1031 = vmatprep.subr.bf16.mxu0 0
      %1032 = vmatpush1.bf16.msra.mxu0 0
      %1033 = vmatprep.subr.bf16.mxu0 0
      %1034 = vmatpush1.bf16.msra.mxu0 0
      %1035 = vmatprep.subr.bf16.mxu0 0
      %1036 = vmatpush1.bf16.msra.mxu0 0
      %1037 = vmatprep.subr.bf16.mxu0 0
      %1038 = vmatpush1.bf16.msra.mxu0 0
      %1039 = vmatprep.subr.bf16.mxu0 0
      %1040 = vmatpush1.bf16.msra.mxu0 0
      %1041 = vmatprep.subr.bf16.mxu0 0
      %1042 = vmatpush1.bf16.msra.mxu0 0
      %1043 = vmatprep.subr.bf16.mxu0 0
      %1044 = vmatpush1.bf16.msra.mxu0 0
      %1045 = vmatprep.mubr.bf16.mxu0 0
      %1046 = vmatmul.mubr.bf16.gmra.mrb[0].mxu0 %v996
      %v1047 = vpop.f32.mrb[0].mxu0
      %v1048 = vadd.f32 0.0, %v1047
      %v1049 = vpop.f32.mrb[0].mxu0
      %v1050 = vpop.f32.mrb[0].mxu0
      %v1051 = vadd.f32 0.0, %v1050
      %v1052 = vpop.f32.mrb[0].mxu0
      %1053 = vmatprep.mubr.bf16.mxu0 0
      %1054 = vmatmul.mubr.bf16.gmra.mrb[0].mxu0 %v999
      %v1055 = vpop.f32.mrb[0].mxu0
      %v1056 = vadd.f32 0.0, %v1055
      %v1057 = vpop.f32.mrb[0].mxu0
      %v1058 = vpop.f32.mrb[0].mxu0
      %v1059 = vadd.f32 0.0, %v1058
      %v1060 = vpop.f32.mrb[0].mxu0
      %1061 = vmatprep.mubr.bf16.mxu0 0
      %1062 = vmatmul.mubr.bf16.gmra.mrb[0].mxu0 %v1002
      %v1063 = vpop.f32.mrb[0].mxu0
      %v1064 = vadd.f32 0.0, %v1063
      %v1065 = vpop.f32.mrb[0].mxu0
      %v1066 = vpop.f32.mrb[0].mxu0
      %v1067 = vadd.f32 0.0, %v1066
      %v1068 = vpop.f32.mrb[0].mxu0
      %1069 = vmatprep.mubr.bf16.mxu0 0
      %1070 = vmatmul.mubr.bf16.gmra.mrb[0].mxu0 %v1005
      %v1071 = vpop.f32.mrb[0].mxu0
      %v1072 = vadd.f32 0.0, %v1071
      %v1073 = vpop.f32.mrb[0].mxu0
      %v1074 = vpop.f32.mrb[0].mxu0
      %v1075 = vadd.f32 0.0, %v1074
      %v1076 = vpop.f32.mrb[0].mxu0
      %1077 = vmatprep.mubr.bf16.mxu0 0
      %1078 = vmatmul.mubr.bf16.gmra.mrb[0].mxu0 %v1008
      %v1079 = vpop.f32.mrb[0].mxu0
      %v1080 = vadd.f32 0.0, %v1079
      %v1081 = vpop.f32.mrb[0].mxu0
      %v1082 = vpop.f32.mrb[0].mxu0
      %v1083 = vadd.f32 0.0, %v1082
      %v1084 = vpop.f32.mrb[0].mxu0
      %1085 = vmatprep.mubr.bf16.mxu0 0
      %1086 = vmatmul.mubr.bf16.gmra.mrb[0].mxu0 %v1011
      %v1087 = vpop.f32.mrb[0].mxu0
      %v1088 = vadd.f32 0.0, %v1087
      %v1089 = vpop.f32.mrb[0].mxu0
      %v1090 = vpop.f32.mrb[0].mxu0
      %v1091 = vadd.f32 0.0, %v1090
      %v1092 = vpop.f32.mrb[0].mxu0
      %1093 = vdwg.mxu0
      %v1094 = vadd.f32 %v914, %v1048
      %v1095 = vadd.f32 %v915, %v1051
      %v1096 = vadd.f32 %v916, %v1056
      %v1097 = vadd.f32 %v917, %v1059
      %v1098 = vadd.f32 %v918, %v1064
      %v1099 = vadd.f32 %v919, %v1067
      %v1100 = vadd.f32 %v920, %v1072
      %v1101 = vadd.f32 %v921, %v1075
      %v1102 = vadd.f32 %v922, %v1080
      %v1103 = vadd.f32 %v923, %v1083
      %v1104 = vadd.f32 %v924, %v1088
      %v1105 = vadd.f32 %v925, %v1091
      %1106 = vst [vmem:[#allocation2] sm:$0xff] %v1094
      %1107 = vst [vmem:[#allocation2 + $0x8] sm:$0xff] %v1095
      %1108 = vst [vmem:[#allocation2 + $0x10] sm:$0xff] %v1096
      %1109 = vst [vmem:[#allocation2 + $0x18] sm:$0xff] %v1097
      %1110 = vst [vmem:[#allocation2 + $0x20] sm:$0xff] %v1098
      %1111 = vst [vmem:[#allocation2 + $0x28] sm:$0xff] %v1099
      %1112 = vst [vmem:[#allocation2 + $0x30] sm:$0xff] %v1100
      %1113 = vst [vmem:[#allocation2 + $0x38] sm:$0xff] %v1101
      %1114 = vst [vmem:[#allocation2 + $0x40] sm:$0xff] %v1102
      %1115 = vst [vmem:[#allocation2 + $0x48] sm:$0xff] %v1103
      %1116 = vst [vmem:[#allocation2 + $0x50] sm:$0xff] %v1104
      %1117 = vst [vmem:[#allocation2 + $0x58] sm:$0xff] %v1105
      %v1118 = vld [vmem:[#allocation2] sm:$0xff]
      %v1119 = vld [vmem:[#allocation2 + $0x8] sm:$0xff]
      %v1120 = vld [vmem:[#allocation2 + $0x10] sm:$0xff]
      %v1121 = vld [vmem:[#allocation2 + $0x18] sm:$0xff]
      %v1122 = vld [vmem:[#allocation2 + $0x20] sm:$0xff]
      %v1123 = vld [vmem:[#allocation2 + $0x28] sm:$0xff]
      %v1124 = vld [vmem:[#allocation2 + $0x30] sm:$0xff]
      %v1125 = vld [vmem:[#allocation2 + $0x38] sm:$0xff]
      %v1126 = vld [vmem:[#allocation2 + $0x40] sm:$0xff]
      %v1127 = vld [vmem:[#allocation2 + $0x48] sm:$0xff]
      %v1128 = vld [vmem:[#allocation2 + $0x50] sm:$0xff]
      %v1129 = vld [vmem:[#allocation2 + $0x58] sm:$0xff]
      %v1130 = vld [vmem:[%s206 + $0x78] sm:$0xe]
      %v1131 = vld [vmem:[%s206 + $0x7c] sm:$0xf]
      %v1132 = vld [vmem:[%s206 + $0x80] sm:$0xf]
      %v1133 = vld [vmem:[%s206 + $0x84] sm:$0xf]
      %v1134 = vld [vmem:[%s206 + $0x88] sm:$0xf]
      %v1135 = vld [vmem:[%s206 + $0x8c] sm:$0xf]
      %v1136 = vld [vmem:[%s206 + $0x90] sm:$0xf]
      %v1137 = vld [vmem:[%s206 + $0x94] sm:$0xf]
      %v1138 = vld [vmem:[%s206 + $0x98] sm:$0xf]
      %v1139 = vld [vmem:[%s206 + $0x9c] sm:$0xf]
      %v1140 = vld [vmem:[%s206 + $0xa0] sm:$0xf]
      %v1141 = vld [vmem:[%s206 + $0xa4] sm:$0xf]
      %v1142 = vld [vmem:[%s206 + $0xa8] sm:$0x3]
      %s1143 = scalar_lea.vmem %s210, 32
      %v1144 = vld [vmem:[%s1143] sm:$0xf]
      %v1145 = vld [vmem:[%s1143 + $0x4] sm:$0xf]
      %v1159 = vunpack.c.l.b16 %v1130
      %v1160 = vunpack.c.l.b16 %v1131
      %v1161 = vunpack.c.l.b16 %v1132
      %v1162 = vunpack.c.l.b16 %v1133
      %v1163 = vunpack.c.l.b16 %v1134
      %v1164 = vunpack.c.l.b16 %v1135
      %v1165 = vunpack.c.l.b16 %v1136
      %v1166 = vunpack.c.l.b16 %v1137
      %v1167 = vunpack.c.l.b16 %v1138
      %v1168 = vunpack.c.l.b16 %v1139
      %v1169 = vunpack.c.l.b16 %v1140
      %v1170 = vunpack.c.l.b16 %v1141
      %v1171 = vunpack.c.l.b16 %v1142
      %v1172 = vpack.c.b16 %v1160, %v1159
      %v1173 = vpack.c.b16 %v1162, %v1161
      %v1174 = vpack.c.b16 %v1164, %v1163
      %v1175 = vpack.c.b16 %v1166, %v1165
      %v1176 = vpack.c.b16 %v1168, %v1167
      %v1177 = vpack.c.b16 %v1170, %v1169
      %v1178 = vpack.c.b16 %v1171, %v1171
      %vm1179 = vsmask.f32 6400
      %v1181 = vshrl.u32 %v1172, 16
      %v1183 = vrot.slane %v1181, 1
      %v1184 = vshll.u32 %v1172, 16
      %v1186 = vrot.slane %v1184, 2
      %v1187 = vor.u32 %v1183, %v1186
      %v1189 = vshrl.u32 %v1173, 16
      %v1191 = vrot.slane %v1189, 1
      %v1192 = vshll.u32 %v1173, 16
      %v1194 = vrot.slane %v1192, 2
      %v1195 = vor.u32 %v1191, %v1194
      %v1196 = vsel %vm1179, %v1187, %v1195
      %v1198 = vshrl.u32 %v1174, 16
      %v1200 = vrot.slane %v1198, 1
      %v1201 = vshll.u32 %v1174, 16
      %v1203 = vrot.slane %v1201, 2
      %v1204 = vor.u32 %v1200, %v1203
      %v1205 = vsel %vm1179, %v1195, %v1204
      %v1207 = vshrl.u32 %v1175, 16
      %v1209 = vrot.slane %v1207, 1
      %v1210 = vshll.u32 %v1175, 16
      %v1212 = vrot.slane %v1210, 2
      %v1213 = vor.u32 %v1209, %v1212
      %v1214 = vsel %vm1179, %v1204, %v1213
      %v1216 = vshrl.u32 %v1176, 16
      %v1218 = vrot.slane %v1216, 1
      %v1219 = vshll.u32 %v1176, 16
      %v1221 = vrot.slane %v1219, 2
      %v1222 = vor.u32 %v1218, %v1221
      %v1223 = vsel %vm1179, %v1213, %v1222
      %v1225 = vshrl.u32 %v1177, 16
      %v1227 = vrot.slane %v1225, 1
      %v1228 = vshll.u32 %v1177, 16
      %v1230 = vrot.slane %v1228, 2
      %v1231 = vor.u32 %v1227, %v1230
      %v1232 = vsel %vm1179, %v1222, %v1231
      %v1234 = vshrl.u32 %v1178, 16
      %v1236 = vrot.slane %v1234, 1
      %v1237 = vshll.u32 %v1178, 16
      %v1239 = vrot.slane %v1237, 2
      %v1240 = vor.u32 %v1236, %v1239
      %v1241 = vsel %vm1179, %v1231, %v1240
      %v1244 = vunpack.c.l.b16 %v1144
      %v1245 = vunpack.c.l.b16 %v1145
      %v1246 = vpack.c.b16 %v1245, %v1244
      %v1249 = vsel %vm305, %v1196, 0
      %v1252 = vsel %vm305, %v1205, 0
      %v1255 = vsel %vm305, %v1214, 0
      %v1258 = vsel %vm305, %v1223, 0
      %v1261 = vsel %vm305, %v1232, 0
      %v1264 = vsel %vm305, %v1241, 0
      %1266 = vmatprep.subr.bf16.mxu0 0
      %1267 = vmatpush1.bf16.msra.mxu0 %v1246
      %1268 = vmatprep.subr.bf16.mxu0 0
      %1269 = vmatpush1.bf16.msra.mxu0 0
      %1270 = vmatprep.subr.bf16.mxu0 0
      %1271 = vmatpush1.bf16.msra.mxu0 0
      %1272 = vmatprep.subr.bf16.mxu0 0
      %1273 = vmatpush1.bf16.msra.mxu0 0
      %1274 = vmatprep.subr.bf16.mxu0 0
      %1275 = vmatpush1.bf16.msra.mxu0 0
      %1276 = vmatprep.subr.bf16.mxu0 0
      %1277 = vmatpush1.bf16.msra.mxu0 0
      %1278 = vmatprep.subr.bf16.mxu0 0
      %1279 = vmatpush1.bf16.msra.mxu0 0
      %1280 = vmatprep.subr.bf16.mxu0 0
      %1281 = vmatpush1.bf16.msra.mxu0 0
      %1282 = vmatprep.subr.bf16.mxu0 0
      %1283 = vmatpush1.bf16.msra.mxu0 0
      %1284 = vmatprep.subr.bf16.mxu0 0
      %1285 = vmatpush1.bf16.msra.mxu0 0
      %1286 = vmatprep.subr.bf16.mxu0 0
      %1287 = vmatpush1.bf16.msra.mxu0 0
      %1288 = vmatprep.subr.bf16.mxu0 0
      %1289 = vmatpush1.bf16.msra.mxu0 0
      %1290 = vmatprep.subr.bf16.mxu0 0
      %1291 = vmatpush1.bf16.msra.mxu0 0
      %1292 = vmatprep.subr.bf16.mxu0 0
      %1293 = vmatpush1.bf16.msra.mxu0 0
      %1294 = vmatprep.subr.bf16.mxu0 0
      %1295 = vmatpush1.bf16.msra.mxu0 0
      %1296 = vmatprep.subr.bf16.mxu0 0
      %1297 = vmatpush1.bf16.msra.mxu0 0
      %1298 = vmatprep.mubr.bf16.mxu0 0
      %1299 = vmatmul.mubr.bf16.gmra.mrb[0].mxu0 %v1249
      %v1300 = vpop.f32.mrb[0].mxu0
      %v1301 = vadd.f32 0.0, %v1300
      %v1302 = vpop.f32.mrb[0].mxu0
      %v1303 = vpop.f32.mrb[0].mxu0
      %v1304 = vadd.f32 0.0, %v1303
      %v1305 = vpop.f32.mrb[0].mxu0
      %1306 = vmatprep.mubr.bf16.mxu0 0
      %1307 = vmatmul.mubr.bf16.gmra.mrb[0].mxu0 %v1252
      %v1308 = vpop.f32.mrb[0].mxu0
      %v1309 = vadd.f32 0.0, %v1308
      %v1310 = vpop.f32.mrb[0].mxu0
      %v1311 = vpop.f32.mrb[0].mxu0
      %v1312 = vadd.f32 0.0, %v1311
      %v1313 = vpop.f32.mrb[0].mxu0
      %1314 = vmatprep.mubr.bf16.mxu0 0
      %1315 = vmatmul.mubr.bf16.gmra.mrb[0].mxu0 %v1255
      %v1316 = vpop.f32.mrb[0].mxu0
      %v1317 = vadd.f32 0.0, %v1316
      %v1318 = vpop.f32.mrb[0].mxu0
      %v1319 = vpop.f32.mrb[0].mxu0
      %v1320 = vadd.f32 0.0, %v1319
      %v1321 = vpop.f32.mrb[0].mxu0
      %1322 = vmatprep.mubr.bf16.mxu0 0
      %1323 = vmatmul.mubr.bf16.gmra.mrb[0].mxu0 %v1258
      %v1324 = vpop.f32.mrb[0].mxu0
      %v1325 = vadd.f32 0.0, %v1324
      %v1326 = vpop.f32.mrb[0].mxu0
      %v1327 = vpop.f32.mrb[0].mxu0
      %v1328 = vadd.f32 0.0, %v1327
      %v1329 = vpop.f32.mrb[0].mxu0
      %1330 = vmatprep.mubr.bf16.mxu0 0
      %1331 = vmatmul.mubr.bf16.gmra.mrb[0].mxu0 %v1261
      %v1332 = vpop.f32.mrb[0].mxu0
      %v1333 = vadd.f32 0.0, %v1332
      %v1334 = vpop.f32.mrb[0].mxu0
      %v1335 = vpop.f32.mrb[0].mxu0
      %v1336 = vadd.f32 0.0, %v1335
      %v1337 = vpop.f32.mrb[0].mxu0
      %1338 = vmatprep.mubr.bf16.mxu0 0
      %1339 = vmatmul.mubr.bf16.gmra.mrb[0].mxu0 %v1264
      %v1340 = vpop.f32.mrb[0].mxu0
      %v1341 = vadd.f32 0.0, %v1340
      %v1342 = vpop.f32.mrb[0].mxu0
      %v1343 = vpop.f32.mrb[0].mxu0
      %v1344 = vadd.f32 0.0, %v1343
      %v1345 = vpop.f32.mrb[0].mxu0
      %1346 = vdwg.mxu0
      %v1347 = vadd.f32 %v1118, %v1301
      %v1348 = vadd.f32 %v1119, %v1304
      %v1349 = vadd.f32 %v1120, %v1309
      %v1350 = vadd.f32 %v1121, %v1312
      %v1351 = vadd.f32 %v1122, %v1317
      %v1352 = vadd.f32 %v1123, %v1320
      %v1353 = vadd.f32 %v1124, %v1325
      %v1354 = vadd.f32 %v1125, %v1328
      %v1355 = vadd.f32 %v1126, %v1333
      %v1356 = vadd.f32 %v1127, %v1336
      %v1357 = vadd.f32 %v1128, %v1341
      %v1358 = vadd.f32 %v1129, %v1344
      %1359 = vst [vmem:[#allocation2] sm:$0xff] %v1347
      %1360 = vst [vmem:[#allocation2 + $0x8] sm:$0xff] %v1348
      %1361 = vst [vmem:[#allocation2 + $0x10] sm:$0xff] %v1349
      %1362 = vst [vmem:[#allocation2 + $0x18] sm:$0xff] %v1350
      %1363 = vst [vmem:[#allocation2 + $0x20] sm:$0xff] %v1351
      %1364 = vst [vmem:[#allocation2 + $0x28] sm:$0xff] %v1352
      %1365 = vst [vmem:[#allocation2 + $0x30] sm:$0xff] %v1353
      %1366 = vst [vmem:[#allocation2 + $0x38] sm:$0xff] %v1354
      %1367 = vst [vmem:[#allocation2 + $0x40] sm:$0xff] %v1355
      %1368 = vst [vmem:[#allocation2 + $0x48] sm:$0xff] %v1356
      %1369 = vst [vmem:[#allocation2 + $0x50] sm:$0xff] %v1357
      %1370 = vst [vmem:[#allocation2 + $0x58] sm:$0xff] %v1358
      %v1371 = vld [vmem:[#allocation2] sm:$0xff]
      %v1372 = vld [vmem:[#allocation2 + $0x8] sm:$0xff]
      %v1373 = vld [vmem:[#allocation2 + $0x10] sm:$0xff]
      %v1374 = vld [vmem:[#allocation2 + $0x18] sm:$0xff]
      %v1375 = vld [vmem:[#allocation2 + $0x20] sm:$0xff]
      %v1376 = vld [vmem:[#allocation2 + $0x28] sm:$0xff]
      %v1377 = vld [vmem:[#allocation2 + $0x30] sm:$0xff]
      %v1378 = vld [vmem:[#allocation2 + $0x38] sm:$0xff]
      %v1379 = vld [vmem:[#allocation2 + $0x40] sm:$0xff]
      %v1380 = vld [vmem:[#allocation2 + $0x48] sm:$0xff]
      %v1381 = vld [vmem:[#allocation2 + $0x50] sm:$0xff]
      %v1382 = vld [vmem:[#allocation2 + $0x58] sm:$0xff]
      %v1383 = vld [vmem:[%s206 + $0x50] sm:$0xe]
      %v1384 = vld [vmem:[%s206 + $0x54] sm:$0xf]
      %v1385 = vld [vmem:[%s206 + $0x58] sm:$0xf]
      %v1386 = vld [vmem:[%s206 + $0x5c] sm:$0xf]
      %v1387 = vld [vmem:[%s206 + $0x60] sm:$0xf]
      %v1388 = vld [vmem:[%s206 + $0x64] sm:$0xf]
      %v1389 = vld [vmem:[%s206 + $0x68] sm:$0xf]
      %v1390 = vld [vmem:[%s206 + $0x6c] sm:$0xf]
      %v1391 = vld [vmem:[%s206 + $0x70] sm:$0xf]
      %v1392 = vld [vmem:[%s206 + $0x74] sm:$0xf]
      %v1393 = vld [vmem:[%s206 + $0x78] sm:$0xf]
      %v1394 = vld [vmem:[%s206 + $0x7c] sm:$0xf]
      %v1395 = vld [vmem:[%s206 + $0x80] sm:$0x3]
      %s1396 = scalar_lea.vmem %s210, 40
      %v1397 = vld [vmem:[%s1396] sm:$0xf]
      %v1398 = vld [vmem:[%s1396 + $0x4] sm:$0xf]
      %v1412 = vunpack.c.l.b16 %v1383
      %v1413 = vunpack.c.l.b16 %v1384
      %v1414 = vunpack.c.l.b16 %v1385
      %v1415 = vunpack.c.l.b16 %v1386
      %v1416 = vunpack.c.l.b16 %v1387
      %v1417 = vunpack.c.l.b16 %v1388
      %v1418 = vunpack.c.l.b16 %v1389
      %v1419 = vunpack.c.l.b16 %v1390
      %v1420 = vunpack.c.l.b16 %v1391
      %v1421 = vunpack.c.l.b16 %v1392
      %v1422 = vunpack.c.l.b16 %v1393
      %v1423 = vunpack.c.l.b16 %v1394
      %v1424 = vunpack.c.l.b16 %v1395
      %v1425 = vpack.c.b16 %v1413, %v1412
      %v1426 = vpack.c.b16 %v1415, %v1414
      %v1427 = vpack.c.b16 %v1417, %v1416
      %v1428 = vpack.c.b16 %v1419, %v1418
      %v1429 = vpack.c.b16 %v1421, %v1420
      %v1430 = vpack.c.b16 %v1423, %v1422
      %v1431 = vpack.c.b16 %v1424, %v1424
      %v1433 = vshrl.u32 %v1425, 16
      %v1435 = vrot.slane %v1433, 1
      %v1436 = vshll.u32 %v1425, 16
      %v1438 = vrot.slane %v1436, 2
      %v1439 = vor.u32 %v1435, %v1438
      %v1441 = vshrl.u32 %v1426, 16
      %v1443 = vrot.slane %v1441, 1
      %v1444 = vshll.u32 %v1426, 16
      %v1446 = vrot.slane %v1444, 2
      %v1447 = vor.u32 %v1443, %v1446
      %v1448 = vsel %vm1179, %v1439, %v1447
      %v1450 = vshrl.u32 %v1427, 16
      %v1452 = vrot.slane %v1450, 1
      %v1453 = vshll.u32 %v1427, 16
      %v1455 = vrot.slane %v1453, 2
      %v1456 = vor.u32 %v1452, %v1455
      %v1457 = vsel %vm1179, %v1447, %v1456
      %v1459 = vshrl.u32 %v1428, 16
      %v1461 = vrot.slane %v1459, 1
      %v1462 = vshll.u32 %v1428, 16
      %v1464 = vrot.slane %v1462, 2
      %v1465 = vor.u32 %v1461, %v1464
      %v1466 = vsel %vm1179, %v1456, %v1465
      %v1468 = vshrl.u32 %v1429, 16
      %v1470 = vrot.slane %v1468, 1
      %v1471 = vshll.u32 %v1429, 16
      %v1473 = vrot.slane %v1471, 2
      %v1474 = vor.u32 %v1470, %v1473
      %v1475 = vsel %vm1179, %v1465, %v1474
      %v1477 = vshrl.u32 %v1430, 16
      %v1479 = vrot.slane %v1477, 1
      %v1480 = vshll.u32 %v1430, 16
      %v1482 = vrot.slane %v1480, 2
      %v1483 = vor.u32 %v1479, %v1482
      %v1484 = vsel %vm1179, %v1474, %v1483
      %v1486 = vshrl.u32 %v1431, 16
      %v1488 = vrot.slane %v1486, 1
      %v1489 = vshll.u32 %v1431, 16
      %v1491 = vrot.slane %v1489, 2
      %v1492 = vor.u32 %v1488, %v1491
      %v1493 = vsel %vm1179, %v1483, %v1492
      %v1496 = vunpack.c.l.b16 %v1397
      %v1497 = vunpack.c.l.b16 %v1398
      %v1498 = vpack.c.b16 %v1497, %v1496
      %v1501 = vsel %vm305, %v1448, 0
      %v1504 = vsel %vm305, %v1457, 0
      %v1507 = vsel %vm305, %v1466, 0
      %v1510 = vsel %vm305, %v1475, 0
      %v1513 = vsel %vm305, %v1484, 0
      %v1516 = vsel %vm305, %v1493, 0
      %1518 = vmatprep.subr.bf16.mxu0 0
      %1519 = vmatpush1.bf16.msra.mxu0 %v1498
      %1520 = vmatprep.subr.bf16.mxu0 0
      %1521 = vmatpush1.bf16.msra.mxu0 0
      %1522 = vmatprep.subr.bf16.mxu0 0
      %1523 = vmatpush1.bf16.msra.mxu0 0
      %1524 = vmatprep.subr.bf16.mxu0 0
      %1525 = vmatpush1.bf16.msra.mxu0 0
      %1526 = vmatprep.subr.bf16.mxu0 0
      %1527 = vmatpush1.bf16.msra.mxu0 0
      %1528 = vmatprep.subr.bf16.mxu0 0
      %1529 = vmatpush1.bf16.msra.mxu0 0
      %1530 = vmatprep.subr.bf16.mxu0 0
      %1531 = vmatpush1.bf16.msra.mxu0 0
      %1532 = vmatprep.subr.bf16.mxu0 0
      %1533 = vmatpush1.bf16.msra.mxu0 0
      %1534 = vmatprep.subr.bf16.mxu0 0
      %1535 = vmatpush1.bf16.msra.mxu0 0
      %1536 = vmatprep.subr.bf16.mxu0 0
      %1537 = vmatpush1.bf16.msra.mxu0 0
      %1538 = vmatprep.subr.bf16.mxu0 0
      %1539 = vmatpush1.bf16.msra.mxu0 0
      %1540 = vmatprep.subr.bf16.mxu0 0
      %1541 = vmatpush1.bf16.msra.mxu0 0
      %1542 = vmatprep.subr.bf16.mxu0 0
      %1543 = vmatpush1.bf16.msra.mxu0 0
      %1544 = vmatprep.subr.bf16.mxu0 0
      %1545 = vmatpush1.bf16.msra.mxu0 0
      %1546 = vmatprep.subr.bf16.mxu0 0
      %1547 = vmatpush1.bf16.msra.mxu0 0
      %1548 = vmatprep.subr.bf16.mxu0 0
      %1549 = vmatpush1.bf16.msra.mxu0 0
      %1550 = vmatprep.mubr.bf16.mxu0 0
      %1551 = vmatmul.mubr.bf16.gmra.mrb[0].mxu0 %v1501
      %v1552 = vpop.f32.mrb[0].mxu0
      %v1553 = vadd.f32 0.0, %v1552
      %v1554 = vpop.f32.mrb[0].mxu0
      %v1555 = vpop.f32.mrb[0].mxu0
      %v1556 = vadd.f32 0.0, %v1555
      %v1557 = vpop.f32.mrb[0].mxu0
      %1558 = vmatprep.mubr.bf16.mxu0 0
      %1559 = vmatmul.mubr.bf16.gmra.mrb[0].mxu0 %v1504
      %v1560 = vpop.f32.mrb[0].mxu0
      %v1561 = vadd.f32 0.0, %v1560
      %v1562 = vpop.f32.mrb[0].mxu0
      %v1563 = vpop.f32.mrb[0].mxu0
      %v1564 = vadd.f32 0.0, %v1563
      %v1565 = vpop.f32.mrb[0].mxu0
      %1566 = vmatprep.mubr.bf16.mxu0 0
      %1567 = vmatmul.mubr.bf16.gmra.mrb[0].mxu0 %v1507
      %v1568 = vpop.f32.mrb[0].mxu0
      %v1569 = vadd.f32 0.0, %v1568
      %v1570 = vpop.f32.mrb[0].mxu0
      %v1571 = vpop.f32.mrb[0].mxu0
      %v1572 = vadd.f32 0.0, %v1571
      %v1573 = vpop.f32.mrb[0].mxu0
      %1574 = vmatprep.mubr.bf16.mxu0 0
      %1575 = vmatmul.mubr.bf16.gmra.mrb[0].mxu0 %v1510
      %v1576 = vpop.f32.mrb[0].mxu0
      %v1577 = vadd.f32 0.0, %v1576
      %v1578 = vpop.f32.mrb[0].mxu0
      %v1579 = vpop.f32.mrb[0].mxu0
      %v1580 = vadd.f32 0.0, %v1579
      %v1581 = vpop.f32.mrb[0].mxu0
      %1582 = vmatprep.mubr.bf16.mxu0 0
      %1583 = vmatmul.mubr.bf16.gmra.mrb[0].mxu0 %v1513
      %v1584 = vpop.f32.mrb[0].mxu0
      %v1585 = vadd.f32 0.0, %v1584
      %v1586 = vpop.f32.mrb[0].mxu0
      %v1587 = vpop.f32.mrb[0].mxu0
      %v1588 = vadd.f32 0.0, %v1587
      %v1589 = vpop.f32.mrb[0].mxu0
      %1590 = vmatprep.mubr.bf16.mxu0 0
      %1591 = vmatmul.mubr.bf16.gmra.mrb[0].mxu0 %v1516
      %v1592 = vpop.f32.mrb[0].mxu0
      %v1593 = vadd.f32 0.0, %v1592
      %v1594 = vpop.f32.mrb[0].mxu0
      %v1595 = vpop.f32.mrb[0].mxu0
      %v1596 = vadd.f32 0.0, %v1595
      %v1597 = vpop.f32.mrb[0].mxu0
      %1598 = vdwg.mxu0
      %v1599 = vadd.f32 %v1371, %v1553
      %v1600 = vadd.f32 %v1372, %v1556
      %v1601 = vadd.f32 %v1373, %v1561
      %v1602 = vadd.f32 %v1374, %v1564
      %v1603 = vadd.f32 %v1375, %v1569
      %v1604 = vadd.f32 %v1376, %v1572
      %v1605 = vadd.f32 %v1377, %v1577
      %v1606 = vadd.f32 %v1378, %v1580
      %v1607 = vadd.f32 %v1379, %v1585
      %v1608 = vadd.f32 %v1380, %v1588
      %v1609 = vadd.f32 %v1381, %v1593
      %v1610 = vadd.f32 %v1382, %v1596
      %1611 = vst [vmem:[#allocation2] sm:$0xff] %v1599
      %1612 = vst [vmem:[#allocation2 + $0x8] sm:$0xff] %v1600
      %1613 = vst [vmem:[#allocation2 + $0x10] sm:$0xff] %v1601
      %1614 = vst [vmem:[#allocation2 + $0x18] sm:$0xff] %v1602
      %1615 = vst [vmem:[#allocation2 + $0x20] sm:$0xff] %v1603
      %1616 = vst [vmem:[#allocation2 + $0x28] sm:$0xff] %v1604
      %1617 = vst [vmem:[#allocation2 + $0x30] sm:$0xff] %v1605
      %1618 = vst [vmem:[#allocation2 + $0x38] sm:$0xff] %v1606
      %1619 = vst [vmem:[#allocation2 + $0x40] sm:$0xff] %v1607
      %1620 = vst [vmem:[#allocation2 + $0x48] sm:$0xff] %v1608
      %1621 = vst [vmem:[#allocation2 + $0x50] sm:$0xff] %v1609
      %1622 = vst [vmem:[#allocation2 + $0x58] sm:$0xff] %v1610
      %v1623 = vld [vmem:[#allocation2] sm:$0xff]
      %v1624 = vld [vmem:[#allocation2 + $0x8] sm:$0xff]
      %v1625 = vld [vmem:[#allocation2 + $0x10] sm:$0xff]
      %v1626 = vld [vmem:[#allocation2 + $0x18] sm:$0xff]
      %v1627 = vld [vmem:[#allocation2 + $0x20] sm:$0xff]
      %v1628 = vld [vmem:[#allocation2 + $0x28] sm:$0xff]
      %v1629 = vld [vmem:[#allocation2 + $0x30] sm:$0xff]
      %v1630 = vld [vmem:[#allocation2 + $0x38] sm:$0xff]
      %v1631 = vld [vmem:[#allocation2 + $0x40] sm:$0xff]
      %v1632 = vld [vmem:[#allocation2 + $0x48] sm:$0xff]
      %v1633 = vld [vmem:[#allocation2 + $0x50] sm:$0xff]
      %v1634 = vld [vmem:[#allocation2 + $0x58] sm:$0xff]
      %v1635 = vld [vmem:[%s206 + $0x4] sm:$0xf]
      %v1636 = vld [vmem:[%s206 + $0x8] sm:$0xf]
      %v1637 = vld [vmem:[%s206 + $0xc] sm:$0xf]
      %v1638 = vld [vmem:[%s206 + $0x10] sm:$0xf]
      %v1639 = vld [vmem:[%s206 + $0x14] sm:$0xf]
      %v1640 = vld [vmem:[%s206 + $0x18] sm:$0xf]
      %v1641 = vld [vmem:[%s206 + $0x1c] sm:$0xf]
      %v1642 = vld [vmem:[%s206 + $0x20] sm:$0xf]
      %v1643 = vld [vmem:[%s206 + $0x24] sm:$0xf]
      %v1644 = vld [vmem:[%s206 + $0x28] sm:$0xf]
      %v1645 = vld [vmem:[%s206 + $0x2c] sm:$0xf]
      %v1646 = vld [vmem:[%s206 + $0x30] sm:$0xf]
      %v1647 = vld [vmem:[%s206 + $0x34] sm:$0x1]
      %s1648 = scalar_lea.vmem %s210, 48
      %v1649 = vld [vmem:[%s1648] sm:$0xf]
      %v1650 = vld [vmem:[%s1648 + $0x4] sm:$0xf]
      %v1664 = vunpack.c.l.b16 %v1635
      %v1665 = vunpack.c.l.b16 %v1636
      %v1666 = vunpack.c.l.b16 %v1637
      %v1667 = vunpack.c.l.b16 %v1638
      %v1668 = vunpack.c.l.b16 %v1639
      %v1669 = vunpack.c.l.b16 %v1640
      %v1670 = vunpack.c.l.b16 %v1641
      %v1671 = vunpack.c.l.b16 %v1642
      %v1672 = vunpack.c.l.b16 %v1643
      %v1673 = vunpack.c.l.b16 %v1644
      %v1674 = vunpack.c.l.b16 %v1645
      %v1675 = vunpack.c.l.b16 %v1646
      %v1676 = vunpack.c.l.b16 %v1647
      %v1677 = vpack.c.b16 %v1665, %v1664
      %v1678 = vpack.c.b16 %v1667, %v1666
      %v1679 = vpack.c.b16 %v1669, %v1668
      %v1680 = vpack.c.b16 %v1671, %v1670
      %v1681 = vpack.c.b16 %v1673, %v1672
      %v1682 = vpack.c.b16 %v1675, %v1674
      %v1683 = vpack.c.b16 %v1676, %v1676
      %v1685 = vshrl.u32 %v1677, 16
      %v1687 = vshll.u32 %v1677, 16
      %v1689 = vrot.slane %v1687, 1
      %v1690 = vor.u32 %v1685, %v1689
      %v1692 = vshll.u32 %v1678, 16
      %v1694 = vrot.slane %v1692, 1
      %v1695 = vsel %vm490, %v1690, %v1694
      %v1696 = vshrl.u32 %v1678, 16
      %v1698 = vor.u32 %v1696, %v1694
      %v1700 = vshll.u32 %v1679, 16
      %v1702 = vrot.slane %v1700, 1
      %v1703 = vsel %vm490, %v1698, %v1702
      %v1704 = vshrl.u32 %v1679, 16
      %v1706 = vor.u32 %v1704, %v1702
      %v1708 = vshll.u32 %v1680, 16
      %v1710 = vrot.slane %v1708, 1
      %v1711 = vsel %vm490, %v1706, %v1710
      %v1712 = vshrl.u32 %v1680, 16
      %v1714 = vor.u32 %v1712, %v1710
      %v1716 = vshll.u32 %v1681, 16
      %v1718 = vrot.slane %v1716, 1
      %v1719 = vsel %vm490, %v1714, %v1718
      %v1720 = vshrl.u32 %v1681, 16
      %v1722 = vor.u32 %v1720, %v1718
      %v1724 = vshll.u32 %v1682, 16
      %v1726 = vrot.slane %v1724, 1
      %v1727 = vsel %vm490, %v1722, %v1726
      %v1728 = vshrl.u32 %v1682, 16
      %v1730 = vor.u32 %v1728, %v1726
      %v1732 = vshll.u32 %v1683, 16
      %v1734 = vrot.slane %v1732, 1
      %v1735 = vsel %vm490, %v1730, %v1734
      %v1738 = vunpack.c.l.b16 %v1649
      %v1739 = vunpack.c.l.b16 %v1650
      %v1740 = vpack.c.b16 %v1739, %v1738
      %v1743 = vsel %vm305, %v1695, 0
      %v1746 = vsel %vm305, %v1703, 0
      %v1749 = vsel %vm305, %v1711, 0
      %v1752 = vsel %vm305, %v1719, 0
      %v1755 = vsel %vm305, %v1727, 0
      %v1758 = vsel %vm305, %v1735, 0
      %1760 = vmatprep.subr.bf16.mxu0 0
      %1761 = vmatpush1.bf16.msra.mxu0 %v1740
      %1762 = vmatprep.subr.bf16.mxu0 0
      %1763 = vmatpush1.bf16.msra.mxu0 0
      %1764 = vmatprep.subr.bf16.mxu0 0
      %1765 = vmatpush1.bf16.msra.mxu0 0
      %1766 = vmatprep.subr.bf16.mxu0 0
      %1767 = vmatpush1.bf16.msra.mxu0 0
      %1768 = vmatprep.subr.bf16.mxu0 0
      %1769 = vmatpush1.bf16.msra.mxu0 0
      %1770 = vmatprep.subr.bf16.mxu0 0
      %1771 = vmatpush1.bf16.msra.mxu0 0
      %1772 = vmatprep.subr.bf16.mxu0 0
      %1773 = vmatpush1.bf16.msra.mxu0 0
      %1774 = vmatprep.subr.bf16.mxu0 0
      %1775 = vmatpush1.bf16.msra.mxu0 0
      %1776 = vmatprep.subr.bf16.mxu0 0
      %1777 = vmatpush1.bf16.msra.mxu0 0
      %1778 = vmatprep.subr.bf16.mxu0 0
      %1779 = vmatpush1.bf16.msra.mxu0 0
      %1780 = vmatprep.subr.bf16.mxu0 0
      %1781 = vmatpush1.bf16.msra.mxu0 0
      %1782 = vmatprep.subr.bf16.mxu0 0
      %1783 = vmatpush1.bf16.msra.mxu0 0
      %1784 = vmatprep.subr.bf16.mxu0 0
      %1785 = vmatpush1.bf16.msra.mxu0 0
      %1786 = vmatprep.subr.bf16.mxu0 0
      %1787 = vmatpush1.bf16.msra.mxu0 0
      %1788 = vmatprep.subr.bf16.mxu0 0
      %1789 = vmatpush1.bf16.msra.mxu0 0
      %1790 = vmatprep.subr.bf16.mxu0 0
      %1791 = vmatpush1.bf16.msra.mxu0 0
      %1792 = vmatprep.mubr.bf16.mxu0 0
      %1793 = vmatmul.mubr.bf16.gmra.mrb[0].mxu0 %v1743
      %v1794 = vpop.f32.mrb[0].mxu0
      %v1795 = vadd.f32 0.0, %v1794
      %v1796 = vpop.f32.mrb[0].mxu0
      %v1797 = vpop.f32.mrb[0].mxu0
      %v1798 = vadd.f32 0.0, %v1797
      %v1799 = vpop.f32.mrb[0].mxu0
      %1800 = vmatprep.mubr.bf16.mxu0 0
      %1801 = vmatmul.mubr.bf16.gmra.mrb[0].mxu0 %v1746
      %v1802 = vpop.f32.mrb[0].mxu0
      %v1803 = vadd.f32 0.0, %v1802
      %v1804 = vpop.f32.mrb[0].mxu0
      %v1805 = vpop.f32.mrb[0].mxu0
      %v1806 = vadd.f32 0.0, %v1805
      %v1807 = vpop.f32.mrb[0].mxu0
      %1808 = vmatprep.mubr.bf16.mxu0 0
      %1809 = vmatmul.mubr.bf16.gmra.mrb[0].mxu0 %v1749
      %v1810 = vpop.f32.mrb[0].mxu0
      %v1811 = vadd.f32 0.0, %v1810
      %v1812 = vpop.f32.mrb[0].mxu0
      %v1813 = vpop.f32.mrb[0].mxu0
      %v1814 = vadd.f32 0.0, %v1813
      %v1815 = vpop.f32.mrb[0].mxu0
      %1816 = vmatprep.mubr.bf16.mxu0 0
      %1817 = vmatmul.mubr.bf16.gmra.mrb[0].mxu0 %v1752
      %v1818 = vpop.f32.mrb[0].mxu0
      %v1819 = vadd.f32 0.0, %v1818
      %v1820 = vpop.f32.mrb[0].mxu0
      %v1821 = vpop.f32.mrb[0].mxu0
      %v1822 = vadd.f32 0.0, %v1821
      %v1823 = vpop.f32.mrb[0].mxu0
      %1824 = vmatprep.mubr.bf16.mxu0 0
      %1825 = vmatmul.mubr.bf16.gmra.mrb[0].mxu0 %v1755
      %v1826 = vpop.f32.mrb[0].mxu0
      %v1827 = vadd.f32 0.0, %v1826
      %v1828 = vpop.f32.mrb[0].mxu0
      %v1829 = vpop.f32.mrb[0].mxu0
      %v1830 = vadd.f32 0.0, %v1829
      %v1831 = vpop.f32.mrb[0].mxu0
      %1832 = vmatprep.mubr.bf16.mxu0 0
      %1833 = vmatmul.mubr.bf16.gmra.mrb[0].mxu0 %v1758
      %v1834 = vpop.f32.mrb[0].mxu0
      %v1835 = vadd.f32 0.0, %v1834
      %v1836 = vpop.f32.mrb[0].mxu0
      %v1837 = vpop.f32.mrb[0].mxu0
      %v1838 = vadd.f32 0.0, %v1837
      %v1839 = vpop.f32.mrb[0].mxu0
      %1840 = vdwg.mxu0
      %v1841 = vadd.f32 %v1623, %v1795
      %v1842 = vadd.f32 %v1624, %v1798
      %v1843 = vadd.f32 %v1625, %v1803
      %v1844 = vadd.f32 %v1626, %v1806
      %v1845 = vadd.f32 %v1627, %v1811
      %v1846 = vadd.f32 %v1628, %v1814
      %v1847 = vadd.f32 %v1629, %v1819
      %v1848 = vadd.f32 %v1630, %v1822
      %v1849 = vadd.f32 %v1631, %v1827
      %v1850 = vadd.f32 %v1632, %v1830
      %v1851 = vadd.f32 %v1633, %v1835
      %v1852 = vadd.f32 %v1634, %v1838
      %1853 = vst [vmem:[#allocation2] sm:$0xff] %v1841
      %1854 = vst [vmem:[#allocation2 + $0x8] sm:$0xff] %v1842
      %1855 = vst [vmem:[#allocation2 + $0x10] sm:$0xff] %v1843
      %1856 = vst [vmem:[#allocation2 + $0x18] sm:$0xff] %v1844
      %1857 = vst [vmem:[#allocation2 + $0x20] sm:$0xff] %v1845
      %1858 = vst [vmem:[#allocation2 + $0x28] sm:$0xff] %v1846
      %1859 = vst [vmem:[#allocation2 + $0x30] sm:$0xff] %v1847
      %1860 = vst [vmem:[#allocation2 + $0x38] sm:$0xff] %v1848
      %1861 = vst [vmem:[#allocation2 + $0x40] sm:$0xff] %v1849
      %1862 = vst [vmem:[#allocation2 + $0x48] sm:$0xff] %v1850
      %1863 = vst [vmem:[#allocation2 + $0x50] sm:$0xff] %v1851
      %1864 = vst [vmem:[#allocation2 + $0x58] sm:$0xff] %v1852
      %v1865 = vld [vmem:[#allocation2] sm:$0xff]
      %v1866 = vld [vmem:[#allocation2 + $0x8] sm:$0xff]
      %v1867 = vld [vmem:[#allocation2 + $0x10] sm:$0xff]
      %v1868 = vld [vmem:[#allocation2 + $0x18] sm:$0xff]
      %v1869 = vld [vmem:[#allocation2 + $0x20] sm:$0xff]
      %v1870 = vld [vmem:[#allocation2 + $0x28] sm:$0xff]
      %v1871 = vld [vmem:[#allocation2 + $0x30] sm:$0xff]
      %v1872 = vld [vmem:[#allocation2 + $0x38] sm:$0xff]
      %v1873 = vld [vmem:[#allocation2 + $0x40] sm:$0xff]
      %v1874 = vld [vmem:[#allocation2 + $0x48] sm:$0xff]
      %v1875 = vld [vmem:[#allocation2 + $0x50] sm:$0xff]
      %v1876 = vld [vmem:[#allocation2 + $0x58] sm:$0xff]
      %v1877 = vld [vmem:[%s206 + $0x2c] sm:$0xe]
      %v1878 = vld [vmem:[%s206 + $0x30] sm:$0xf]
      %v1879 = vld [vmem:[%s206 + $0x34] sm:$0xf]
      %v1880 = vld [vmem:[%s206 + $0x38] sm:$0xf]
      %v1881 = vld [vmem:[%s206 + $0x3c] sm:$0xf]
      %v1882 = vld [vmem:[%s206 + $0x40] sm:$0xf]
      %v1883 = vld [vmem:[%s206 + $0x44] sm:$0xf]
      %v1884 = vld [vmem:[%s206 + $0x48] sm:$0xf]
      %v1885 = vld [vmem:[%s206 + $0x4c] sm:$0xf]
      %v1886 = vld [vmem:[%s206 + $0x50] sm:$0xf]
      %v1887 = vld [vmem:[%s206 + $0x54] sm:$0xf]
      %v1888 = vld [vmem:[%s206 + $0x58] sm:$0xf]
      %v1889 = vld [vmem:[%s206 + $0x5c] sm:$0x1]
      %s1890 = scalar_lea.vmem %s210, 56
      %v1891 = vld [vmem:[%s1890] sm:$0xf]
      %v1892 = vld [vmem:[%s1890 + $0x4] sm:$0xf]
      %v1906 = vunpack.c.l.b16 %v1877
      %v1907 = vunpack.c.l.b16 %v1878
      %v1908 = vunpack.c.l.b16 %v1879
      %v1909 = vunpack.c.l.b16 %v1880
      %v1910 = vunpack.c.l.b16 %v1881
      %v1911 = vunpack.c.l.b16 %v1882
      %v1912 = vunpack.c.l.b16 %v1883
      %v1913 = vunpack.c.l.b16 %v1884
      %v1914 = vunpack.c.l.b16 %v1885
      %v1915 = vunpack.c.l.b16 %v1886
      %v1916 = vunpack.c.l.b16 %v1887
      %v1917 = vunpack.c.l.b16 %v1888
      %v1918 = vunpack.c.l.b16 %v1889
      %v1919 = vpack.c.b16 %v1907, %v1906
      %v1920 = vpack.c.b16 %v1909, %v1908
      %v1921 = vpack.c.b16 %v1911, %v1910
      %v1922 = vpack.c.b16 %v1913, %v1912
      %v1923 = vpack.c.b16 %v1915, %v1914
      %v1924 = vpack.c.b16 %v1917, %v1916
      %v1925 = vpack.c.b16 %v1918, %v1918
      %v1926 = vrot.slane %v1919, 1
      %v1927 = vrot.slane %v1920, 1
      %v1928 = vsel %vm975, %v1926, %v1927
      %v1929 = vrot.slane %v1921, 1
      %v1930 = vsel %vm975, %v1927, %v1929
      %v1931 = vrot.slane %v1922, 1
      %v1932 = vsel %vm975, %v1929, %v1931
      %v1933 = vrot.slane %v1923, 1
      %v1934 = vsel %vm975, %v1931, %v1933
      %v1935 = vrot.slane %v1924, 1
      %v1936 = vsel %vm975, %v1933, %v1935
      %v1937 = vrot.slane %v1925, 1
      %v1938 = vsel %vm975, %v1935, %v1937
      %v1941 = vunpack.c.l.b16 %v1891
      %v1942 = vunpack.c.l.b16 %v1892
      %v1943 = vpack.c.b16 %v1942, %v1941
      %v1946 = vsel %vm305, %v1928, 0
      %v1949 = vsel %vm305, %v1930, 0
      %v1952 = vsel %vm305, %v1932, 0
      %v1955 = vsel %vm305, %v1934, 0
      %v1958 = vsel %vm305, %v1936, 0
      %v1961 = vsel %vm305, %v1938, 0
      %1963 = vmatprep.subr.bf16.mxu0 0
      %1964 = vmatpush1.bf16.msra.mxu0 %v1943
      %1965 = vmatprep.subr.bf16.mxu0 0
      %1966 = vmatpush1.bf16.msra.mxu0 0
      %1967 = vmatprep.subr.bf16.mxu0 0
      %1968 = vmatpush1.bf16.msra.mxu0 0
      %1969 = vmatprep.subr.bf16.mxu0 0
      %1970 = vmatpush1.bf16.msra.mxu0 0
      %1971 = vmatprep.subr.bf16.mxu0 0
      %1972 = vmatpush1.bf16.msra.mxu0 0
      %1973 = vmatprep.subr.bf16.mxu0 0
      %1974 = vmatpush1.bf16.msra.mxu0 0
      %1975 = vmatprep.subr.bf16.mxu0 0
      %1976 = vmatpush1.bf16.msra.mxu0 0
      %1977 = vmatprep.subr.bf16.mxu0 0
      %1978 = vmatpush1.bf16.msra.mxu0 0
      %1979 = vmatprep.subr.bf16.mxu0 0
      %1980 = vmatpush1.bf16.msra.mxu0 0
      %1981 = vmatprep.subr.bf16.mxu0 0
      %1982 = vmatpush1.bf16.msra.mxu0 0
      %1983 = vmatprep.subr.bf16.mxu0 0
      %1984 = vmatpush1.bf16.msra.mxu0 0
      %1985 = vmatprep.subr.bf16.mxu0 0
      %1986 = vmatpush1.bf16.msra.mxu0 0
      %1987 = vmatprep.subr.bf16.mxu0 0
      %1988 = vmatpush1.bf16.msra.mxu0 0
      %1989 = vmatprep.subr.bf16.mxu0 0
      %1990 = vmatpush1.bf16.msra.mxu0 0
      %1991 = vmatprep.subr.bf16.mxu0 0
      %1992 = vmatpush1.bf16.msra.mxu0 0
      %1993 = vmatprep.subr.bf16.mxu0 0
      %1994 = vmatpush1.bf16.msra.mxu0 0
      %1995 = vmatprep.mubr.bf16.mxu0 0
      %1996 = vmatmul.mubr.bf16.gmra.mrb[0].mxu0 %v1946
      %v1997 = vpop.f32.mrb[0].mxu0
      %v1998 = vadd.f32 0.0, %v1997
      %v1999 = vpop.f32.mrb[0].mxu0
      %v2000 = vpop.f32.mrb[0].mxu0
      %v2001 = vadd.f32 0.0, %v2000
      %v2002 = vpop.f32.mrb[0].mxu0
      %2003 = vmatprep.mubr.bf16.mxu0 0
      %2004 = vmatmul.mubr.bf16.gmra.mrb[0].mxu0 %v1949
      %v2005 = vpop.f32.mrb[0].mxu0
      %v2006 = vadd.f32 0.0, %v2005
      %v2007 = vpop.f32.mrb[0].mxu0
      %v2008 = vpop.f32.mrb[0].mxu0
      %v2009 = vadd.f32 0.0, %v2008
      %v2010 = vpop.f32.mrb[0].mxu0
      %2011 = vmatprep.mubr.bf16.mxu0 0
      %2012 = vmatmul.mubr.bf16.gmra.mrb[0].mxu0 %v1952
      %v2013 = vpop.f32.mrb[0].mxu0
      %v2014 = vadd.f32 0.0, %v2013
      %v2015 = vpop.f32.mrb[0].mxu0
      %v2016 = vpop.f32.mrb[0].mxu0
      %v2017 = vadd.f32 0.0, %v2016
      %v2018 = vpop.f32.mrb[0].mxu0
      %2019 = vmatprep.mubr.bf16.mxu0 0
      %2020 = vmatmul.mubr.bf16.gmra.mrb[0].mxu0 %v1955
      %v2021 = vpop.f32.mrb[0].mxu0
      %v2022 = vadd.f32 0.0, %v2021
      %v2023 = vpop.f32.mrb[0].mxu0
      %v2024 = vpop.f32.mrb[0].mxu0
      %v2025 = vadd.f32 0.0, %v2024
      %v2026 = vpop.f32.mrb[0].mxu0
      %2027 = vmatprep.mubr.bf16.mxu0 0
      %2028 = vmatmul.mubr.bf16.gmra.mrb[0].mxu0 %v1958
      %v2029 = vpop.f32.mrb[0].mxu0
      %v2030 = vadd.f32 0.0, %v2029
      %v2031 = vpop.f32.mrb[0].mxu0
      %v2032 = vpop.f32.mrb[0].mxu0
      %v2033 = vadd.f32 0.0, %v2032
      %v2034 = vpop.f32.mrb[0].mxu0
      %2035 = vmatprep.mubr.bf16.mxu0 0
      %2036 = vmatmul.mubr.bf16.gmra.mrb[0].mxu0 %v1961
      %v2037 = vpop.f32.mrb[0].mxu0
      %v2038 = vadd.f32 0.0, %v2037
      %v2039 = vpop.f32.mrb[0].mxu0
      %v2040 = vpop.f32.mrb[0].mxu0
      %v2041 = vadd.f32 0.0, %v2040
      %v2042 = vpop.f32.mrb[0].mxu0
      %2043 = vdwg.mxu0
      %v2044 = vadd.f32 %v1865, %v1998
      %v2045 = vadd.f32 %v1866, %v2001
      %v2046 = vadd.f32 %v1867, %v2006
      %v2047 = vadd.f32 %v1868, %v2009
      %v2048 = vadd.f32 %v1869, %v2014
      %v2049 = vadd.f32 %v1870, %v2017
      %v2050 = vadd.f32 %v1871, %v2022
      %v2051 = vadd.f32 %v1872, %v2025
      %v2052 = vadd.f32 %v1873, %v2030
      %v2053 = vadd.f32 %v1874, %v2033
      %v2054 = vadd.f32 %v1875, %v2038
      %v2055 = vadd.f32 %v1876, %v2041
      %2056 = vst [vmem:[#allocation2] sm:$0xff] %v2044
      %2057 = vst [vmem:[#allocation2 + $0x8] sm:$0xff] %v2045
      %2058 = vst [vmem:[#allocation2 + $0x10] sm:$0xff] %v2046
      %2059 = vst [vmem:[#allocation2 + $0x18] sm:$0xff] %v2047
      %2060 = vst [vmem:[#allocation2 + $0x20] sm:$0xff] %v2048
      %2061 = vst [vmem:[#allocation2 + $0x28] sm:$0xff] %v2049
      %2062 = vst [vmem:[#allocation2 + $0x30] sm:$0xff] %v2050
      %2063 = vst [vmem:[#allocation2 + $0x38] sm:$0xff] %v2051
      %2064 = vst [vmem:[#allocation2 + $0x40] sm:$0xff] %v2052
      %2065 = vst [vmem:[#allocation2 + $0x48] sm:$0xff] %v2053
      %2066 = vst [vmem:[#allocation2 + $0x50] sm:$0xff] %v2054
      %2067 = vst [vmem:[#allocation2 + $0x58] sm:$0xff] %v2055
      %v2068 = vld [vmem:[#allocation2] sm:$0xff]
      %v2069 = vld [vmem:[#allocation2 + $0x8] sm:$0xff]
      %v2070 = vld [vmem:[#allocation2 + $0x10] sm:$0xff]
      %v2071 = vld [vmem:[#allocation2 + $0x18] sm:$0xff]
      %v2072 = vld [vmem:[#allocation2 + $0x20] sm:$0xff]
      %v2073 = vld [vmem:[#allocation2 + $0x28] sm:$0xff]
      %v2074 = vld [vmem:[#allocation2 + $0x30] sm:$0xff]
      %v2075 = vld [vmem:[#allocation2 + $0x38] sm:$0xff]
      %v2076 = vld [vmem:[#allocation2 + $0x40] sm:$0xff]
      %v2077 = vld [vmem:[#allocation2 + $0x48] sm:$0xff]
      %v2078 = vld [vmem:[#allocation2 + $0x50] sm:$0xff]
      %v2079 = vld [vmem:[#allocation2 + $0x58] sm:$0xff]
      %v2080 = vld [vmem:[%s206 + $0x4] sm:$0xe]
      %v2081 = vld [vmem:[%s206 + $0x8] sm:$0xf]
      %v2082 = vld [vmem:[%s206 + $0xc] sm:$0xf]
      %v2083 = vld [vmem:[%s206 + $0x10] sm:$0xf]
      %v2084 = vld [vmem:[%s206 + $0x14] sm:$0xf]
      %v2085 = vld [vmem:[%s206 + $0x18] sm:$0xf]
      %v2086 = vld [vmem:[%s206 + $0x1c] sm:$0xf]
      %v2087 = vld [vmem:[%s206 + $0x20] sm:$0xf]
      %v2088 = vld [vmem:[%s206 + $0x24] sm:$0xf]
      %v2089 = vld [vmem:[%s206 + $0x28] sm:$0xf]
      %v2090 = vld [vmem:[%s206 + $0x2c] sm:$0xf]
      %v2091 = vld [vmem:[%s206 + $0x30] sm:$0xf]
      %v2092 = vld [vmem:[%s206 + $0x34] sm:$0x1]
      %s2093 = scalar_lea.vmem %s210, 64
      %v2094 = vld [vmem:[%s2093] sm:$0xf]
      %v2095 = vld [vmem:[%s2093 + $0x4] sm:$0xf]
      %v2109 = vunpack.c.l.b16 %v2080
      %v2110 = vunpack.c.l.b16 %v2081
      %v2111 = vunpack.c.l.b16 %v2082
      %v2112 = vunpack.c.l.b16 %v2083
      %v2113 = vunpack.c.l.b16 %v2084
      %v2114 = vunpack.c.l.b16 %v2085
      %v2115 = vunpack.c.l.b16 %v2086
      %v2116 = vunpack.c.l.b16 %v2087
      %v2117 = vunpack.c.l.b16 %v2088
      %v2118 = vunpack.c.l.b16 %v2089
      %v2119 = vunpack.c.l.b16 %v2090
      %v2120 = vunpack.c.l.b16 %v2091
      %v2121 = vunpack.c.l.b16 %v2092
      %v2122 = vpack.c.b16 %v2110, %v2109
      %v2123 = vpack.c.b16 %v2112, %v2111
      %v2124 = vpack.c.b16 %v2114, %v2113
      %v2125 = vpack.c.b16 %v2116, %v2115
      %v2126 = vpack.c.b16 %v2118, %v2117
      %v2127 = vpack.c.b16 %v2120, %v2119
      %v2128 = vpack.c.b16 %v2121, %v2121
      %v2129 = vrot.slane %v2122, 1
      %v2130 = vrot.slane %v2123, 1
      %v2131 = vsel %vm975, %v2129, %v2130
      %v2132 = vrot.slane %v2124, 1
      %v2133 = vsel %vm975, %v2130, %v2132
      %v2134 = vrot.slane %v2125, 1
      %v2135 = vsel %vm975, %v2132, %v2134
      %v2136 = vrot.slane %v2126, 1
      %v2137 = vsel %vm975, %v2134, %v2136
      %v2138 = vrot.slane %v2127, 1
      %v2139 = vsel %vm975, %v2136, %v2138
      %v2140 = vrot.slane %v2128, 1
      %v2141 = vsel %vm975, %v2138, %v2140
      %v2144 = vunpack.c.l.b16 %v2094
      %v2145 = vunpack.c.l.b16 %v2095
      %v2146 = vpack.c.b16 %v2145, %v2144
      %v2149 = vsel %vm305, %v2131, 0
      %v2152 = vsel %vm305, %v2133, 0
      %v2155 = vsel %vm305, %v2135, 0
      %v2158 = vsel %vm305, %v2137, 0
      %v2161 = vsel %vm305, %v2139, 0
      %v2164 = vsel %vm305, %v2141, 0
      %2166 = vmatprep.subr.bf16.mxu0 0
      %2167 = vmatpush1.bf16.msra.mxu0 %v2146
      %2168 = vmatprep.subr.bf16.mxu0 0
      %2169 = vmatpush1.bf16.msra.mxu0 0
      %2170 = vmatprep.subr.bf16.mxu0 0
      %2171 = vmatpush1.bf16.msra.mxu0 0
      %2172 = vmatprep.subr.bf16.mxu0 0
      %2173 = vmatpush1.bf16.msra.mxu0 0
      %2174 = vmatprep.subr.bf16.mxu0 0
      %2175 = vmatpush1.bf16.msra.mxu0 0
      %2176 = vmatprep.subr.bf16.mxu0 0
      %2177 = vmatpush1.bf16.msra.mxu0 0
      %2178 = vmatprep.subr.bf16.mxu0 0
      %2179 = vmatpush1.bf16.msra.mxu0 0
      %2180 = vmatprep.subr.bf16.mxu0 0
      %2181 = vmatpush1.bf16.msra.mxu0 0
      %2182 = vmatprep.subr.bf16.mxu0 0
      %2183 = vmatpush1.bf16.msra.mxu0 0
      %2184 = vmatprep.subr.bf16.mxu0 0
      %2185 = vmatpush1.bf16.msra.mxu0 0
      %2186 = vmatprep.subr.bf16.mxu0 0
      %2187 = vmatpush1.bf16.msra.mxu0 0
      %2188 = vmatprep.subr.bf16.mxu0 0
      %2189 = vmatpush1.bf16.msra.mxu0 0
      %2190 = vmatprep.subr.bf16.mxu0 0
      %2191 = vmatpush1.bf16.msra.mxu0 0
      %2192 = vmatprep.subr.bf16.mxu0 0
      %2193 = vmatpush1.bf16.msra.mxu0 0
      %2194 = vmatprep.subr.bf16.mxu0 0
      %2195 = vmatpush1.bf16.msra.mxu0 0
      %2196 = vmatprep.subr.bf16.mxu0 0
      %2197 = vmatpush1.bf16.msra.mxu0 0
      %2198 = vmatprep.mubr.bf16.mxu0 0
      %2199 = vmatmul.mubr.bf16.gmra.mrb[0].mxu0 %v2149
      %v2200 = vpop.f32.mrb[0].mxu0
      %v2201 = vadd.f32 0.0, %v2200
      %v2202 = vpop.f32.mrb[0].mxu0
      %v2203 = vpop.f32.mrb[0].mxu0
      %v2204 = vadd.f32 0.0, %v2203
      %v2205 = vpop.f32.mrb[0].mxu0
      %2206 = vmatprep.mubr.bf16.mxu0 0
      %2207 = vmatmul.mubr.bf16.gmra.mrb[0].mxu0 %v2152
      %v2208 = vpop.f32.mrb[0].mxu0
      %v2209 = vadd.f32 0.0, %v2208
      %v2210 = vpop.f32.mrb[0].mxu0
      %v2211 = vpop.f32.mrb[0].mxu0
      %v2212 = vadd.f32 0.0, %v2211
      %v2213 = vpop.f32.mrb[0].mxu0
      %2214 = vmatprep.mubr.bf16.mxu0 0
      %2215 = vmatmul.mubr.bf16.gmra.mrb[0].mxu0 %v2155
      %v2216 = vpop.f32.mrb[0].mxu0
      %v2217 = vadd.f32 0.0, %v2216
      %v2218 = vpop.f32.mrb[0].mxu0
      %v2219 = vpop.f32.mrb[0].mxu0
      %v2220 = vadd.f32 0.0, %v2219
      %v2221 = vpop.f32.mrb[0].mxu0
      %2222 = vmatprep.mubr.bf16.mxu0 0
      %2223 = vmatmul.mubr.bf16.gmra.mrb[0].mxu0 %v2158
      %v2224 = vpop.f32.mrb[0].mxu0
      %v2225 = vadd.f32 0.0, %v2224
      %v2226 = vpop.f32.mrb[0].mxu0
      %v2227 = vpop.f32.mrb[0].mxu0
      %v2228 = vadd.f32 0.0, %v2227
      %v2229 = vpop.f32.mrb[0].mxu0
      %2230 = vmatprep.mubr.bf16.mxu0 0
      %2231 = vmatmul.mubr.bf16.gmra.mrb[0].mxu0 %v2161
      %v2232 = vpop.f32.mrb[0].mxu0
      %v2233 = vadd.f32 0.0, %v2232
      %v2234 = vpop.f32.mrb[0].mxu0
      %v2235 = vpop.f32.mrb[0].mxu0
      %v2236 = vadd.f32 0.0, %v2235
      %v2237 = vpop.f32.mrb[0].mxu0
      %2238 = vmatprep.mubr.bf16.mxu0 0
      %2239 = vmatmul.mubr.bf16.gmra.mrb[0].mxu0 %v2164
      %v2240 = vpop.f32.mrb[0].mxu0
      %v2241 = vadd.f32 0.0, %v2240
      %v2242 = vpop.f32.mrb[0].mxu0
      %v2243 = vpop.f32.mrb[0].mxu0
      %v2244 = vadd.f32 0.0, %v2243
      %v2245 = vpop.f32.mrb[0].mxu0
      %2246 = vdwg.mxu0
      %v2247 = vadd.f32 %v2068, %v2201
      %v2248 = vadd.f32 %v2069, %v2204
      %v2249 = vadd.f32 %v2070, %v2209
      %v2250 = vadd.f32 %v2071, %v2212
      %v2251 = vadd.f32 %v2072, %v2217
      %v2252 = vadd.f32 %v2073, %v2220
      %v2253 = vadd.f32 %v2074, %v2225
      %v2254 = vadd.f32 %v2075, %v2228
      %v2255 = vadd.f32 %v2076, %v2233
      %v2256 = vadd.f32 %v2077, %v2236
      %v2257 = vadd.f32 %v2078, %v2241
      %v2258 = vadd.f32 %v2079, %v2244
      %2259 = vst [vmem:[#allocation2] sm:$0xff] %v2247
      %2260 = vst [vmem:[#allocation2 + $0x8] sm:$0xff] %v2248
      %2261 = vst [vmem:[#allocation2 + $0x10] sm:$0xff] %v2249
      %2262 = vst [vmem:[#allocation2 + $0x18] sm:$0xff] %v2250
      %2263 = vst [vmem:[#allocation2 + $0x20] sm:$0xff] %v2251
      %2264 = vst [vmem:[#allocation2 + $0x28] sm:$0xff] %v2252
      %2265 = vst [vmem:[#allocation2 + $0x30] sm:$0xff] %v2253
      %2266 = vst [vmem:[#allocation2 + $0x38] sm:$0xff] %v2254
      %2267 = vst [vmem:[#allocation2 + $0x40] sm:$0xff] %v2255
      %2268 = vst [vmem:[#allocation2 + $0x48] sm:$0xff] %v2256
      %2269 = vst [vmem:[#allocation2 + $0x50] sm:$0xff] %v2257
      %2270 = vst [vmem:[#allocation2 + $0x58] sm:$0xff] %v2258
      %v2271 = vld [vmem:[#allocation2] sm:$0xff]
      %v2272 = vld [vmem:[#allocation2 + $0x8] sm:$0xff]
      %v2273 = vld [vmem:[#allocation2 + $0x10] sm:$0xff]
      %v2274 = vld [vmem:[#allocation2 + $0x18] sm:$0xff]
      %v2275 = vld [vmem:[#allocation2 + $0x20] sm:$0xff]
      %v2276 = vld [vmem:[#allocation2 + $0x28] sm:$0xff]
      %v2277 = vld [vmem:[#allocation2 + $0x30] sm:$0xff]
      %v2278 = vld [vmem:[#allocation2 + $0x38] sm:$0xff]
      %v2279 = vld [vmem:[#allocation2 + $0x40] sm:$0xff]
      %v2280 = vld [vmem:[#allocation2 + $0x48] sm:$0xff]
      %v2281 = vld [vmem:[#allocation2 + $0x50] sm:$0xff]
      %v2282 = vld [vmem:[#allocation2 + $0x58] sm:$0xff]
      %v2283 = vmax.f32 %v2271, 0.0
      %v2284 = vmax.f32 %v2272, 0.0
      %v2285 = vmax.f32 %v2273, 0.0
      %v2286 = vmax.f32 %v2274, 0.0
      %v2287 = vmax.f32 %v2275, 0.0
      %v2288 = vmax.f32 %v2276, 0.0
      %v2289 = vmax.f32 %v2277, 0.0
      %v2290 = vmax.f32 %v2278, 0.0
      %v2291 = vmax.f32 %v2279, 0.0
      %v2292 = vmax.f32 %v2280, 0.0
      %v2293 = vmax.f32 %v2281, 0.0
      %v2294 = vmax.f32 %v2282, 0.0
      %v2295 = vpack.c.bf16 %v2284, %v2283
      %v2296 = vpack.c.bf16 %v2286, %v2285
      %v2297 = vpack.c.bf16 %v2288, %v2287
      %v2298 = vpack.c.bf16 %v2290, %v2289
      %v2299 = vpack.c.bf16 %v2292, %v2291
      %v2300 = vpack.c.bf16 %v2294, %v2293
      %v2307 = vunpack.c.l.b16 %v2295
      %v2308 = vunpack.c.h.b16 %v2295
      %v2309 = vunpack.c.l.b16 %v2296
      %v2310 = vunpack.c.h.b16 %v2296
      %v2311 = vunpack.c.l.b16 %v2297
      %v2312 = vunpack.c.h.b16 %v2297
      %v2313 = vunpack.c.l.b16 %v2298
      %v2314 = vunpack.c.h.b16 %v2298
      %v2315 = vunpack.c.l.b16 %v2299
      %v2316 = vunpack.c.h.b16 %v2299
      %v2317 = vunpack.c.l.b16 %v2300
      %v2318 = vunpack.c.h.b16 %v2300
      %v2319 = vpack.c.b16 %v2307, %v2307
      %v2320 = vpack.c.b16 %v2308, %v2308
      %v2321 = vpack.c.b16 %v2309, %v2309
      %v2322 = vpack.c.b16 %v2310, %v2310
      %v2323 = vpack.c.b16 %v2311, %v2311
      %v2324 = vpack.c.b16 %v2312, %v2312
      %v2325 = vpack.c.b16 %v2313, %v2313
      %v2326 = vpack.c.b16 %v2314, %v2314
      %v2327 = vpack.c.b16 %v2315, %v2315
      %v2328 = vpack.c.b16 %v2316, %v2316
      %v2329 = vpack.c.b16 %v2317, %v2317
      %v2330 = vpack.c.b16 %v2318, %v2318
      %2343 = vst [vmem:[%s221] sm:$0xf] %v2319
      %2344 = vst [vmem:[%s221 + $0x4] sm:$0xf] %v2320
      %2345 = vst [vmem:[%s221 + $0x8] sm:$0xf] %v2321
      %2346 = vst [vmem:[%s221 + $0xc] sm:$0xf] %v2322
      %2347 = vst [vmem:[%s221 + $0x10] sm:$0xf] %v2323
      %2348 = vst [vmem:[%s221 + $0x14] sm:$0xf] %v2324
      %2349 = vst [vmem:[%s221 + $0x18] sm:$0xf] %v2325
      %2350 = vst [vmem:[%s221 + $0x1c] sm:$0xf] %v2326
      %2351 = vst [vmem:[%s221 + $0x20] sm:$0xf] %v2327
      %2352 = vst [vmem:[%s221 + $0x24] sm:$0xf] %v2328
      %2353 = vst [vmem:[%s221 + $0x28] sm:$0xf] %v2329
      %2354 = vst [vmem:[%s221 + $0x2c] sm:$0xf] %v2330
      %p2355 = scmp.lt.s32.totalorder %s19, 1
      %s2356 = scalar_select %p2355, %s19, 1
      %p2357 = scmp.lt.s32.totalorder %s18, 0
      %s2358 = scalar_select %p2357, %s18, 0
      %s2359 = smul.addr %s2356, 12
      %s2360 = sadd.s32 %s2358, %s2359
      %s2361 = smul.addr %s2360, 4
      %s2362 = scalar_lea.vmem %s3, %s2361
      // Predicated region
      $region33: #{basic_block_forward.2} parent=31 // pred_check
        %p2363 = pneg %p124
      $region34: #{basic_block_forward.2} parent=31 // pred_check_branch
        %2365 = sbr.rel (%p2363) target = $region36
      $region35: #{basic_block_forward.2} parent=31 // pred_region
        _
      $region36: #{basic_block_forward.2} parent=31 // pred_fallthru
        _
    $region32: #{basic_block_forward.2} parent=5 // pred_fallthru
      _
    %p2366 = scmp.le.s32.totalorder 2, %s9
    // Predicated region
    $region37: #{basic_block_forward.2} parent=5 // pred_check
      %p2367 = pneg %p2366
    $region38: #{basic_block_forward.2} parent=5 // pred_check_branch
      %2369 = sbr.rel (%p2367) target = $region40
    $region39: #{basic_block_forward.2} parent=5 // pred_region
      %s2370 = ssub.s32 %s9, 2
      // Predicated region
      $region41: #{basic_block_forward.2} parent=39 // pred_check
        %p2371 = pneg %p130
      $region42: #{basic_block_forward.2} parent=39 // pred_check_branch
        %2373 = sbr.rel (%p2371) target = $region44
      $region43: #{basic_block_forward.2} parent=39 // pred_region
        %p2374 = scmp.lt.s32.totalorder %s21, 1
        %s2375 = scalar_select %p2374, %s21, 1
        %p2376 = scmp.lt.s32.totalorder %s20, 0
        %s2377 = scalar_select %p2376, %s20, 0
        %s2378 = smul.addr %s2375, 12
        %s2379 = sadd.s32 %s2377, %s2378
        %s2380 = smul.addr %s2379, 4
        %s2381 = scalar_lea.vmem %s3, %s2380
      $region44: #{basic_block_forward.2} parent=39 // pred_fallthru
        _
    $region40: #{basic_block_forward.2} parent=5 // pred_fallthru
      _
  $region6: #{basic_block_forward.2} parent=0 // loop_footer
    %s13 = sadd.s32 1, %s9
  $region7: #{basic_block_forward.2} parent=0 // loop_footer_branch
    %8 = sbr.rel target = $region3
  $region8: #{basic_block_forward.2} parent=0 // loop_exit
    _

// kernel: basic_block_forward.3
$region0: #{basic_block_forward.3}
  #allocation0 [shape = 'u32[]', space=smem, size = 0x4, offset = 0x4, fixed_abs, tag = 'smem constant byte address 0x4 - core index']
  #allocation1 [shape = 'u32[144,128]{1,0:T(1,128)}', space=vmem, size = 0x12000, scoped, tag = 'internal scratch']
  #allocation2 [shape = 'f32[112,128]{1,0:T(8,128)}', space=vmem, size = 0xe000, scoped, tag = 'scratch operand']
  %s0 = inlined_call_operand.vmem [shape: bf16[2,144,128], index: 0, kind: input, shape index: {}]
  %s1 = inlined_call_operand.vmem [shape: bf16[9,128,128], index: 1, kind: input, shape index: {}]
  %s2 = inlined_call_operand.vmem [shape: f32[1,128], index: 2, kind: input, shape index: {}]
  %s3 = inlined_call_operand.vmem [shape: bf16[2,112,16], index: 3, kind: input, shape index: {}]
  %s4 = inlined_call_operand.vmem [shape: bf16[16,128], index: 4, kind: input, shape index: {}]
  %s5 = inlined_call_operand.vmem [shape: f32[2,112,128], index: 5, kind: output, shape index: {}]
  %s6 = sld [smem:[#allocation0]]
  $region53: #{basic_block_forward.3} parent=0
    _
  %s8 = ssub.s32 1, %s6
  %s9 = scalar_select 0, %s8, %s6
  loop: start=0, step=1, limit=4
  $region2: #{basic_block_forward.3} parent=0 // loop_pre_header
    _
  $region3: #{basic_block_forward.3} parent=0 // loop_header
    %s11 = sphi 0, %s15
    %p12 = scmp.ge.s32.totalorder %s11, 4
    %s18 = sphi 0, %s30
    %s19 = sphi 0, %s26
    %s20 = sphi 0, %s18
    %s21 = sphi 0, %s19
    %s22 = sphi 0, %s20
    %s23 = sphi 0, %s21
    %s33 = sphi 0, %s35
    %s36 = sphi 0, %s33
    %s37 = sphi 0, %s36
    %s53 = sphi 0, %s37
    %s59 = sphi 0, %s61
    %s62 = sphi 0, %s59
    %s63 = sphi 0, %s62
    %s79 = sphi 0, %s63
    %s85 = sphi 0, %s87
    %s88 = sphi 0, %s85
    %s89 = sphi 0, %s88
    %s105 = sphi 0, %s89
    %s111 = sphi 0, %s113
    %s114 = sphi 0, %s111
    %s115 = sphi 0, %s114
    %s131 = sphi 0, %s115
    %s137 = sphi 0, %s139
    %s140 = sphi 0, %s137
    %s141 = sphi 0, %s140
    %s157 = sphi 0, %s141
    %s165 = sphi 0, %s167
    %s168 = sphi 0, %s165
    %s169 = sphi 0, %s168
    %s185 = sphi 0, %s169
  $region4: #{basic_block_forward.3} parent=0 // loop_header_branch
    %14 = sbr.rel (%p12) target = $region8
  $region5: #{basic_block_forward.3} parent=0 // loop_body
    %s16 = ssub.s32 %s11, 1
    %s17 = ssub.s32 %s11, 2
    %s24 = sadd.s32 1, %s19
    %p25 = scmp.ge.s32.totalorder %s24, 2
    %s26 = scalar_select %p25, 0, %s24
    %s27 = sadd.s32 1, %s18
    %s28 = scalar_select %p25, %s27, %s18
    %p29 = scmp.ge.s32.totalorder %s28, 1
    %s30 = scalar_select %p29, 0, %s28
    %s31 = ssub.s32 %s19, %s26
    %p32 = scmp.eq.s32.totalorder %s31, 0
    %s34 = sadd.s32 %s33, 1
    %s35 = scalar_select %p32, %s33, %s34
    %p38 = pneg %p32
    %p39 = scmp.eq.s32.totalorder %s11, 1
    %p40 = por %p38, %p39
    %p41 = scmp.ne.s32.totalorder %s33, %s36
    %p42 = scmp.eq.s32.totalorder %s11, 0
    %p43 = por %p41, %p42
    %p44 = scmp.ne.s32.totalorder %s33, %s36
    %p45 = scmp.eq.s32.totalorder %s16, 1
    %p46 = por %p44, %p45
    %p47 = scmp.ne.s32.totalorder %s36, %s37
    %p48 = scmp.eq.s32.totalorder %s16, 0
    %p49 = por %p47, %p48
    %p50 = scmp.ne.s32.totalorder %s36, %s37
    %p51 = scmp.eq.s32.totalorder %s17, 1
    %p52 = por %p50, %p51
    %p54 = scmp.ne.s32.totalorder %s37, %s53
    %p55 = scmp.eq.s32.totalorder %s17, 0
    %p56 = por %p54, %p55
    %s57 = ssub.s32 %s18, %s30
    %p58 = scmp.eq.s32.totalorder %s57, 0
    %s60 = sadd.s32 %s59, 1
    %s61 = scalar_select %p58, %s59, %s60
    %p64 = pneg %p58
    %p65 = scmp.eq.s32.totalorder %s11, 1
    %p66 = por %p64, %p65
    %p67 = scmp.ne.s32.totalorder %s59, %s62
    %p68 = scmp.eq.s32.totalorder %s11, 0
    %p69 = por %p67, %p68
    %p70 = scmp.ne.s32.totalorder %s59, %s62
    %p71 = scmp.eq.s32.totalorder %s16, 1
    %p72 = por %p70, %p71
    %p73 = scmp.ne.s32.totalorder %s62, %s63
    %p74 = scmp.eq.s32.totalorder %s16, 0
    %p75 = por %p73, %p74
    %p76 = scmp.ne.s32.totalorder %s62, %s63
    %p77 = scmp.eq.s32.totalorder %s17, 1
    %p78 = por %p76, %p77
    %p80 = scmp.ne.s32.totalorder %s63, %s79
    %p81 = scmp.eq.s32.totalorder %s17, 0
    %p82 = por %p80, %p81
    %s83 = ssub.s32 %s18, %s30
    %p84 = scmp.eq.s32.totalorder %s83, 0
    %s86 = sadd.s32 %s85, 1
    %s87 = scalar_select %p84, %s85, %s86
    %p90 = pneg %p84
    %p91 = scmp.eq.s32.totalorder %s11, 1
    %p92 = por %p90, %p91
    %p93 = scmp.ne.s32.totalorder %s85, %s88
    %p94 = scmp.eq.s32.totalorder %s11, 0
    %p95 = por %p93, %p94
    %p96 = scmp.ne.s32.totalorder %s85, %s88
    %p97 = scmp.eq.s32.totalorder %s16, 1
    %p98 = por %p96, %p97
    %p99 = scmp.ne.s32.totalorder %s88, %s89
    %p100 = scmp.eq.s32.totalorder %s16, 0
    %p101 = por %p99, %p100
    %p102 = scmp.ne.s32.totalorder %s88, %s89
    %p103 = scmp.eq.s32.totalorder %s17, 1
    %p104 = por %p102, %p103
    %p106 = scmp.ne.s32.totalorder %s89, %s105
    %p107 = scmp.eq.s32.totalorder %s17, 0
    %p108 = por %p106, %p107
    %s109 = ssub.s32 %s19, %s26
    %p110 = scmp.eq.s32.totalorder %s109, 0
    %s112 = sadd.s32 %s111, 1
    %s113 = scalar_select %p110, %s111, %s112
    %p116 = pneg %p110
    %p117 = scmp.eq.s32.totalorder %s11, 1
    %p118 = por %p116, %p117
    %p119 = scmp.ne.s32.totalorder %s111, %s114
    %p120 = scmp.eq.s32.totalorder %s11, 0
    %p121 = por %p119, %p120
    %p122 = scmp.ne.s32.totalorder %s111, %s114
    %p123 = scmp.eq.s32.totalorder %s16, 1
    %p124 = por %p122, %p123
    %p125 = scmp.ne.s32.totalorder %s114, %s115
    %p126 = scmp.eq.s32.totalorder %s16, 0
    %p127 = por %p125, %p126
    %p128 = scmp.ne.s32.totalorder %s114, %s115
    %p129 = scmp.eq.s32.totalorder %s17, 1
    %p130 = por %p128, %p129
    %p132 = scmp.ne.s32.totalorder %s115, %s131
    %p133 = scmp.eq.s32.totalorder %s17, 0
    %p134 = por %p132, %p133
    %s135 = ssub.s32 %s18, %s30
    %p136 = scmp.eq.s32.totalorder %s135, 0
    %s138 = sadd.s32 %s137, 1
    %s139 = scalar_select %p136, %s137, %s138
    %p142 = pneg %p136
    %p143 = scmp.eq.s32.totalorder %s11, 1
    %p144 = por %p142, %p143
    %p145 = scmp.ne.s32.totalorder %s137, %s140
    %p146 = scmp.eq.s32.totalorder %s11, 0
    %p147 = por %p145, %p146
    %p148 = scmp.ne.s32.totalorder %s137, %s140
    %p149 = scmp.eq.s32.totalorder %s16, 1
    %p150 = por %p148, %p149
    %p151 = scmp.ne.s32.totalorder %s140, %s141
    %p152 = scmp.eq.s32.totalorder %s16, 0
    %p153 = por %p151, %p152
    %p154 = scmp.ne.s32.totalorder %s140, %s141
    %p155 = scmp.eq.s32.totalorder %s17, 1
    %p156 = por %p154, %p155
    %p158 = scmp.ne.s32.totalorder %s141, %s157
    %p159 = scmp.eq.s32.totalorder %s17, 0
    %p160 = por %p158, %p159
    %s161 = ssub.s32 %s19, %s26
    %s162 = ssub.s32 %s18, %s30
    %s163 = sor.u32 %s161, %s162
    %p164 = scmp.eq.s32.totalorder %s163, 0
    %s166 = sadd.s32 %s165, 1
    %s167 = scalar_select %p164, %s165, %s166
    %p170 = pneg %p164
    %p171 = scmp.eq.s32.totalorder %s11, 1
    %p172 = por %p170, %p171
    %p173 = scmp.ne.s32.totalorder %s165, %s168
    %p174 = scmp.eq.s32.totalorder %s11, 0
    %p175 = por %p173, %p174
    %p176 = scmp.ne.s32.totalorder %s165, %s168
    %p177 = scmp.eq.s32.totalorder %s16, 1
    %p178 = por %p176, %p177
    %p179 = scmp.ne.s32.totalorder %s168, %s169
    %p180 = scmp.eq.s32.totalorder %s16, 0
    %p181 = por %p179, %p180
    %p182 = scmp.ne.s32.totalorder %s168, %s169
    %p183 = scmp.eq.s32.totalorder %s17, 1
    %p184 = por %p182, %p183
    %p186 = scmp.ne.s32.totalorder %s169, %s185
    %p187 = scmp.eq.s32.totalorder %s17, 0
    %p188 = por %p186, %p187
    %p189 = scmp.le.s32.totalorder 1, %s11
    %p190 = scmp.lt.s32.totalorder %s11, 3
    %p191 = pnand %p189, %p190
    %p192 = pneg %p191
    // Predicated region
    $region9: #{basic_block_forward.3} parent=5 // pred_check
      _
    $region10: #{basic_block_forward.3} parent=5 // pred_check_branch
      %194 = sbr.rel (%p191) target = $region12
    $region11: #{basic_block_forward.3} parent=5 // pred_region
      %s195 = ssub.s32 %s11, 1
      // Predicated region
      $region13: #{basic_block_forward.3} parent=11 // pred_check
        %p196 = pneg %p75
      $region14: #{basic_block_forward.3} parent=11 // pred_check_branch
        %198 = sbr.rel (%p196) target = $region16
      $region15: #{basic_block_forward.3} parent=11 // pred_region
        %p199 = scmp.lt.s32.totalorder %s20, 0
        %s200 = scalar_select %p199, %s20, 0
        %s201 = smul.addr %s200, 4
        %s202 = scalar_lea.vmem %s1, %s201
      $region16: #{basic_block_forward.3} parent=11 // pred_fallthru
        _
      // Predicated region
      $region17: #{basic_block_forward.3} parent=11 // pred_check
        %p203 = pneg %p101
      $region18: #{basic_block_forward.3} parent=11 // pred_check_branch
        %205 = sbr.rel (%p203) target = $region20
      $region19: #{basic_block_forward.3} parent=11 // pred_region
        %p206 = scmp.lt.s32.totalorder %s20, 0
        %s207 = scalar_select %p206, %s20, 0
        %s208 = scalar_lea.vmem %s2, %s207
      $region20: #{basic_block_forward.3} parent=11 // pred_fallthru
        _
      // Predicated region
      $region21: #{basic_block_forward.3} parent=11 // pred_check
        %p209 = pneg %p153
      $region22: #{basic_block_forward.3} parent=11 // pred_check_branch
        %211 = sbr.rel (%p209) target = $region24
      $region23: #{basic_block_forward.3} parent=11 // pred_region
        %p212 = scmp.lt.s32.totalorder %s20, 0
        %s213 = scalar_select %p212, %s20, 0
        %s214 = smul.addr %s213, 4
        %s215 = scalar_lea.vmem %s4, %s214
      $region24: #{basic_block_forward.3} parent=11 // pred_fallthru
        _
    $region12: #{basic_block_forward.3} parent=5 // pred_fallthru
      _
    %p216 = scmp.lt.s32.totalorder %s11, 2
    // Predicated region
    $region25: #{basic_block_forward.3} parent=5 // pred_check
      %p217 = pneg %p216
    $region26: #{basic_block_forward.3} parent=5 // pred_check_branch
      %219 = sbr.rel (%p217) target = $region28
    $region27: #{basic_block_forward.3} parent=5 // pred_region
      // Predicated region
      $region29: #{basic_block_forward.3} parent=27 // pred_check
        %p220 = pneg %p43
      $region30: #{basic_block_forward.3} parent=27 // pred_check_branch
        %222 = sbr.rel (%p220) target = $region32
      $region31: #{basic_block_forward.3} parent=27 // pred_region
        %p223 = scmp.lt.s32.totalorder %s19, 1
        %s224 = scalar_select %p223, %s19, 1
        %s225 = smul.addr %s224, 18
        %s226 = smul.addr %s225, 4
        %s227 = scalar_lea.vmem %s0, %s226
      $region32: #{basic_block_forward.3} parent=27 // pred_fallthru
        _
      // Predicated region
      $region33: #{basic_block_forward.3} parent=27 // pred_check
        %p228 = pneg %p121
      $region34: #{basic_block_forward.3} parent=27 // pred_check_branch
        %230 = sbr.rel (%p228) target = $region36
      $region35: #{basic_block_forward.3} parent=27 // pred_region
        %p231 = scmp.lt.s32.totalorder %s19, 1
        %s232 = scalar_select %p231, %s19, 1
        %s233 = smul.addr %s232, 14
        %s234 = smul.addr %s233, 4
        %s235 = scalar_lea.vmem %s3, %s234
      $region36: #{basic_block_forward.3} parent=27 // pred_fallthru
        _
    $region28: #{basic_block_forward.3} parent=5 // pred_fallthru
      _
    %p236 = scmp.le.s32.totalorder 1, %s11
    %p237 = scmp.lt.s32.totalorder %s11, 3
    %p238 = pnand %p236, %p237
    %p239 = pneg %p238
    // Predicated region
    $region37: #{basic_block_forward.3} parent=5 // pred_check
      _
    $region38: #{basic_block_forward.3} parent=5 // pred_check_branch
      %241 = sbr.rel (%p238) target = $region40
    $region39: #{basic_block_forward.3} parent=5 // pred_region
      %s242 = ssub.s32 %s11, 1
      %p243 = scmp.lt.s32.totalorder %s21, 1
      %s244 = scalar_select %p243, %s21, 1
      %s245 = smul.addr %s244, 18
      %s246 = smul.addr %s245, 4
      %s247 = scalar_lea.vmem %s0, %s246
      %p248 = pneg %p49
      %p249 = pneg %p46
      %p250 = scmp.lt.s32.totalorder %s20, 0
      %s251 = scalar_select %p250, %s20, 0
      %s252 = smul.addr %s251, 4
      %s253 = scalar_lea.vmem %s1, %s252
      %p254 = pneg %p75
      %p255 = pneg %p72
      %p256 = scmp.lt.s32.totalorder %s20, 0
      %s257 = scalar_select %p256, %s20, 0
      %s258 = scalar_lea.vmem %s2, %s257
      %p259 = pneg %p101
      %p260 = pneg %p98
      %p261 = scmp.lt.s32.totalorder %s21, 1
      %s262 = scalar_select %p261, %s21, 1
      %s263 = smul.addr %s262, 14
      %s264 = smul.addr %s263, 4
      %s265 = scalar_lea.vmem %s3, %s264
      %p266 = pneg %p127
      %p267 = pneg %p124
      %p268 = scmp.lt.s32.totalorder %s20, 0
      %s269 = scalar_select %p268, %s20, 0
      %s270 = smul.addr %s269, 4
      %s271 = scalar_lea.vmem %s4, %s270
      %p272 = pneg %p153
      %p273 = pneg %p150
      %p274 = pneg %p181
      %p275 = pneg %p178
      %p276 = scmp.lt.s32.totalorder %s21, 1
      %s277 = scalar_select %p276, %s21, 1
      %p278 = scmp.lt.s32.totalorder %s20, 0
      %s279 = scalar_select %p278, %s20, 0
      %s280 = smul.addr %s277, 14
      %s281 = sadd.s32 %s279, %s280
      %s282 = smul.addr %s281, 8
      %s283 = scalar_lea.vmem %s5, %s282
      %p284 = scmp.lt.s32.totalorder %s21, 1
      %s285 = scalar_select %p284, %s21, 1
      %s286 = smul.addr %s285, 18
      %s287 = smul.addr %s286, 4
      %s288 = scalar_lea.vmem %s0, %s287
      %p289 = scmp.lt.s32.totalorder %s20, 0
      %s290 = scalar_select %p289, %s20, 0
      %s291 = smul.addr %s290, 4
      %s292 = scalar_lea.vmem %s1, %s291
      %p293 = scmp.lt.s32.totalorder %s20, 0
      %s294 = scalar_select %p293, %s20, 0
      %s295 = scalar_lea.vmem %s2, %s294
      %p296 = scmp.lt.s32.totalorder %s21, 1
      %s297 = scalar_select %p296, %s21, 1
      %s298 = smul.addr %s297, 14
      %s299 = smul.addr %s298, 4
      %s300 = scalar_lea.vmem %s3, %s299
      %p301 = scmp.lt.s32.totalorder %s20, 0
      %s302 = scalar_select %p301, %s20, 0
      %s303 = smul.addr %s302, 4
      %s304 = scalar_lea.vmem %s4, %s303
      %p305 = scmp.lt.s32.totalorder %s21, 1
      %s306 = scalar_select %p305, %s21, 1
      %p307 = scmp.lt.s32.totalorder %s20, 0
      %s308 = scalar_select %p307, %s20, 0
      %s309 = smul.addr %s306, 14
      %s310 = sadd.s32 %s308, %s309
      %s311 = smul.addr %s310, 8
      %s312 = scalar_lea.vmem %s5, %s311
      %v314 = vld [vmem:[%s295] sm:$0x1]
      %v316 = vlaneseq
      %v317 = vshrl.u32 %v316, 7
      %v318 = vsub.s32 0, %v317
      %v319 = vrot.slane %v314, %v318
      %v321 = vadd.f32 %v319, 0.0
      %322 = vst [vmem:[#allocation2] sm:$0xff] %v321
      %323 = vst [vmem:[#allocation2 + $0x8] sm:$0xff] %v321
      %324 = vst [vmem:[#allocation2 + $0x10] sm:$0xff] %v321
      %325 = vst [vmem:[#allocation2 + $0x18] sm:$0xff] %v321
      %326 = vst [vmem:[#allocation2 + $0x20] sm:$0xff] %v321
      %327 = vst [vmem:[#allocation2 + $0x28] sm:$0xff] %v321
      %328 = vst [vmem:[#allocation2 + $0x30] sm:$0xff] %v321
      %329 = vst [vmem:[#allocation2 + $0x38] sm:$0xff] %v321
      %330 = vst [vmem:[#allocation2 + $0x40] sm:$0xff] %v321
      %331 = vst [vmem:[#allocation2 + $0x48] sm:$0xff] %v321
      %332 = vst [vmem:[#allocation2 + $0x50] sm:$0xff] %v321
      %333 = vst [vmem:[#allocation2 + $0x58] sm:$0xff] %v321
      %334 = vst [vmem:[#allocation2 + $0x60] sm:$0xff] %v321
      %335 = vst [vmem:[#allocation2 + $0x68] sm:$0xff] %v321
      %v336 = vld [vmem:[#allocation2] sm:$0xff]
      %v337 = vld [vmem:[#allocation2 + $0x8] sm:$0xff]
      %v338 = vld [vmem:[#allocation2 + $0x10] sm:$0xff]
      %v339 = vld [vmem:[#allocation2 + $0x18] sm:$0xff]
      %v340 = vld [vmem:[#allocation2 + $0x20] sm:$0xff]
      %v341 = vld [vmem:[#allocation2 + $0x28] sm:$0xff]
      %v342 = vld [vmem:[#allocation2 + $0x30] sm:$0xff]
      %v343 = vld [vmem:[#allocation2 + $0x38] sm:$0xff]
      %v344 = vld [vmem:[#allocation2 + $0x40] sm:$0xff]
      %v345 = vld [vmem:[#allocation2 + $0x48] sm:$0xff]
      %v346 = vld [vmem:[#allocation2 + $0x50] sm:$0xff]
      %v347 = vld [vmem:[#allocation2 + $0x58] sm:$0xff]
      %v348 = vld [vmem:[#allocation2 + $0x60] sm:$0xff]
      %v349 = vld [vmem:[#allocation2 + $0x68] sm:$0xff]
      %v350 = vld [vmem:[%s300] sm:$0xf]
      %v351 = vld [vmem:[%s300 + $0x4] sm:$0xf]
      %v352 = vld [vmem:[%s300 + $0x8] sm:$0xf]
      %v353 = vld [vmem:[%s300 + $0xc] sm:$0xf]
      %v354 = vld [vmem:[%s300 + $0x10] sm:$0xf]
      %v355 = vld [vmem:[%s300 + $0x14] sm:$0xf]
      %v356 = vld [vmem:[%s300 + $0x18] sm:$0xf]
      %v357 = vld [vmem:[%s300 + $0x1c] sm:$0xf]
      %v358 = vld [vmem:[%s300 + $0x20] sm:$0xf]
      %v359 = vld [vmem:[%s300 + $0x24] sm:$0xf]
      %v360 = vld [vmem:[%s300 + $0x28] sm:$0xf]
      %v361 = vld [vmem:[%s300 + $0x2c] sm:$0xf]
      %v362 = vld [vmem:[%s300 + $0x30] sm:$0xf]
      %v363 = vld [vmem:[%s300 + $0x34] sm:$0xf]
      %v364 = vld [vmem:[%s304] sm:$0xf]
      %v365 = vld [vmem:[%s304 + $0x4] sm:$0xf]
      %v380 = vunpack.c.l.b16 %v350
      %v381 = vunpack.c.l.b16 %v351
      %v382 = vunpack.c.l.b16 %v352
      %v383 = vunpack.c.l.b16 %v353
      %v384 = vunpack.c.l.b16 %v354
      %v385 = vunpack.c.l.b16 %v355
      %v386 = vunpack.c.l.b16 %v356
      %v387 = vunpack.c.l.b16 %v357
      %v388 = vunpack.c.l.b16 %v358
      %v389 = vunpack.c.l.b16 %v359
      %v390 = vunpack.c.l.b16 %v360
      %v391 = vunpack.c.l.b16 %v361
      %v392 = vunpack.c.l.b16 %v362
      %v393 = vunpack.c.l.b16 %v363
      %v394 = vpack.c.b16 %v381, %v380
      %v395 = vpack.c.b16 %v383, %v382
      %v396 = vpack.c.b16 %v385, %v384
      %v397 = vpack.c.b16 %v387, %v386
      %v398 = vpack.c.b16 %v389, %v388
      %v399 = vpack.c.b16 %v391, %v390
      %v400 = vpack.c.b16 %v393, %v392
      %v403 = vunpack.c.l.b16 %v364
      %v404 = vunpack.c.l.b16 %v365
      %v405 = vpack.c.b16 %v404, %v403
      %vm407 = vcmask 130048
      %v409 = vsel %vm407, %v394, 0
      %v412 = vsel %vm407, %v395, 0
      %v415 = vsel %vm407, %v396, 0
      %v418 = vsel %vm407, %v397, 0
      %v421 = vsel %vm407, %v398, 0
      %v424 = vsel %vm407, %v399, 0
      %v427 = vsel %vm407, %v400, 0
      %429 = vmatprep.subr.bf16.mxu0 0
      %430 = vmatpush1.bf16.msra.mxu0 %v405
      %431 = vmatprep.subr.bf16.mxu0 0
      %432 = vmatpush1.bf16.msra.mxu0 0
      %433 = vmatprep.subr.bf16.mxu0 0
      %434 = vmatpush1.bf16.msra.mxu0 0
      %435 = vmatprep.subr.bf16.mxu0 0
      %436 = vmatpush1.bf16.msra.mxu0 0
      %437 = vmatprep.subr.bf16.mxu0 0
      %438 = vmatpush1.bf16.msra.mxu0 0
      %439 = vmatprep.subr.bf16.mxu0 0
      %440 = vmatpush1.bf16.msra.mxu0 0
      %441 = vmatprep.subr.bf16.mxu0 0
      %442 = vmatpush1.bf16.msra.mxu0 0
      %443 = vmatprep.subr.bf16.mxu0 0
      %444 = vmatpush1.bf16.msra.mxu0 0
      %445 = vmatprep.subr.bf16.mxu0 0
      %446 = vmatpush1.bf16.msra.mxu0 0
      %447 = vmatprep.subr.bf16.mxu0 0
      %448 = vmatpush1.bf16.msra.mxu0 0
      %449 = vmatprep.subr.bf16.mxu0 0
      %450 = vmatpush1.bf16.msra.mxu0 0
      %451 = vmatprep.subr.bf16.mxu0 0
      %452 = vmatpush1.bf16.msra.mxu0 0
      %453 = vmatprep.subr.bf16.mxu0 0
      %454 = vmatpush1.bf16.msra.mxu0 0
      %455 = vmatprep.subr.bf16.mxu0 0
      %456 = vmatpush1.bf16.msra.mxu0 0
      %457 = vmatprep.subr.bf16.mxu0 0
      %458 = vmatpush1.bf16.msra.mxu0 0
      %459 = vmatprep.subr.bf16.mxu0 0
      %460 = vmatpush1.bf16.msra.mxu0 0
      %461 = vmatprep.mubr.bf16.mxu0 0
      %462 = vmatmul.mubr.bf16.gmra.mrb[0].mxu0 %v409
      %v463 = vpop.f32.mrb[0].mxu0
      %v464 = vadd.f32 0.0, %v463
      %v465 = vpop.f32.mrb[0].mxu0
      %v466 = vpop.f32.mrb[0].mxu0
      %v467 = vadd.f32 0.0, %v466
      %v468 = vpop.f32.mrb[0].mxu0
      %469 = vmatprep.mubr.bf16.mxu0 0
      %470 = vmatmul.mubr.bf16.gmra.mrb[0].mxu0 %v412
      %v471 = vpop.f32.mrb[0].mxu0
      %v472 = vadd.f32 0.0, %v471
      %v473 = vpop.f32.mrb[0].mxu0
      %v474 = vpop.f32.mrb[0].mxu0
      %v475 = vadd.f32 0.0, %v474
      %v476 = vpop.f32.mrb[0].mxu0
      %477 = vmatprep.mubr.bf16.mxu0 0
      %478 = vmatmul.mubr.bf16.gmra.mrb[0].mxu0 %v415
      %v479 = vpop.f32.mrb[0].mxu0
      %v480 = vadd.f32 0.0, %v479
      %v481 = vpop.f32.mrb[0].mxu0
      %v482 = vpop.f32.mrb[0].mxu0
      %v483 = vadd.f32 0.0, %v482
      %v484 = vpop.f32.mrb[0].mxu0
      %485 = vmatprep.mubr.bf16.mxu0 0
      %486 = vmatmul.mubr.bf16.gmra.mrb[0].mxu0 %v418
      %v487 = vpop.f32.mrb[0].mxu0
      %v488 = vadd.f32 0.0, %v487
      %v489 = vpop.f32.mrb[0].mxu0
      %v490 = vpop.f32.mrb[0].mxu0
      %v491 = vadd.f32 0.0, %v490
      %v492 = vpop.f32.mrb[0].mxu0
      %493 = vmatprep.mubr.bf16.mxu0 0
      %494 = vmatmul.mubr.bf16.gmra.mrb[0].mxu0 %v421
      %v495 = vpop.f32.mrb[0].mxu0
      %v496 = vadd.f32 0.0, %v495
      %v497 = vpop.f32.mrb[0].mxu0
      %v498 = vpop.f32.mrb[0].mxu0
      %v499 = vadd.f32 0.0, %v498
      %v500 = vpop.f32.mrb[0].mxu0
      %501 = vmatprep.mubr.bf16.mxu0 0
      %502 = vmatmul.mubr.bf16.gmra.mrb[0].mxu0 %v424
      %v503 = vpop.f32.mrb[0].mxu0
      %v504 = vadd.f32 0.0, %v503
      %v505 = vpop.f32.mrb[0].mxu0
      %v506 = vpop.f32.mrb[0].mxu0
      %v507 = vadd.f32 0.0, %v506
      %v508 = vpop.f32.mrb[0].mxu0
      %509 = vmatprep.mubr.bf16.mxu0 0
      %510 = vmatmul.mubr.bf16.gmra.mrb[0].mxu0 %v427
      %v511 = vpop.f32.mrb[0].mxu0
      %v512 = vadd.f32 0.0, %v511
      %v513 = vpop.f32.mrb[0].mxu0
      %v514 = vpop.f32.mrb[0].mxu0
      %v515 = vadd.f32 0.0, %v514
      %v516 = vpop.f32.mrb[0].mxu0
      %517 = vdwg.mxu0
      %v518 = vadd.f32 %v336, %v464
      %v519 = vadd.f32 %v337, %v467
      %v520 = vadd.f32 %v338, %v472
      %v521 = vadd.f32 %v339, %v475
      %v522 = vadd.f32 %v340, %v480
      %v523 = vadd.f32 %v341, %v483
      %v524 = vadd.f32 %v342, %v488
      %v525 = vadd.f32 %v343, %v491
      %v526 = vadd.f32 %v344, %v496
      %v527 = vadd.f32 %v345, %v499
      %v528 = vadd.f32 %v346, %v504
      %v529 = vadd.f32 %v347, %v507
      %v530 = vadd.f32 %v348, %v512
      %v531 = vadd.f32 %v349, %v515
      %532 = vst [vmem:[#allocation2] sm:$0xff] %v518
      %533 = vst [vmem:[#allocation2 + $0x8] sm:$0xff] %v519
      %534 = vst [vmem:[#allocation2 + $0x10] sm:$0xff] %v520
      %535 = vst [vmem:[#allocation2 + $0x18] sm:$0xff] %v521
      %536 = vst [vmem:[#allocation2 + $0x20] sm:$0xff] %v522
      %537 = vst [vmem:[#allocation2 + $0x28] sm:$0xff] %v523
      %538 = vst [vmem:[#allocation2 + $0x30] sm:$0xff] %v524
      %539 = vst [vmem:[#allocation2 + $0x38] sm:$0xff] %v525
      %540 = vst [vmem:[#allocation2 + $0x40] sm:$0xff] %v526
      %541 = vst [vmem:[#allocation2 + $0x48] sm:$0xff] %v527
      %542 = vst [vmem:[#allocation2 + $0x50] sm:$0xff] %v528
      %543 = vst [vmem:[#allocation2 + $0x58] sm:$0xff] %v529
      %544 = vst [vmem:[#allocation2 + $0x60] sm:$0xff] %v530
      %545 = vst [vmem:[#allocation2 + $0x68] sm:$0xff] %v531
      %v546 = vld [vmem:[#allocation2] sm:$0xff]
      %v547 = vld [vmem:[#allocation2 + $0x8] sm:$0xff]
      %v548 = vld [vmem:[#allocation2 + $0x10] sm:$0xff]
      %v549 = vld [vmem:[#allocation2 + $0x18] sm:$0xff]
      %v550 = vld [vmem:[#allocation2 + $0x20] sm:$0xff]
      %v551 = vld [vmem:[#allocation2 + $0x28] sm:$0xff]
      %v552 = vld [vmem:[#allocation2 + $0x30] sm:$0xff]
      %v553 = vld [vmem:[#allocation2 + $0x38] sm:$0xff]
      %v554 = vld [vmem:[#allocation2 + $0x40] sm:$0xff]
      %v555 = vld [vmem:[#allocation2 + $0x48] sm:$0xff]
      %v556 = vld [vmem:[#allocation2 + $0x50] sm:$0xff]
      %v557 = vld [vmem:[#allocation2 + $0x58] sm:$0xff]
      %v558 = vld [vmem:[#allocation2 + $0x60] sm:$0xff]
      %v559 = vld [vmem:[#allocation2 + $0x68] sm:$0xff]
      %v560 = vld [vmem:[%s288] sm:$0xf]
      %v561 = vld [vmem:[%s288 + $0x4] sm:$0xf]
      %v562 = vld [vmem:[%s288 + $0x8] sm:$0xf]
      %v563 = vld [vmem:[%s288 + $0xc] sm:$0xf]
      %v564 = vld [vmem:[%s288 + $0x10] sm:$0xf]
      %v565 = vld [vmem:[%s288 + $0x14] sm:$0xf]
      %v566 = vld [vmem:[%s288 + $0x18] sm:$0xf]
      %v567 = vld [vmem:[%s288 + $0x1c] sm:$0xf]
      %v568 = vld [vmem:[%s288 + $0x20] sm:$0xf]
      %v569 = vld [vmem:[%s288 + $0x24] sm:$0xf]
      %v570 = vld [vmem:[%s288 + $0x28] sm:$0xf]
      %v571 = vld [vmem:[%s288 + $0x2c] sm:$0xf]
      %v572 = vld [vmem:[%s288 + $0x30] sm:$0xf]
      %v573 = vld [vmem:[%s288 + $0x34] sm:$0xf]
      %v574 = vld [vmem:[%s292] sm:$0xf]
      %v575 = vld [vmem:[%s292 + $0x4] sm:$0xf]
      %v576 = vld [vmem:[%s292 + $0x8] sm:$0xf]
      %v577 = vld [vmem:[%s292 + $0xc] sm:$0xf]
      %v578 = vld [vmem:[%s292 + $0x10] sm:$0xf]
      %v579 = vld [vmem:[%s292 + $0x14] sm:$0xf]
      %v580 = vld [vmem:[%s292 + $0x18] sm:$0xf]
      %v581 = vld [vmem:[%s292 + $0x1c] sm:$0xf]
      %v582 = vld [vmem:[%s292 + $0x20] sm:$0xf]
      %v583 = vld [vmem:[%s292 + $0x24] sm:$0xf]
      %v584 = vld [vmem:[%s292 + $0x28] sm:$0xf]
      %v585 = vld [vmem:[%s292 + $0x2c] sm:$0xf]
      %v586 = vld [vmem:[%s292 + $0x30] sm:$0xf]
      %v587 = vld [vmem:[%s292 + $0x34] sm:$0xf]
      %v588 = vld [vmem:[%s292 + $0x38] sm:$0xf]
      %v589 = vld [vmem:[%s292 + $0x3c] sm:$0xf]
      %v604 = vunpack.c.l.b16 %v560
      %v605 = vunpack.c.l.b16 %v561
      %v606 = vunpack.c.l.b16 %v562
      %v607 = vunpack.c.l.b16 %v563
      %v608 = vunpack.c.l.b16 %v564
      %v609 = vunpack.c.l.b16 %v565
      %v610 = vunpack.c.l.b16 %v566
      %v611 = vunpack.c.l.b16 %v567
      %v612 = vunpack.c.l.b16 %v568
      %v613 = vunpack.c.l.b16 %v569
      %v614 = vunpack.c.l.b16 %v570
      %v615 = vunpack.c.l.b16 %v571
      %v616 = vunpack.c.l.b16 %v572
      %v617 = vunpack.c.l.b16 %v573
      %v618 = vpack.c.b16 %v605, %v604
      %v619 = vpack.c.b16 %v607, %v606
      %v620 = vpack.c.b16 %v609, %v608
      %v621 = vpack.c.b16 %v611, %v610
      %v622 = vpack.c.b16 %v613, %v612
      %v623 = vpack.c.b16 %v615, %v614
      %v624 = vpack.c.b16 %v617, %v616
      %v648 = vunpack.c.l.b16 %v574
      %v649 = vunpack.c.l.b16 %v575
      %v650 = vunpack.c.l.b16 %v576
      %v651 = vunpack.c.l.b16 %v577
      %v652 = vunpack.c.l.b16 %v578
      %v653 = vunpack.c.l.b16 %v579
      %v654 = vunpack.c.l.b16 %v580
      %v655 = vunpack.c.l.b16 %v581
      %v656 = vunpack.c.l.b16 %v582
      %v657 = vunpack.c.l.b16 %v583
      %v658 = vunpack.c.l.b16 %v584
      %v659 = vunpack.c.l.b16 %v585
      %v660 = vunpack.c.l.b16 %v586
      %v661 = vunpack.c.l.b16 %v587
      %v662 = vunpack.c.l.b16 %v588
      %v663 = vunpack.c.l.b16 %v589
      %v664 = vpack.c.b16 %v649, %v648
      %v665 = vpack.c.b16 %v651, %v650
      %v666 = vpack.c.b16 %v653, %v652
      %v667 = vpack.c.b16 %v655, %v654
      %v668 = vpack.c.b16 %v657, %v656
      %v669 = vpack.c.b16 %v659, %v658
      %v670 = vpack.c.b16 %v661, %v660
      %v671 = vpack.c.b16 %v663, %v662
      %680 = vmatprep.subr.bf16.mxu0 0
      %681 = vmatpush1.bf16.msra.mxu0 %v664
      %682 = vmatprep.subr.bf16.mxu0 0
      %683 = vmatpush1.bf16.msra.mxu0 %v665
      %684 = vmatprep.subr.bf16.mxu0 0
      %685 = vmatpush1.bf16.msra.mxu0 %v666
      %686 = vmatprep.subr.bf16.mxu0 0
      %687 = vmatpush1.bf16.msra.mxu0 %v667
      %688 = vmatprep.subr.bf16.mxu0 0
      %689 = vmatpush1.bf16.msra.mxu0 %v668
      %690 = vmatprep.subr.bf16.mxu0 0
      %691 = vmatpush1.bf16.msra.mxu0 %v669
      %692 = vmatprep.subr.bf16.mxu0 0
      %693 = vmatpush1.bf16.msra.mxu0 %v670
      %694 = vmatprep.subr.bf16.mxu0 0
      %695 = vmatpush1.bf16.msra.mxu0 %v671
      %696 = vmatprep.subr.bf16.mxu0 0
      %697 = vmatpush1.bf16.msra.mxu0 0
      %698 = vmatprep.subr.bf16.mxu0 0
      %699 = vmatpush1.bf16.msra.mxu0 0
      %700 = vmatprep.subr.bf16.mxu0 0
      %701 = vmatpush1.bf16.msra.mxu0 0
      %702 = vmatprep.subr.bf16.mxu0 0
      %703 = vmatpush1.bf16.msra.mxu0 0
      %704 = vmatprep.subr.bf16.mxu0 0
      %705 = vmatpush1.bf16.msra.mxu0 0
      %706 = vmatprep.subr.bf16.mxu0 0
      %707 = vmatpush1.bf16.msra.mxu0 0
      %708 = vmatprep.subr.bf16.mxu0 0
      %709 = vmatpush1.bf16.msra.mxu0 0
      %710 = vmatprep.subr.bf16.mxu0 0
      %711 = vmatpush1.bf16.msra.mxu0 0
      %712 = vmatprep.mubr.bf16.mxu0 0
      %713 = vmatmul.mubr.bf16.gmra.mrb[0].mxu0 %v618
      %v714 = vpop.f32.mrb[0].mxu0
      %v715 = vadd.f32 0.0, %v714
      %v716 = vpop.f32.mrb[0].mxu0
      %v717 = vpop.f32.mrb[0].mxu0
      %v718 = vadd.f32 0.0, %v717
      %v719 = vpop.f32.mrb[0].mxu0
      %720 = vmatprep.mubr.bf16.mxu0 0
      %721 = vmatmul.mubr.bf16.gmra.mrb[0].mxu0 %v619
      %v722 = vpop.f32.mrb[0].mxu0
      %v723 = vadd.f32 0.0, %v722
      %v724 = vpop.f32.mrb[0].mxu0
      %v725 = vpop.f32.mrb[0].mxu0
      %v726 = vadd.f32 0.0, %v725
      %v727 = vpop.f32.mrb[0].mxu0
      %728 = vmatprep.mubr.bf16.mxu0 0
      %729 = vmatmul.mubr.bf16.gmra.mrb[0].mxu0 %v620
      %v730 = vpop.f32.mrb[0].mxu0
      %v731 = vadd.f32 0.0, %v730
      %v732 = vpop.f32.mrb[0].mxu0
      %v733 = vpop.f32.mrb[0].mxu0
      %v734 = vadd.f32 0.0, %v733
      %v735 = vpop.f32.mrb[0].mxu0
      %736 = vmatprep.mubr.bf16.mxu0 0
      %737 = vmatmul.mubr.bf16.gmra.mrb[0].mxu0 %v621
      %v738 = vpop.f32.mrb[0].mxu0
      %v739 = vadd.f32 0.0, %v738
      %v740 = vpop.f32.mrb[0].mxu0
      %v741 = vpop.f32.mrb[0].mxu0
      %v742 = vadd.f32 0.0, %v741
      %v743 = vpop.f32.mrb[0].mxu0
      %744 = vmatprep.mubr.bf16.mxu0 0
      %745 = vmatmul.mubr.bf16.gmra.mrb[0].mxu0 %v622
      %v746 = vpop.f32.mrb[0].mxu0
      %v747 = vadd.f32 0.0, %v746
      %v748 = vpop.f32.mrb[0].mxu0
      %v749 = vpop.f32.mrb[0].mxu0
      %v750 = vadd.f32 0.0, %v749
      %v751 = vpop.f32.mrb[0].mxu0
      %752 = vmatprep.mubr.bf16.mxu0 0
      %753 = vmatmul.mubr.bf16.gmra.mrb[0].mxu0 %v623
      %v754 = vpop.f32.mrb[0].mxu0
      %v755 = vadd.f32 0.0, %v754
      %v756 = vpop.f32.mrb[0].mxu0
      %v757 = vpop.f32.mrb[0].mxu0
      %v758 = vadd.f32 0.0, %v757
      %v759 = vpop.f32.mrb[0].mxu0
      %760 = vmatprep.mubr.bf16.mxu0 0
      %761 = vmatmul.mubr.bf16.gmra.mrb[0].mxu0 %v624
      %v762 = vpop.f32.mrb[0].mxu0
      %v763 = vadd.f32 0.0, %v762
      %v764 = vpop.f32.mrb[0].mxu0
      %v765 = vpop.f32.mrb[0].mxu0
      %v766 = vadd.f32 0.0, %v765
      %v767 = vpop.f32.mrb[0].mxu0
      %768 = vdwg.mxu0
      %v769 = vadd.f32 %v546, %v715
      %v770 = vadd.f32 %v547, %v718
      %v771 = vadd.f32 %v548, %v723
      %v772 = vadd.f32 %v549, %v726
      %v773 = vadd.f32 %v550, %v731
      %v774 = vadd.f32 %v551, %v734
      %v775 = vadd.f32 %v552, %v739
      %v776 = vadd.f32 %v553, %v742
      %v777 = vadd.f32 %v554, %v747
      %v778 = vadd.f32 %v555, %v750
      %v779 = vadd.f32 %v556, %v755
      %v780 = vadd.f32 %v557, %v758
      %v781 = vadd.f32 %v558, %v763
      %v782 = vadd.f32 %v559, %v766
      %783 = vst [vmem:[#allocation2] sm:$0xff] %v769
      %784 = vst [vmem:[#allocation2 + $0x8] sm:$0xff] %v770
      %785 = vst [vmem:[#allocation2 + $0x10] sm:$0xff] %v771
      %786 = vst [vmem:[#allocation2 + $0x18] sm:$0xff] %v772
      %787 = vst [vmem:[#allocation2 + $0x20] sm:$0xff] %v773
      %788 = vst [vmem:[#allocation2 + $0x28] sm:$0xff] %v774
      %789 = vst [vmem:[#allocation2 + $0x30] sm:$0xff] %v775
      %790 = vst [vmem:[#allocation2 + $0x38] sm:$0xff] %v776
      %791 = vst [vmem:[#allocation2 + $0x40] sm:$0xff] %v777
      %792 = vst [vmem:[#allocation2 + $0x48] sm:$0xff] %v778
      %793 = vst [vmem:[#allocation2 + $0x50] sm:$0xff] %v779
      %794 = vst [vmem:[#allocation2 + $0x58] sm:$0xff] %v780
      %795 = vst [vmem:[#allocation2 + $0x60] sm:$0xff] %v781
      %796 = vst [vmem:[#allocation2 + $0x68] sm:$0xff] %v782
      %v797 = vld [vmem:[#allocation2] sm:$0xff]
      %v798 = vld [vmem:[#allocation2 + $0x8] sm:$0xff]
      %v799 = vld [vmem:[#allocation2 + $0x10] sm:$0xff]
      %v800 = vld [vmem:[#allocation2 + $0x18] sm:$0xff]
      %v801 = vld [vmem:[#allocation2 + $0x20] sm:$0xff]
      %v802 = vld [vmem:[#allocation2 + $0x28] sm:$0xff]
      %v803 = vld [vmem:[#allocation2 + $0x30] sm:$0xff]
      %v804 = vld [vmem:[#allocation2 + $0x38] sm:$0xff]
      %v805 = vld [vmem:[#allocation2 + $0x40] sm:$0xff]
      %v806 = vld [vmem:[#allocation2 + $0x48] sm:$0xff]
      %v807 = vld [vmem:[#allocation2 + $0x50] sm:$0xff]
      %v808 = vld [vmem:[#allocation2 + $0x58] sm:$0xff]
      %v809 = vld [vmem:[#allocation2 + $0x60] sm:$0xff]
      %v810 = vld [vmem:[#allocation2 + $0x68] sm:$0xff]
      %v811 = vld [vmem:[%s288] sm:$0xf]
      %v812 = vld [vmem:[%s288 + $0x4] sm:$0xf]
      %v813 = vld [vmem:[%s288 + $0x8] sm:$0xf]
      %v814 = vld [vmem:[%s288 + $0xc] sm:$0xf]
      %v815 = vld [vmem:[%s288 + $0x10] sm:$0xf]
      %v816 = vld [vmem:[%s288 + $0x14] sm:$0xf]
      %v817 = vld [vmem:[%s288 + $0x18] sm:$0xf]
      %v818 = vld [vmem:[%s288 + $0x1c] sm:$0xf]
      %v819 = vld [vmem:[%s288 + $0x20] sm:$0xf]
      %v820 = vld [vmem:[%s288 + $0x24] sm:$0xf]
      %v821 = vld [vmem:[%s288 + $0x28] sm:$0xf]
      %v822 = vld [vmem:[%s288 + $0x2c] sm:$0xf]
      %v823 = vld [vmem:[%s288 + $0x30] sm:$0xf]
      %v824 = vld [vmem:[%s288 + $0x34] sm:$0xf]
      %v825 = vld [vmem:[%s288 + $0x38] sm:$0x1]
      %s826 = scalar_lea.vmem %s292, 64
      %v827 = vld [vmem:[%s826] sm:$0xf]
      %v828 = vld [vmem:[%s826 + $0x4] sm:$0xf]
      %v829 = vld [vmem:[%s826 + $0x8] sm:$0xf]
      %v830 = vld [vmem:[%s826 + $0xc] sm:$0xf]
      %v831 = vld [vmem:[%s826 + $0x10] sm:$0xf]
      %v832 = vld [vmem:[%s826 + $0x14] sm:$0xf]
      %v833 = vld [vmem:[%s826 + $0x18] sm:$0xf]
      %v834 = vld [vmem:[%s826 + $0x1c] sm:$0xf]
      %v835 = vld [vmem:[%s826 + $0x20] sm:$0xf]
      %v836 = vld [vmem:[%s826 + $0x24] sm:$0xf]
      %v837 = vld [vmem:[%s826 + $0x28] sm:$0xf]
      %v838 = vld [vmem:[%s826 + $0x2c] sm:$0xf]
      %v839 = vld [vmem:[%s826 + $0x30] sm:$0xf]
      %v840 = vld [vmem:[%s826 + $0x34] sm:$0xf]
      %v841 = vld [vmem:[%s826 + $0x38] sm:$0xf]
      %v842 = vld [vmem:[%s826 + $0x3c] sm:$0xf]
      %v858 = vunpack.c.l.b16 %v811
      %v859 = vunpack.c.l.b16 %v812
      %v860 = vunpack.c.l.b16 %v813
      %v861 = vunpack.c.l.b16 %v814
      %v862 = vunpack.c.l.b16 %v815
      %v863 = vunpack.c.l.b16 %v816
      %v864 = vunpack.c.l.b16 %v817
      %v865 = vunpack.c.l.b16 %v818
      %v866 = vunpack.c.l.b16 %v819
      %v867 = vunpack.c.l.b16 %v820
      %v868 = vunpack.c.l.b16 %v821
      %v869 = vunpack.c.l.b16 %v822
      %v870 = vunpack.c.l.b16 %v823
      %v871 = vunpack.c.l.b16 %v824
      %v872 = vunpack.c.l.b16 %v825
      %v873 = vpack.c.b16 %v859, %v858
      %v874 = vpack.c.b16 %v861, %v860
      %v875 = vpack.c.b16 %v863, %v862
      %v876 = vpack.c.b16 %v865, %v864
      %v877 = vpack.c.b16 %v867, %v866
      %v878 = vpack.c.b16 %v869, %v868
      %v879 = vpack.c.b16 %v871, %v870
      %v880 = vpack.c.b16 %v872, %v872
      %vm881 = vsmask.f32 7424
      %v883 = vshrl.u32 %v873, 16
      %v885 = vshll.u32 %v873, 16
      %v887 = vrot.slane %v885, 1
      %v888 = vor.u32 %v883, %v887
      %v890 = vshll.u32 %v874, 16
      %v892 = vrot.slane %v890, 1
      %v893 = vsel %vm881, %v888, %v892
      %v894 = vshrl.u32 %v874, 16
      %v896 = vor.u32 %v894, %v892
      %v898 = vshll.u32 %v875, 16
      %v900 = vrot.slane %v898, 1
      %v901 = vsel %vm881, %v896, %v900
      %v902 = vshrl.u32 %v875, 16
      %v904 = vor.u32 %v902, %v900
      %v906 = vshll.u32 %v876, 16
      %v908 = vrot.slane %v906, 1
      %v909 = vsel %vm881, %v904, %v908
      %v910 = vshrl.u32 %v876, 16
      %v912 = vor.u32 %v910, %v908
      %v914 = vshll.u32 %v877, 16
      %v916 = vrot.slane %v914, 1
      %v917 = vsel %vm881, %v912, %v916
      %v918 = vshrl.u32 %v877, 16
      %v920 = vor.u32 %v918, %v916
      %v922 = vshll.u32 %v878, 16
      %v924 = vrot.slane %v922, 1
      %v925 = vsel %vm881, %v920, %v924
      %v926 = vshrl.u32 %v878, 16
      %v928 = vor.u32 %v926, %v924
      %v930 = vshll.u32 %v879, 16
      %v932 = vrot.slane %v930, 1
      %v933 = vsel %vm881, %v928, %v932
      %v934 = vshrl.u32 %v879, 16
      %v936 = vor.u32 %v934, %v932
      %v938 = vshll.u32 %v880, 16
      %v940 = vrot.slane %v938, 1
      %v941 = vsel %vm881, %v936, %v940
      %v965 = vunpack.c.l.b16 %v827
      %v966 = vunpack.c.l.b16 %v828
      %v967 = vunpack.c.l.b16 %v829
      %v968 = vunpack.c.l.b16 %v830
      %v969 = vunpack.c.l.b16 %v831
      %v970 = vunpack.c.l.b16 %v832
      %v971 = vunpack.c.l.b16 %v833
      %v972 = vunpack.c.l.b16 %v834
      %v973 = vunpack.c.l.b16 %v835
      %v974 = vunpack.c.l.b16 %v836
      %v975 = vunpack.c.l.b16 %v837
      %v976 = vunpack.c.l.b16 %v838
      %v977 = vunpack.c.l.b16 %v839
      %v978 = vunpack.c.l.b16 %v840
      %v979 = vunpack.c.l.b16 %v841
      %v980 = vunpack.c.l.b16 %v842
      %v981 = vpack.c.b16 %v966, %v965
      %v982 = vpack.c.b16 %v968, %v967
      %v983 = vpack.c.b16 %v970, %v969
      %v984 = vpack.c.b16 %v972, %v971
      %v985 = vpack.c.b16 %v974, %v973
      %v986 = vpack.c.b16 %v976, %v975
      %v987 = vpack.c.b16 %v978, %v977
      %v988 = vpack.c.b16 %v980, %v979
      %997 = vmatprep.subr.bf16.mxu0 0
      %998 = vmatpush1.bf16.msra.mxu0 %v981
      %999 = vmatprep.subr.bf16.mxu0 0
      %1000 = vmatpush1.bf16.msra.mxu0 %v982
      %1001 = vmatprep.subr.bf16.mxu0 0
      %1002 = vmatpush1.bf16.msra.mxu0 %v983
      %1003 = vmatprep.subr.bf16.mxu0 0
      %1004 = vmatpush1.bf16.msra.mxu0 %v984
      %1005 = vmatprep.subr.bf16.mxu0 0
      %1006 = vmatpush1.bf16.msra.mxu0 %v985
      %1007 = vmatprep.subr.bf16.mxu0 0
      %1008 = vmatpush1.bf16.msra.mxu0 %v986
      %1009 = vmatprep.subr.bf16.mxu0 0
      %1010 = vmatpush1.bf16.msra.mxu0 %v987
      %1011 = vmatprep.subr.bf16.mxu0 0
      %1012 = vmatpush1.bf16.msra.mxu0 %v988
      %1013 = vmatprep.subr.bf16.mxu0 0
      %1014 = vmatpush1.bf16.msra.mxu0 0
      %1015 = vmatprep.subr.bf16.mxu0 0
      %1016 = vmatpush1.bf16.msra.mxu0 0
      %1017 = vmatprep.subr.bf16.mxu0 0
      %1018 = vmatpush1.bf16.msra.mxu0 0
      %1019 = vmatprep.subr.bf16.mxu0 0
      %1020 = vmatpush1.bf16.msra.mxu0 0
      %1021 = vmatprep.subr.bf16.mxu0 0
      %1022 = vmatpush1.bf16.msra.mxu0 0
      %1023 = vmatprep.subr.bf16.mxu0 0
      %1024 = vmatpush1.bf16.msra.mxu0 0
      %1025 = vmatprep.subr.bf16.mxu0 0
      %1026 = vmatpush1.bf16.msra.mxu0 0
      %1027 = vmatprep.subr.bf16.mxu0 0
      %1028 = vmatpush1.bf16.msra.mxu0 0
      %1029 = vmatprep.mubr.bf16.mxu0 0
      %1030 = vmatmul.mubr.bf16.gmra.mrb[0].mxu0 %v893
      %v1031 = vpop.f32.mrb[0].mxu0
      %v1032 = vadd.f32 0.0, %v1031
      %v1033 = vpop.f32.mrb[0].mxu0
      %v1034 = vpop.f32.mrb[0].mxu0
      %v1035 = vadd.f32 0.0, %v1034
      %v1036 = vpop.f32.mrb[0].mxu0
      %1037 = vmatprep.mubr.bf16.mxu0 0
      %1038 = vmatmul.mubr.bf16.gmra.mrb[0].mxu0 %v901
      %v1039 = vpop.f32.mrb[0].mxu0
      %v1040 = vadd.f32 0.0, %v1039
      %v1041 = vpop.f32.mrb[0].mxu0
      %v1042 = vpop.f32.mrb[0].mxu0
      %v1043 = vadd.f32 0.0, %v1042
      %v1044 = vpop.f32.mrb[0].mxu0
      %1045 = vmatprep.mubr.bf16.mxu0 0
      %1046 = vmatmul.mubr.bf16.gmra.mrb[0].mxu0 %v909
      %v1047 = vpop.f32.mrb[0].mxu0
      %v1048 = vadd.f32 0.0, %v1047
      %v1049 = vpop.f32.mrb[0].mxu0
      %v1050 = vpop.f32.mrb[0].mxu0
      %v1051 = vadd.f32 0.0, %v1050
      %v1052 = vpop.f32.mrb[0].mxu0
      %1053 = vmatprep.mubr.bf16.mxu0 0
      %1054 = vmatmul.mubr.bf16.gmra.mrb[0].mxu0 %v917
      %v1055 = vpop.f32.mrb[0].mxu0
      %v1056 = vadd.f32 0.0, %v1055
      %v1057 = vpop.f32.mrb[0].mxu0
      %v1058 = vpop.f32.mrb[0].mxu0
      %v1059 = vadd.f32 0.0, %v1058
      %v1060 = vpop.f32.mrb[0].mxu0
      %1061 = vmatprep.mubr.bf16.mxu0 0
      %1062 = vmatmul.mubr.bf16.gmra.mrb[0].mxu0 %v925
      %v1063 = vpop.f32.mrb[0].mxu0
      %v1064 = vadd.f32 0.0, %v1063
      %v1065 = vpop.f32.mrb[0].mxu0
      %v1066 = vpop.f32.mrb[0].mxu0
      %v1067 = vadd.f32 0.0, %v1066
      %v1068 = vpop.f32.mrb[0].mxu0
      %1069 = vmatprep.mubr.bf16.mxu0 0
      %1070 = vmatmul.mubr.bf16.gmra.mrb[0].mxu0 %v933
      %v1071 = vpop.f32.mrb[0].mxu0
      %v1072 = vadd.f32 0.0, %v1071
      %v1073 = vpop.f32.mrb[0].mxu0
      %v1074 = vpop.f32.mrb[0].mxu0
      %v1075 = vadd.f32 0.0, %v1074
      %v1076 = vpop.f32.mrb[0].mxu0
      %1077 = vmatprep.mubr.bf16.mxu0 0
      %1078 = vmatmul.mubr.bf16.gmra.mrb[0].mxu0 %v941
      %v1079 = vpop.f32.mrb[0].mxu0
      %v1080 = vadd.f32 0.0, %v1079
      %v1081 = vpop.f32.mrb[0].mxu0
      %v1082 = vpop.f32.mrb[0].mxu0
      %v1083 = vadd.f32 0.0, %v1082
      %v1084 = vpop.f32.mrb[0].mxu0
      %1085 = vdwg.mxu0
      %v1086 = vadd.f32 %v797, %v1032
      %v1087 = vadd.f32 %v798, %v1035
      %v1088 = vadd.f32 %v799, %v1040
      %v1089 = vadd.f32 %v800, %v1043
      %v1090 = vadd.f32 %v801, %v1048
      %v1091 = vadd.f32 %v802, %v1051
      %v1092 = vadd.f32 %v803, %v1056
      %v1093 = vadd.f32 %v804, %v1059
      %v1094 = vadd.f32 %v805, %v1064
      %v1095 = vadd.f32 %v806, %v1067
      %v1096 = vadd.f32 %v807, %v1072
      %v1097 = vadd.f32 %v808, %v1075
      %v1098 = vadd.f32 %v809, %v1080
      %v1099 = vadd.f32 %v810, %v1083
      %1100 = vst [vmem:[#allocation2] sm:$0xff] %v1086
      %1101 = vst [vmem:[#allocation2 + $0x8] sm:$0xff] %v1087
      %1102 = vst [vmem:[#allocation2 + $0x10] sm:$0xff] %v1088
      %1103 = vst [vmem:[#allocation2 + $0x18] sm:$0xff] %v1089
      %1104 = vst [vmem:[#allocation2 + $0x20] sm:$0xff] %v1090
      %1105 = vst [vmem:[#allocation2 + $0x28] sm:$0xff] %v1091
      %1106 = vst [vmem:[#allocation2 + $0x30] sm:$0xff] %v1092
      %1107 = vst [vmem:[#allocation2 + $0x38] sm:$0xff] %v1093
      %1108 = vst [vmem:[#allocation2 + $0x40] sm:$0xff] %v1094
      %1109 = vst [vmem:[#allocation2 + $0x48] sm:$0xff] %v1095
      %1110 = vst [vmem:[#allocation2 + $0x50] sm:$0xff] %v1096
      %1111 = vst [vmem:[#allocation2 + $0x58] sm:$0xff] %v1097
      %1112 = vst [vmem:[#allocation2 + $0x60] sm:$0xff] %v1098
      %1113 = vst [vmem:[#allocation2 + $0x68] sm:$0xff] %v1099
      %v1114 = vld [vmem:[#allocation2] sm:$0xff]
      %v1115 = vld [vmem:[#allocation2 + $0x8] sm:$0xff]
      %v1116 = vld [vmem:[#allocation2 + $0x10] sm:$0xff]
      %v1117 = vld [vmem:[#allocation2 + $0x18] sm:$0xff]
      %v1118 = vld [vmem:[#allocation2 + $0x20] sm:$0xff]
      %v1119 = vld [vmem:[#allocation2 + $0x28] sm:$0xff]
      %v1120 = vld [vmem:[#allocation2 + $0x30] sm:$0xff]
      %v1121 = vld [vmem:[#allocation2 + $0x38] sm:$0xff]
      %v1122 = vld [vmem:[#allocation2 + $0x40] sm:$0xff]
      %v1123 = vld [vmem:[#allocation2 + $0x48] sm:$0xff]
      %v1124 = vld [vmem:[#allocation2 + $0x50] sm:$0xff]
      %v1125 = vld [vmem:[#allocation2 + $0x58] sm:$0xff]
      %v1126 = vld [vmem:[#allocation2 + $0x60] sm:$0xff]
      %v1127 = vld [vmem:[#allocation2 + $0x68] sm:$0xff]
      %v1128 = vld [vmem:[%s288] sm:$0xe]
      %v1129 = vld [vmem:[%s288 + $0x4] sm:$0xf]
      %v1130 = vld [vmem:[%s288 + $0x8] sm:$0xf]
      %v1131 = vld [vmem:[%s288 + $0xc] sm:$0xf]
      %v1132 = vld [vmem:[%s288 + $0x10] sm:$0xf]
      %v1133 = vld [vmem:[%s288 + $0x14] sm:$0xf]
      %v1134 = vld [vmem:[%s288 + $0x18] sm:$0xf]
      %v1135 = vld [vmem:[%s288 + $0x1c] sm:$0xf]
      %v1136 = vld [vmem:[%s288 + $0x20] sm:$0xf]
      %v1137 = vld [vmem:[%s288 + $0x24] sm:$0xf]
      %v1138 = vld [vmem:[%s288 + $0x28] sm:$0xf]
      %v1139 = vld [vmem:[%s288 + $0x2c] sm:$0xf]
      %v1140 = vld [vmem:[%s288 + $0x30] sm:$0xf]
      %v1141 = vld [vmem:[%s288 + $0x34] sm:$0xf]
      %v1142 = vld [vmem:[%s288 + $0x38] sm:$0x1]
      %s1143 = scalar_lea.vmem %s292, 128
      %v1144 = vld [vmem:[%s1143] sm:$0xf]
      %v1145 = vld [vmem:[%s1143 + $0x4] sm:$0xf]
      %v1146 = vld [vmem:[%s1143 + $0x8] sm:$0xf]
      %v1147 = vld [vmem:[%s1143 + $0xc] sm:$0xf]
      %v1148 = vld [vmem:[%s1143 + $0x10] sm:$0xf]
      %v1149 = vld [vmem:[%s1143 + $0x14] sm:$0xf]
      %v1150 = vld [vmem:[%s1143 + $0x18] sm:$0xf]
      %v1151 = vld [vmem:[%s1143 + $0x1c] sm:$0xf]
      %v1152 = vld [vmem:[%s1143 + $0x20] sm:$0xf]
      %v1153 = vld [vmem:[%s1143 + $0x24] sm:$0xf]
      %v1154 = vld [vmem:[%s1143 + $0x28] sm:$0xf]
      %v1155 = vld [vmem:[%s1143 + $0x2c] sm:$0xf]
      %v1156 = vld [vmem:[%s1143 + $0x30] sm:$0xf]
      %v1157 = vld [vmem:[%s1143 + $0x34] sm:$0xf]
      %v1158 = vld [vmem:[%s1143 + $0x38] sm:$0xf]
      %v1159 = vld [vmem:[%s1143 + $0x3c] sm:$0xf]
      %v1175 = vunpack.c.l.b16 %v1128
      %v1176 = vunpack.c.l.b16 %v1129
      %v1177 = vunpack.c.l.b16 %v1130
      %v1178 = vunpack.c.l.b16 %v1131
      %v1179 = vunpack.c.l.b16 %v1132
      %v1180 = vunpack.c.l.b16 %v1133
      %v1181 = vunpack.c.l.b16 %v1134
      %v1182 = vunpack.c.l.b16 %v1135
      %v1183 = vunpack.c.l.b16 %v1136
      %v1184 = vunpack.c.l.b16 %v1137
      %v1185 = vunpack.c.l.b16 %v1138
      %v1186 = vunpack.c.l.b16 %v1139
      %v1187 = vunpack.c.l.b16 %v1140
      %v1188 = vunpack.c.l.b16 %v1141
      %v1189 = vunpack.c.l.b16 %v1142
      %v1190 = vpack.c.b16 %v1176, %v1175
      %v1191 = vpack.c.b16 %v1178, %v1177
      %v1192 = vpack.c.b16 %v1180, %v1179
      %v1193 = vpack.c.b16 %v1182, %v1181
      %v1194 = vpack.c.b16 %v1184, %v1183
      %v1195 = vpack.c.b16 %v1186, %v1185
      %v1196 = vpack.c.b16 %v1188, %v1187
      %v1197 = vpack.c.b16 %v1189, %v1189
      %vm1198 = vcmask 1046528
      %v1199 = vrot.slane %v1190, 1
      %v1200 = vrot.slane %v1191, 1
      %v1201 = vsel %vm1198, %v1199, %v1200
      %v1202 = vrot.slane %v1192, 1
      %v1203 = vsel %vm1198, %v1200, %v1202
      %v1204 = vrot.slane %v1193, 1
      %v1205 = vsel %vm1198, %v1202, %v1204
      %v1206 = vrot.slane %v1194, 1
      %v1207 = vsel %vm1198, %v1204, %v1206
      %v1208 = vrot.slane %v1195, 1
      %v1209 = vsel %vm1198, %v1206, %v1208
      %v1210 = vrot.slane %v1196, 1
      %v1211 = vsel %vm1198, %v1208, %v1210
      %v1212 = vrot.slane %v1197, 1
      %v1213 = vsel %vm1198, %v1210, %v1212
      %v1237 = vunpack.c.l.b16 %v1144
      %v1238 = vunpack.c.l.b16 %v1145
      %v1239 = vunpack.c.l.b16 %v1146
      %v1240 = vunpack.c.l.b16 %v1147
      %v1241 = vunpack.c.l.b16 %v1148
      %v1242 = vunpack.c.l.b16 %v1149
      %v1243 = vunpack.c.l.b16 %v1150
      %v1244 = vunpack.c.l.b16 %v1151
      %v1245 = vunpack.c.l.b16 %v1152
      %v1246 = vunpack.c.l.b16 %v1153
      %v1247 = vunpack.c.l.b16 %v1154
      %v1248 = vunpack.c.l.b16 %v1155
      %v1249 = vunpack.c.l.b16 %v1156
      %v1250 = vunpack.c.l.b16 %v1157
      %v1251 = vunpack.c.l.b16 %v1158
      %v1252 = vunpack.c.l.b16 %v1159
      %v1253 = vpack.c.b16 %v1238, %v1237
      %v1254 = vpack.c.b16 %v1240, %v1239
      %v1255 = vpack.c.b16 %v1242, %v1241
      %v1256 = vpack.c.b16 %v1244, %v1243
      %v1257 = vpack.c.b16 %v1246, %v1245
      %v1258 = vpack.c.b16 %v1248, %v1247
      %v1259 = vpack.c.b16 %v1250, %v1249
      %v1260 = vpack.c.b16 %v1252, %v1251
      %1269 = vmatprep.subr.bf16.mxu0 0
      %1270 = vmatpush1.bf16.msra.mxu0 %v1253
      %1271 = vmatprep.subr.bf16.mxu0 0
      %1272 = vmatpush1.bf16.msra.mxu0 %v1254
      %1273 = vmatprep.subr.bf16.mxu0 0
      %1274 = vmatpush1.bf16.msra.mxu0 %v1255
      %1275 = vmatprep.subr.bf16.mxu0 0
      %1276 = vmatpush1.bf16.msra.mxu0 %v1256
      %1277 = vmatprep.subr.bf16.mxu0 0
      %1278 = vmatpush1.bf16.msra.mxu0 %v1257
      %1279 = vmatprep.subr.bf16.mxu0 0
      %1280 = vmatpush1.bf16.msra.mxu0 %v1258
      %1281 = vmatprep.subr.bf16.mxu0 0
      %1282 = vmatpush1.bf16.msra.mxu0 %v1259
      %1283 = vmatprep.subr.bf16.mxu0 0
      %1284 = vmatpush1.bf16.msra.mxu0 %v1260
      %1285 = vmatprep.subr.bf16.mxu0 0
      %1286 = vmatpush1.bf16.msra.mxu0 0
      %1287 = vmatprep.subr.bf16.mxu0 0
      %1288 = vmatpush1.bf16.msra.mxu0 0
      %1289 = vmatprep.subr.bf16.mxu0 0
      %1290 = vmatpush1.bf16.msra.mxu0 0
      %1291 = vmatprep.subr.bf16.mxu0 0
      %1292 = vmatpush1.bf16.msra.mxu0 0
      %1293 = vmatprep.subr.bf16.mxu0 0
      %1294 = vmatpush1.bf16.msra.mxu0 0
      %1295 = vmatprep.subr.bf16.mxu0 0
      %1296 = vmatpush1.bf16.msra.mxu0 0
      %1297 = vmatprep.subr.bf16.mxu0 0
      %1298 = vmatpush1.bf16.msra.mxu0 0
      %1299 = vmatprep.subr.bf16.mxu0 0
      %1300 = vmatpush1.bf16.msra.mxu0 0
      %1301 = vmatprep.mubr.bf16.mxu0 0
      %1302 = vmatmul.mubr.bf16.gmra.mrb[0].mxu0 %v1201
      %v1303 = vpop.f32.mrb[0].mxu0
      %v1304 = vadd.f32 0.0, %v1303
      %v1305 = vpop.f32.mrb[0].mxu0
      %v1306 = vpop.f32.mrb[0].mxu0
      %v1307 = vadd.f32 0.0, %v1306
      %v1308 = vpop.f32.mrb[0].mxu0
      %1309 = vmatprep.mubr.bf16.mxu0 0
      %1310 = vmatmul.mubr.bf16.gmra.mrb[0].mxu0 %v1203
      %v1311 = vpop.f32.mrb[0].mxu0
      %v1312 = vadd.f32 0.0, %v1311
      %v1313 = vpop.f32.mrb[0].mxu0
      %v1314 = vpop.f32.mrb[0].mxu0
      %v1315 = vadd.f32 0.0, %v1314
      %v1316 = vpop.f32.mrb[0].mxu0
      %1317 = vmatprep.mubr.bf16.mxu0 0
      %1318 = vmatmul.mubr.bf16.gmra.mrb[0].mxu0 %v1205
      %v1319 = vpop.f32.mrb[0].mxu0
      %v1320 = vadd.f32 0.0, %v1319
      %v1321 = vpop.f32.mrb[0].mxu0
      %v1322 = vpop.f32.mrb[0].mxu0
      %v1323 = vadd.f32 0.0, %v1322
      %v1324 = vpop.f32.mrb[0].mxu0
      %1325 = vmatprep.mubr.bf16.mxu0 0
      %1326 = vmatmul.mubr.bf16.gmra.mrb[0].mxu0 %v1207
      %v1327 = vpop.f32.mrb[0].mxu0
      %v1328 = vadd.f32 0.0, %v1327
      %v1329 = vpop.f32.mrb[0].mxu0
      %v1330 = vpop.f32.mrb[0].mxu0
      %v1331 = vadd.f32 0.0, %v1330
      %v1332 = vpop.f32.mrb[0].mxu0
      %1333 = vmatprep.mubr.bf16.mxu0 0
      %1334 = vmatmul.mubr.bf16.gmra.mrb[0].mxu0 %v1209
      %v1335 = vpop.f32.mrb[0].mxu0
      %v1336 = vadd.f32 0.0, %v1335
      %v1337 = vpop.f32.mrb[0].mxu0
      %v1338 = vpop.f32.mrb[0].mxu0
      %v1339 = vadd.f32 0.0, %v1338
      %v1340 = vpop.f32.mrb[0].mxu0
      %1341 = vmatprep.mubr.bf16.mxu0 0
      %1342 = vmatmul.mubr.bf16.gmra.mrb[0].mxu0 %v1211
      %v1343 = vpop.f32.mrb[0].mxu0
      %v1344 = vadd.f32 0.0, %v1343
      %v1345 = vpop.f32.mrb[0].mxu0
      %v1346 = vpop.f32.mrb[0].mxu0
      %v1347 = vadd.f32 0.0, %v1346
      %v1348 = vpop.f32.mrb[0].mxu0
      %1349 = vmatprep.mubr.bf16.mxu0 0
      %1350 = vmatmul.mubr.bf16.gmra.mrb[0].mxu0 %v1213
      %v1351 = vpop.f32.mrb[0].mxu0
      %v1352 = vadd.f32 0.0, %v1351
      %v1353 = vpop.f32.mrb[0].mxu0
      %v1354 = vpop.f32.mrb[0].mxu0
      %v1355 = vadd.f32 0.0, %v1354
      %v1356 = vpop.f32.mrb[0].mxu0
      %1357 = vdwg.mxu0
      %v1358 = vadd.f32 %v1114, %v1304
      %v1359 = vadd.f32 %v1115, %v1307
      %v1360 = vadd.f32 %v1116, %v1312
      %v1361 = vadd.f32 %v1117, %v1315
      %v1362 = vadd.f32 %v1118, %v1320
      %v1363 = vadd.f32 %v1119, %v1323
      %v1364 = vadd.f32 %v1120, %v1328
      %v1365 = vadd.f32 %v1121, %v1331
      %v1366 = vadd.f32 %v1122, %v1336
      %v1367 = vadd.f32 %v1123, %v1339
      %v1368 = vadd.f32 %v1124, %v1344
      %v1369 = vadd.f32 %v1125, %v1347
      %v1370 = vadd.f32 %v1126, %v1352
      %v1371 = vadd.f32 %v1127, %v1355
      %1372 = vst [vmem:[#allocation2] sm:$0xff] %v1358
      %1373 = vst [vmem:[#allocation2 + $0x8] sm:$0xff] %v1359
      %1374 = vst [vmem:[#allocation2 + $0x10] sm:$0xff] %v1360
      %1375 = vst [vmem:[#allocation2 + $0x18] sm:$0xff] %v1361
      %1376 = vst [vmem:[#allocation2 + $0x20] sm:$0xff] %v1362
      %1377 = vst [vmem:[#allocation2 + $0x28] sm:$0xff] %v1363
      %1378 = vst [vmem:[#allocation2 + $0x30] sm:$0xff] %v1364
      %1379 = vst [vmem:[#allocation2 + $0x38] sm:$0xff] %v1365
      %1380 = vst [vmem:[#allocation2 + $0x40] sm:$0xff] %v1366
      %1381 = vst [vmem:[#allocation2 + $0x48] sm:$0xff] %v1367
      %1382 = vst [vmem:[#allocation2 + $0x50] sm:$0xff] %v1368
      %1383 = vst [vmem:[#allocation2 + $0x58] sm:$0xff] %v1369
      %1384 = vst [vmem:[#allocation2 + $0x60] sm:$0xff] %v1370
      %1385 = vst [vmem:[#allocation2 + $0x68] sm:$0xff] %v1371
      %v1386 = vld [vmem:[#allocation2] sm:$0xff]
      %v1387 = vld [vmem:[#allocation2 + $0x8] sm:$0xff]
      %v1388 = vld [vmem:[#allocation2 + $0x10] sm:$0xff]
      %v1389 = vld [vmem:[#allocation2 + $0x18] sm:$0xff]
      %v1390 = vld [vmem:[#allocation2 + $0x20] sm:$0xff]
      %v1391 = vld [vmem:[#allocation2 + $0x28] sm:$0xff]
      %v1392 = vld [vmem:[#allocation2 + $0x30] sm:$0xff]
      %v1393 = vld [vmem:[#allocation2 + $0x38] sm:$0xff]
      %v1394 = vld [vmem:[#allocation2 + $0x40] sm:$0xff]
      %v1395 = vld [vmem:[#allocation2 + $0x48] sm:$0xff]
      %v1396 = vld [vmem:[#allocation2 + $0x50] sm:$0xff]
      %v1397 = vld [vmem:[#allocation2 + $0x58] sm:$0xff]
      %v1398 = vld [vmem:[#allocation2 + $0x60] sm:$0xff]
      %v1399 = vld [vmem:[#allocation2 + $0x68] sm:$0xff]
      %v1400 = vld [vmem:[%s288 + $0x4] sm:$0xe]
      %v1401 = vld [vmem:[%s288 + $0x8] sm:$0xf]
      %v1402 = vld [vmem:[%s288 + $0xc] sm:$0xf]
      %v1403 = vld [vmem:[%s288 + $0x10] sm:$0xf]
      %v1404 = vld [vmem:[%s288 + $0x14] sm:$0xf]
      %v1405 = vld [vmem:[%s288 + $0x18] sm:$0xf]
      %v1406 = vld [vmem:[%s288 + $0x1c] sm:$0xf]
      %v1407 = vld [vmem:[%s288 + $0x20] sm:$0xf]
      %v1408 = vld [vmem:[%s288 + $0x24] sm:$0xf]
      %v1409 = vld [vmem:[%s288 + $0x28] sm:$0xf]
      %v1410 = vld [vmem:[%s288 + $0x2c] sm:$0xf]
      %v1411 = vld [vmem:[%s288 + $0x30] sm:$0xf]
      %v1412 = vld [vmem:[%s288 + $0x34] sm:$0xf]
      %v1413 = vld [vmem:[%s288 + $0x38] sm:$0xf]
      %v1414 = vld [vmem:[%s288 + $0x3c] sm:$0x1]
      %s1415 = scalar_lea.vmem %s292, 192
      %v1416 = vld [vmem:[%s1415] sm:$0xf]
      %v1417 = vld [vmem:[%s1415 + $0x4] sm:$0xf]
      %v1418 = vld [vmem:[%s1415 + $0x8] sm:$0xf]
      %v1419 = vld [vmem:[%s1415 + $0xc] sm:$0xf]
      %v1420 = vld [vmem:[%s1415 + $0x10] sm:$0xf]
      %v1421 = vld [vmem:[%s1415 + $0x14] sm:$0xf]
      %v1422 = vld [vmem:[%s1415 + $0x18] sm:$0xf]
      %v1423 = vld [vmem:[%s1415 + $0x1c] sm:$0xf]
      %v1424 = vld [vmem:[%s1415 + $0x20] sm:$0xf]
      %v1425 = vld [vmem:[%s1415 + $0x24] sm:$0xf]
      %v1426 = vld [vmem:[%s1415 + $0x28] sm:$0xf]
      %v1427 = vld [vmem:[%s1415 + $0x2c] sm:$0xf]
      %v1428 = vld [vmem:[%s1415 + $0x30] sm:$0xf]
      %v1429 = vld [vmem:[%s1415 + $0x34] sm:$0xf]
      %v1430 = vld [vmem:[%s1415 + $0x38] sm:$0xf]
      %v1431 = vld [vmem:[%s1415 + $0x3c] sm:$0xf]
      %v1447 = vunpack.c.l.b16 %v1400
      %v1448 = vunpack.c.l.b16 %v1401
      %v1449 = vunpack.c.l.b16 %v1402
      %v1450 = vunpack.c.l.b16 %v1403
      %v1451 = vunpack.c.l.b16 %v1404
      %v1452 = vunpack.c.l.b16 %v1405
      %v1453 = vunpack.c.l.b16 %v1406
      %v1454 = vunpack.c.l.b16 %v1407
      %v1455 = vunpack.c.l.b16 %v1408
      %v1456 = vunpack.c.l.b16 %v1409
      %v1457 = vunpack.c.l.b16 %v1410
      %v1458 = vunpack.c.l.b16 %v1411
      %v1459 = vunpack.c.l.b16 %v1412
      %v1460 = vunpack.c.l.b16 %v1413
      %v1461 = vunpack.c.l.b16 %v1414
      %v1462 = vpack.c.b16 %v1448, %v1447
      %v1463 = vpack.c.b16 %v1450, %v1449
      %v1464 = vpack.c.b16 %v1452, %v1451
      %v1465 = vpack.c.b16 %v1454, %v1453
      %v1466 = vpack.c.b16 %v1456, %v1455
      %v1467 = vpack.c.b16 %v1458, %v1457
      %v1468 = vpack.c.b16 %v1460, %v1459
      %v1469 = vpack.c.b16 %v1461, %v1461
      %v1470 = vrot.slane %v1462, 1
      %v1471 = vrot.slane %v1463, 1
      %v1472 = vsel %vm1198, %v1470, %v1471
      %v1473 = vrot.slane %v1464, 1
      %v1474 = vsel %vm1198, %v1471, %v1473
      %v1475 = vrot.slane %v1465, 1
      %v1476 = vsel %vm1198, %v1473, %v1475
      %v1477 = vrot.slane %v1466, 1
      %v1478 = vsel %vm1198, %v1475, %v1477
      %v1479 = vrot.slane %v1467, 1
      %v1480 = vsel %vm1198, %v1477, %v1479
      %v1481 = vrot.slane %v1468, 1
      %v1482 = vsel %vm1198, %v1479, %v1481
      %v1483 = vrot.slane %v1469, 1
      %v1484 = vsel %vm1198, %v1481, %v1483
      %v1508 = vunpack.c.l.b16 %v1416
      %v1509 = vunpack.c.l.b16 %v1417
      %v1510 = vunpack.c.l.b16 %v1418
      %v1511 = vunpack.c.l.b16 %v1419
      %v1512 = vunpack.c.l.b16 %v1420
      %v1513 = vunpack.c.l.b16 %v1421
      %v1514 = vunpack.c.l.b16 %v1422
      %v1515 = vunpack.c.l.b16 %v1423
      %v1516 = vunpack.c.l.b16 %v1424
      %v1517 = vunpack.c.l.b16 %v1425
      %v1518 = vunpack.c.l.b16 %v1426
      %v1519 = vunpack.c.l.b16 %v1427
      %v1520 = vunpack.c.l.b16 %v1428
      %v1521 = vunpack.c.l.b16 %v1429
      %v1522 = vunpack.c.l.b16 %v1430
      %v1523 = vunpack.c.l.b16 %v1431
      %v1524 = vpack.c.b16 %v1509, %v1508
      %v1525 = vpack.c.b16 %v1511, %v1510
      %v1526 = vpack.c.b16 %v1513, %v1512
      %v1527 = vpack.c.b16 %v1515, %v1514
      %v1528 = vpack.c.b16 %v1517, %v1516
      %v1529 = vpack.c.b16 %v1519, %v1518
      %v1530 = vpack.c.b16 %v1521, %v1520
      %v1531 = vpack.c.b16 %v1523, %v1522
      %1540 = vmatprep.subr.bf16.mxu0 0
      %1541 = vmatpush1.bf16.msra.mxu0 %v1524
      %1542 = vmatprep.subr.bf16.mxu0 0
      %1543 = vmatpush1.bf16.msra.mxu0 %v1525
      %1544 = vmatprep.subr.bf16.mxu0 0
      %1545 = vmatpush1.bf16.msra.mxu0 %v1526
      %1546 = vmatprep.subr.bf16.mxu0 0
      %1547 = vmatpush1.bf16.msra.mxu0 %v1527
      %1548 = vmatprep.subr.bf16.mxu0 0
      %1549 = vmatpush1.bf16.msra.mxu0 %v1528
      %1550 = vmatprep.subr.bf16.mxu0 0
      %1551 = vmatpush1.bf16.msra.mxu0 %v1529
      %1552 = vmatprep.subr.bf16.mxu0 0
      %1553 = vmatpush1.bf16.msra.mxu0 %v1530
      %1554 = vmatprep.subr.bf16.mxu0 0
      %1555 = vmatpush1.bf16.msra.mxu0 %v1531
      %1556 = vmatprep.subr.bf16.mxu0 0
      %1557 = vmatpush1.bf16.msra.mxu0 0
      %1558 = vmatprep.subr.bf16.mxu0 0
      %1559 = vmatpush1.bf16.msra.mxu0 0
      %1560 = vmatprep.subr.bf16.mxu0 0
      %1561 = vmatpush1.bf16.msra.mxu0 0
      %1562 = vmatprep.subr.bf16.mxu0 0
      %1563 = vmatpush1.bf16.msra.mxu0 0
      %1564 = vmatprep.subr.bf16.mxu0 0
      %1565 = vmatpush1.bf16.msra.mxu0 0
      %1566 = vmatprep.subr.bf16.mxu0 0
      %1567 = vmatpush1.bf16.msra.mxu0 0
      %1568 = vmatprep.subr.bf16.mxu0 0
      %1569 = vmatpush1.bf16.msra.mxu0 0
      %1570 = vmatprep.subr.bf16.mxu0 0
      %1571 = vmatpush1.bf16.msra.mxu0 0
      %1572 = vmatprep.mubr.bf16.mxu0 0
      %1573 = vmatmul.mubr.bf16.gmra.mrb[0].mxu0 %v1472
      %v1574 = vpop.f32.mrb[0].mxu0
      %v1575 = vadd.f32 0.0, %v1574
      %v1576 = vpop.f32.mrb[0].mxu0
      %v1577 = vpop.f32.mrb[0].mxu0
      %v1578 = vadd.f32 0.0, %v1577
      %v1579 = vpop.f32.mrb[0].mxu0
      %1580 = vmatprep.mubr.bf16.mxu0 0
      %1581 = vmatmul.mubr.bf16.gmra.mrb[0].mxu0 %v1474
      %v1582 = vpop.f32.mrb[0].mxu0
      %v1583 = vadd.f32 0.0, %v1582
      %v1584 = vpop.f32.mrb[0].mxu0
      %v1585 = vpop.f32.mrb[0].mxu0
      %v1586 = vadd.f32 0.0, %v1585
      %v1587 = vpop.f32.mrb[0].mxu0
      %1588 = vmatprep.mubr.bf16.mxu0 0
      %1589 = vmatmul.mubr.bf16.gmra.mrb[0].mxu0 %v1476
      %v1590 = vpop.f32.mrb[0].mxu0
      %v1591 = vadd.f32 0.0, %v1590
      %v1592 = vpop.f32.mrb[0].mxu0
      %v1593 = vpop.f32.mrb[0].mxu0
      %v1594 = vadd.f32 0.0, %v1593
      %v1595 = vpop.f32.mrb[0].mxu0
      %1596 = vmatprep.mubr.bf16.mxu0 0
      %1597 = vmatmul.mubr.bf16.gmra.mrb[0].mxu0 %v1478
      %v1598 = vpop.f32.mrb[0].mxu0
      %v1599 = vadd.f32 0.0, %v1598
      %v1600 = vpop.f32.mrb[0].mxu0
      %v1601 = vpop.f32.mrb[0].mxu0
      %v1602 = vadd.f32 0.0, %v1601
      %v1603 = vpop.f32.mrb[0].mxu0
      %1604 = vmatprep.mubr.bf16.mxu0 0
      %1605 = vmatmul.mubr.bf16.gmra.mrb[0].mxu0 %v1480
      %v1606 = vpop.f32.mrb[0].mxu0
      %v1607 = vadd.f32 0.0, %v1606
      %v1608 = vpop.f32.mrb[0].mxu0
      %v1609 = vpop.f32.mrb[0].mxu0
      %v1610 = vadd.f32 0.0, %v1609
      %v1611 = vpop.f32.mrb[0].mxu0
      %1612 = vmatprep.mubr.bf16.mxu0 0
      %1613 = vmatmul.mubr.bf16.gmra.mrb[0].mxu0 %v1482
      %v1614 = vpop.f32.mrb[0].mxu0
      %v1615 = vadd.f32 0.0, %v1614
      %v1616 = vpop.f32.mrb[0].mxu0
      %v1617 = vpop.f32.mrb[0].mxu0
      %v1618 = vadd.f32 0.0, %v1617
      %v1619 = vpop.f32.mrb[0].mxu0
      %1620 = vmatprep.mubr.bf16.mxu0 0
      %1621 = vmatmul.mubr.bf16.gmra.mrb[0].mxu0 %v1484
      %v1622 = vpop.f32.mrb[0].mxu0
      %v1623 = vadd.f32 0.0, %v1622
      %v1624 = vpop.f32.mrb[0].mxu0
      %v1625 = vpop.f32.mrb[0].mxu0
      %v1626 = vadd.f32 0.0, %v1625
      %v1627 = vpop.f32.mrb[0].mxu0
      %1628 = vdwg.mxu0
      %v1629 = vadd.f32 %v1386, %v1575
      %v1630 = vadd.f32 %v1387, %v1578
      %v1631 = vadd.f32 %v1388, %v1583
      %v1632 = vadd.f32 %v1389, %v1586
      %v1633 = vadd.f32 %v1390, %v1591
      %v1634 = vadd.f32 %v1391, %v1594
      %v1635 = vadd.f32 %v1392, %v1599
      %v1636 = vadd.f32 %v1393, %v1602
      %v1637 = vadd.f32 %v1394, %v1607
      %v1638 = vadd.f32 %v1395, %v1610
      %v1639 = vadd.f32 %v1396, %v1615
      %v1640 = vadd.f32 %v1397, %v1618
      %v1641 = vadd.f32 %v1398, %v1623
      %v1642 = vadd.f32 %v1399, %v1626
      %1643 = vst [vmem:[#allocation2] sm:$0xff] %v1629
      %1644 = vst [vmem:[#allocation2 + $0x8] sm:$0xff] %v1630
      %1645 = vst [vmem:[#allocation2 + $0x10] sm:$0xff] %v1631
      %1646 = vst [vmem:[#allocation2 + $0x18] sm:$0xff] %v1632
      %1647 = vst [vmem:[#allocation2 + $0x20] sm:$0xff] %v1633
      %1648 = vst [vmem:[#allocation2 + $0x28] sm:$0xff] %v1634
      %1649 = vst [vmem:[#allocation2 + $0x30] sm:$0xff] %v1635
      %1650 = vst [vmem:[#allocation2 + $0x38] sm:$0xff] %v1636
      %1651 = vst [vmem:[#allocation2 + $0x40] sm:$0xff] %v1637
      %1652 = vst [vmem:[#allocation2 + $0x48] sm:$0xff] %v1638
      %1653 = vst [vmem:[#allocation2 + $0x50] sm:$0xff] %v1639
      %1654 = vst [vmem:[#allocation2 + $0x58] sm:$0xff] %v1640
      %1655 = vst [vmem:[#allocation2 + $0x60] sm:$0xff] %v1641
      %1656 = vst [vmem:[#allocation2 + $0x68] sm:$0xff] %v1642
      %v1657 = vld [vmem:[#allocation2] sm:$0xff]
      %v1658 = vld [vmem:[#allocation2 + $0x8] sm:$0xff]
      %v1659 = vld [vmem:[#allocation2 + $0x10] sm:$0xff]
      %v1660 = vld [vmem:[#allocation2 + $0x18] sm:$0xff]
      %v1661 = vld [vmem:[#allocation2 + $0x20] sm:$0xff]
      %v1662 = vld [vmem:[#allocation2 + $0x28] sm:$0xff]
      %v1663 = vld [vmem:[#allocation2 + $0x30] sm:$0xff]
      %v1664 = vld [vmem:[#allocation2 + $0x38] sm:$0xff]
      %v1665 = vld [vmem:[#allocation2 + $0x40] sm:$0xff]
      %v1666 = vld [vmem:[#allocation2 + $0x48] sm:$0xff]
      %v1667 = vld [vmem:[#allocation2 + $0x50] sm:$0xff]
      %v1668 = vld [vmem:[#allocation2 + $0x58] sm:$0xff]
      %v1669 = vld [vmem:[#allocation2 + $0x60] sm:$0xff]
      %v1670 = vld [vmem:[#allocation2 + $0x68] sm:$0xff]
      %v1671 = vld [vmem:[%s288 + $0x4] sm:$0xe]
      %v1672 = vld [vmem:[%s288 + $0x8] sm:$0xf]
      %v1673 = vld [vmem:[%s288 + $0xc] sm:$0xf]
      %v1674 = vld [vmem:[%s288 + $0x10] sm:$0xf]
      %v1675 = vld [vmem:[%s288 + $0x14] sm:$0xf]
      %v1676 = vld [vmem:[%s288 + $0x18] sm:$0xf]
      %v1677 = vld [vmem:[%s288 + $0x1c] sm:$0xf]
      %v1678 = vld [vmem:[%s288 + $0x20] sm:$0xf]
      %v1679 = vld [vmem:[%s288 + $0x24] sm:$0xf]
      %v1680 = vld [vmem:[%s288 + $0x28] sm:$0xf]
      %v1681 = vld [vmem:[%s288 + $0x2c] sm:$0xf]
      %v1682 = vld [vmem:[%s288 + $0x30] sm:$0xf]
      %v1683 = vld [vmem:[%s288 + $0x34] sm:$0xf]
      %v1684 = vld [vmem:[%s288 + $0x38] sm:$0xf]
      %v1685 = vld [vmem:[%s288 + $0x3c] sm:$0x3]
      %s1686 = scalar_lea.vmem %s292, 256
      %v1687 = vld [vmem:[%s1686] sm:$0xf]
      %v1688 = vld [vmem:[%s1686 + $0x4] sm:$0xf]
      %v1689 = vld [vmem:[%s1686 + $0x8] sm:$0xf]
      %v1690 = vld [vmem:[%s1686 + $0xc] sm:$0xf]
      %v1691 = vld [vmem:[%s1686 + $0x10] sm:$0xf]
      %v1692 = vld [vmem:[%s1686 + $0x14] sm:$0xf]
      %v1693 = vld [vmem:[%s1686 + $0x18] sm:$0xf]
      %v1694 = vld [vmem:[%s1686 + $0x1c] sm:$0xf]
      %v1695 = vld [vmem:[%s1686 + $0x20] sm:$0xf]
      %v1696 = vld [vmem:[%s1686 + $0x24] sm:$0xf]
      %v1697 = vld [vmem:[%s1686 + $0x28] sm:$0xf]
      %v1698 = vld [vmem:[%s1686 + $0x2c] sm:$0xf]
      %v1699 = vld [vmem:[%s1686 + $0x30] sm:$0xf]
      %v1700 = vld [vmem:[%s1686 + $0x34] sm:$0xf]
      %v1701 = vld [vmem:[%s1686 + $0x38] sm:$0xf]
      %v1702 = vld [vmem:[%s1686 + $0x3c] sm:$0xf]
      %v1718 = vunpack.c.l.b16 %v1671
      %v1719 = vunpack.c.l.b16 %v1672
      %v1720 = vunpack.c.l.b16 %v1673
      %v1721 = vunpack.c.l.b16 %v1674
      %v1722 = vunpack.c.l.b16 %v1675
      %v1723 = vunpack.c.l.b16 %v1676
      %v1724 = vunpack.c.l.b16 %v1677
      %v1725 = vunpack.c.l.b16 %v1678
      %v1726 = vunpack.c.l.b16 %v1679
      %v1727 = vunpack.c.l.b16 %v1680
      %v1728 = vunpack.c.l.b16 %v1681
      %v1729 = vunpack.c.l.b16 %v1682
      %v1730 = vunpack.c.l.b16 %v1683
      %v1731 = vunpack.c.l.b16 %v1684
      %v1732 = vunpack.c.l.b16 %v1685
      %v1733 = vpack.c.b16 %v1719, %v1718
      %v1734 = vpack.c.b16 %v1721, %v1720
      %v1735 = vpack.c.b16 %v1723, %v1722
      %v1736 = vpack.c.b16 %v1725, %v1724
      %v1737 = vpack.c.b16 %v1727, %v1726
      %v1738 = vpack.c.b16 %v1729, %v1728
      %v1739 = vpack.c.b16 %v1731, %v1730
      %v1740 = vpack.c.b16 %v1732, %v1732
      %vm1741 = vsmask.f32 6400
      %v1743 = vshrl.u32 %v1733, 16
      %v1745 = vrot.slane %v1743, 1
      %v1746 = vshll.u32 %v1733, 16
      %v1748 = vrot.slane %v1746, 2
      %v1749 = vor.u32 %v1745, %v1748
      %v1751 = vshrl.u32 %v1734, 16
      %v1753 = vrot.slane %v1751, 1
      %v1754 = vshll.u32 %v1734, 16
      %v1756 = vrot.slane %v1754, 2
      %v1757 = vor.u32 %v1753, %v1756
      %v1758 = vsel %vm1741, %v1749, %v1757
      %v1760 = vshrl.u32 %v1735, 16
      %v1762 = vrot.slane %v1760, 1
      %v1763 = vshll.u32 %v1735, 16
      %v1765 = vrot.slane %v1763, 2
      %v1766 = vor.u32 %v1762, %v1765
      %v1767 = vsel %vm1741, %v1757, %v1766
      %v1769 = vshrl.u32 %v1736, 16
      %v1771 = vrot.slane %v1769, 1
      %v1772 = vshll.u32 %v1736, 16
      %v1774 = vrot.slane %v1772, 2
      %v1775 = vor.u32 %v1771, %v1774
      %v1776 = vsel %vm1741, %v1766, %v1775
      %v1778 = vshrl.u32 %v1737, 16
      %v1780 = vrot.slane %v1778, 1
      %v1781 = vshll.u32 %v1737, 16
      %v1783 = vrot.slane %v1781, 2
      %v1784 = vor.u32 %v1780, %v1783
      %v1785 = vsel %vm1741, %v1775, %v1784
      %v1787 = vshrl.u32 %v1738, 16
      %v1789 = vrot.slane %v1787, 1
      %v1790 = vshll.u32 %v1738, 16
      %v1792 = vrot.slane %v1790, 2
      %v1793 = vor.u32 %v1789, %v1792
      %v1794 = vsel %vm1741, %v1784, %v1793
      %v1796 = vshrl.u32 %v1739, 16
      %v1798 = vrot.slane %v1796, 1
      %v1799 = vshll.u32 %v1739, 16
      %v1801 = vrot.slane %v1799, 2
      %v1802 = vor.u32 %v1798, %v1801
      %v1803 = vsel %vm1741, %v1793, %v1802
      %v1805 = vshrl.u32 %v1740, 16
      %v1807 = vrot.slane %v1805, 1
      %v1808 = vshll.u32 %v1740, 16
      %v1810 = vrot.slane %v1808, 2
      %v1811 = vor.u32 %v1807, %v1810
      %v1812 = vsel %vm1741, %v1802, %v1811
      %v1836 = vunpack.c.l.b16 %v1687
      %v1837 = vunpack.c.l.b16 %v1688
      %v1838 = vunpack.c.l.b16 %v1689
      %v1839 = vunpack.c.l.b16 %v1690
      %v1840 = vunpack.c.l.b16 %v1691
      %v1841 = vunpack.c.l.b16 %v1692
      %v1842 = vunpack.c.l.b16 %v1693
      %v1843 = vunpack.c.l.b16 %v1694
      %v1844 = vunpack.c.l.b16 %v1695
      %v1845 = vunpack.c.l.b16 %v1696
      %v1846 = vunpack.c.l.b16 %v1697
      %v1847 = vunpack.c.l.b16 %v1698
      %v1848 = vunpack.c.l.b16 %v1699
      %v1849 = vunpack.c.l.b16 %v1700
      %v1850 = vunpack.c.l.b16 %v1701
      %v1851 = vunpack.c.l.b16 %v1702
      %v1852 = vpack.c.b16 %v1837, %v1836
      %v1853 = vpack.c.b16 %v1839, %v1838
      %v1854 = vpack.c.b16 %v1841, %v1840
      %v1855 = vpack.c.b16 %v1843, %v1842
      %v1856 = vpack.c.b16 %v1845, %v1844
      %v1857 = vpack.c.b16 %v1847, %v1846
      %v1858 = vpack.c.b16 %v1849, %v1848
      %v1859 = vpack.c.b16 %v1851, %v1850
      %1868 = vmatprep.subr.bf16.mxu0 0
      %1869 = vmatpush1.bf16.msra.mxu0 %v1852
      %1870 = vmatprep.subr.bf16.mxu0 0
      %1871 = vmatpush1.bf16.msra.mxu0 %v1853
      %1872 = vmatprep.subr.bf16.mxu0 0
      %1873 = vmatpush1.bf16.msra.mxu0 %v1854
      %1874 = vmatprep.subr.bf16.mxu0 0
      %1875 = vmatpush1.bf16.msra.mxu0 %v1855
      %1876 = vmatprep.subr.bf16.mxu0 0
      %1877 = vmatpush1.bf16.msra.mxu0 %v1856
      %1878 = vmatprep.subr.bf16.mxu0 0
      %1879 = vmatpush1.bf16.msra.mxu0 %v1857
      %1880 = vmatprep.subr.bf16.mxu0 0
      %1881 = vmatpush1.bf16.msra.mxu0 %v1858
      %1882 = vmatprep.subr.bf16.mxu0 0
      %1883 = vmatpush1.bf16.msra.mxu0 %v1859
      %1884 = vmatprep.subr.bf16.mxu0 0
      %1885 = vmatpush1.bf16.msra.mxu0 0
      %1886 = vmatprep.subr.bf16.mxu0 0
      %1887 = vmatpush1.bf16.msra.mxu0 0
      %1888 = vmatprep.subr.bf16.mxu0 0
      %1889 = vmatpush1.bf16.msra.mxu0 0
      %1890 = vmatprep.subr.bf16.mxu0 0
      %1891 = vmatpush1.bf16.msra.mxu0 0
      %1892 = vmatprep.subr.bf16.mxu0 0
      %1893 = vmatpush1.bf16.msra.mxu0 0
      %1894 = vmatprep.subr.bf16.mxu0 0
      %1895 = vmatpush1.bf16.msra.mxu0 0
      %1896 = vmatprep.subr.bf16.mxu0 0
      %1897 = vmatpush1.bf16.msra.mxu0 0
      %1898 = vmatprep.subr.bf16.mxu0 0
      %1899 = vmatpush1.bf16.msra.mxu0 0
      %1900 = vmatprep.mubr.bf16.mxu0 0
      %1901 = vmatmul.mubr.bf16.gmra.mrb[0].mxu0 %v1758
      %v1902 = vpop.f32.mrb[0].mxu0
      %v1903 = vadd.f32 0.0, %v1902
      %v1904 = vpop.f32.mrb[0].mxu0
      %v1905 = vpop.f32.mrb[0].mxu0
      %v1906 = vadd.f32 0.0, %v1905
      %v1907 = vpop.f32.mrb[0].mxu0
      %1908 = vmatprep.mubr.bf16.mxu0 0
      %1909 = vmatmul.mubr.bf16.gmra.mrb[0].mxu0 %v1767
      %v1910 = vpop.f32.mrb[0].mxu0
      %v1911 = vadd.f32 0.0, %v1910
      %v1912 = vpop.f32.mrb[0].mxu0
      %v1913 = vpop.f32.mrb[0].mxu0
      %v1914 = vadd.f32 0.0, %v1913
      %v1915 = vpop.f32.mrb[0].mxu0
      %1916 = vmatprep.mubr.bf16.mxu0 0
      %1917 = vmatmul.mubr.bf16.gmra.mrb[0].mxu0 %v1776
      %v1918 = vpop.f32.mrb[0].mxu0
      %v1919 = vadd.f32 0.0, %v1918
      %v1920 = vpop.f32.mrb[0].mxu0
      %v1921 = vpop.f32.mrb[0].mxu0
      %v1922 = vadd.f32 0.0, %v1921
      %v1923 = vpop.f32.mrb[0].mxu0
      %1924 = vmatprep.mubr.bf16.mxu0 0
      %1925 = vmatmul.mubr.bf16.gmra.mrb[0].mxu0 %v1785
      %v1926 = vpop.f32.mrb[0].mxu0
      %v1927 = vadd.f32 0.0, %v1926
      %v1928 = vpop.f32.mrb[0].mxu0
      %v1929 = vpop.f32.mrb[0].mxu0
      %v1930 = vadd.f32 0.0, %v1929
      %v1931 = vpop.f32.mrb[0].mxu0
      %1932 = vmatprep.mubr.bf16.mxu0 0
      %1933 = vmatmul.mubr.bf16.gmra.mrb[0].mxu0 %v1794
      %v1934 = vpop.f32.mrb[0].mxu0
      %v1935 = vadd.f32 0.0, %v1934
      %v1936 = vpop.f32.mrb[0].mxu0
      %v1937 = vpop.f32.mrb[0].mxu0
      %v1938 = vadd.f32 0.0, %v1937
      %v1939 = vpop.f32.mrb[0].mxu0
      %1940 = vmatprep.mubr.bf16.mxu0 0
      %1941 = vmatmul.mubr.bf16.gmra.mrb[0].mxu0 %v1803
      %v1942 = vpop.f32.mrb[0].mxu0
      %v1943 = vadd.f32 0.0, %v1942
      %v1944 = vpop.f32.mrb[0].mxu0
      %v1945 = vpop.f32.mrb[0].mxu0
      %v1946 = vadd.f32 0.0, %v1945
      %v1947 = vpop.f32.mrb[0].mxu0
      %1948 = vmatprep.mubr.bf16.mxu0 0
      %1949 = vmatmul.mubr.bf16.gmra.mrb[0].mxu0 %v1812
      %v1950 = vpop.f32.mrb[0].mxu0
      %v1951 = vadd.f32 0.0, %v1950
      %v1952 = vpop.f32.mrb[0].mxu0
      %v1953 = vpop.f32.mrb[0].mxu0
      %v1954 = vadd.f32 0.0, %v1953
      %v1955 = vpop.f32.mrb[0].mxu0
      %1956 = vdwg.mxu0
      %v1957 = vadd.f32 %v1657, %v1903
      %v1958 = vadd.f32 %v1658, %v1906
      %v1959 = vadd.f32 %v1659, %v1911
      %v1960 = vadd.f32 %v1660, %v1914
      %v1961 = vadd.f32 %v1661, %v1919
      %v1962 = vadd.f32 %v1662, %v1922
      %v1963 = vadd.f32 %v1663, %v1927
      %v1964 = vadd.f32 %v1664, %v1930
      %v1965 = vadd.f32 %v1665, %v1935
      %v1966 = vadd.f32 %v1666, %v1938
      %v1967 = vadd.f32 %v1667, %v1943
      %v1968 = vadd.f32 %v1668, %v1946
      %v1969 = vadd.f32 %v1669, %v1951
      %v1970 = vadd.f32 %v1670, %v1954
      %1971 = vst [vmem:[#allocation2] sm:$0xff] %v1957
      %1972 = vst [vmem:[#allocation2 + $0x8] sm:$0xff] %v1958
      %1973 = vst [vmem:[#allocation2 + $0x10] sm:$0xff] %v1959
      %1974 = vst [vmem:[#allocation2 + $0x18] sm:$0xff] %v1960
      %1975 = vst [vmem:[#allocation2 + $0x20] sm:$0xff] %v1961
      %1976 = vst [vmem:[#allocation2 + $0x28] sm:$0xff] %v1962
      %1977 = vst [vmem:[#allocation2 + $0x30] sm:$0xff] %v1963
      %1978 = vst [vmem:[#allocation2 + $0x38] sm:$0xff] %v1964
      %1979 = vst [vmem:[#allocation2 + $0x40] sm:$0xff] %v1965
      %1980 = vst [vmem:[#allocation2 + $0x48] sm:$0xff] %v1966
      %1981 = vst [vmem:[#allocation2 + $0x50] sm:$0xff] %v1967
      %1982 = vst [vmem:[#allocation2 + $0x58] sm:$0xff] %v1968
      %1983 = vst [vmem:[#allocation2 + $0x60] sm:$0xff] %v1969
      %1984 = vst [vmem:[#allocation2 + $0x68] sm:$0xff] %v1970
      %v1985 = vld [vmem:[#allocation2] sm:$0xff]
      %v1986 = vld [vmem:[#allocation2 + $0x8] sm:$0xff]
      %v1987 = vld [vmem:[#allocation2 + $0x10] sm:$0xff]
      %v1988 = vld [vmem:[#allocation2 + $0x18] sm:$0xff]
      %v1989 = vld [vmem:[#allocation2 + $0x20] sm:$0xff]
      %v1990 = vld [vmem:[#allocation2 + $0x28] sm:$0xff]
      %v1991 = vld [vmem:[#allocation2 + $0x30] sm:$0xff]
      %v1992 = vld [vmem:[#allocation2 + $0x38] sm:$0xff]
      %v1993 = vld [vmem:[#allocation2 + $0x40] sm:$0xff]
      %v1994 = vld [vmem:[#allocation2 + $0x48] sm:$0xff]
      %v1995 = vld [vmem:[#allocation2 + $0x50] sm:$0xff]
      %v1996 = vld [vmem:[#allocation2 + $0x58] sm:$0xff]
      %v1997 = vld [vmem:[#allocation2 + $0x60] sm:$0xff]
      %v1998 = vld [vmem:[#allocation2 + $0x68] sm:$0xff]
      %v1999 = vld [vmem:[%s288 + $0x4] sm:$0xc]
      %v2000 = vld [vmem:[%s288 + $0x8] sm:$0xf]
      %v2001 = vld [vmem:[%s288 + $0xc] sm:$0xf]
      %v2002 = vld [vmem:[%s288 + $0x10] sm:$0xf]
      %v2003 = vld [vmem:[%s288 + $0x14] sm:$0xf]
      %v2004 = vld [vmem:[%s288 + $0x18] sm:$0xf]
      %v2005 = vld [vmem:[%s288 + $0x1c] sm:$0xf]
      %v2006 = vld [vmem:[%s288 + $0x20] sm:$0xf]
      %v2007 = vld [vmem:[%s288 + $0x24] sm:$0xf]
      %v2008 = vld [vmem:[%s288 + $0x28] sm:$0xf]
      %v2009 = vld [vmem:[%s288 + $0x2c] sm:$0xf]
      %v2010 = vld [vmem:[%s288 + $0x30] sm:$0xf]
      %v2011 = vld [vmem:[%s288 + $0x34] sm:$0xf]
      %v2012 = vld [vmem:[%s288 + $0x38] sm:$0xf]
      %v2013 = vld [vmem:[%s288 + $0x3c] sm:$0x3]
      %s2014 = scalar_lea.vmem %s292, 320
      %v2015 = vld [vmem:[%s2014] sm:$0xf]
      %v2016 = vld [vmem:[%s2014 + $0x4] sm:$0xf]
      %v2017 = vld [vmem:[%s2014 + $0x8] sm:$0xf]
      %v2018 = vld [vmem:[%s2014 + $0xc] sm:$0xf]
      %v2019 = vld [vmem:[%s2014 + $0x10] sm:$0xf]
      %v2020 = vld [vmem:[%s2014 + $0x14] sm:$0xf]
      %v2021 = vld [vmem:[%s2014 + $0x18] sm:$0xf]
      %v2022 = vld [vmem:[%s2014 + $0x1c] sm:$0xf]
      %v2023 = vld [vmem:[%s2014 + $0x20] sm:$0xf]
      %v2024 = vld [vmem:[%s2014 + $0x24] sm:$0xf]
      %v2025 = vld [vmem:[%s2014 + $0x28] sm:$0xf]
      %v2026 = vld [vmem:[%s2014 + $0x2c] sm:$0xf]
      %v2027 = vld [vmem:[%s2014 + $0x30] sm:$0xf]
      %v2028 = vld [vmem:[%s2014 + $0x34] sm:$0xf]
      %v2029 = vld [vmem:[%s2014 + $0x38] sm:$0xf]
      %v2030 = vld [vmem:[%s2014 + $0x3c] sm:$0xf]
      %v2046 = vunpack.c.l.b16 %v1999
      %v2047 = vunpack.c.l.b16 %v2000
      %v2048 = vunpack.c.l.b16 %v2001
      %v2049 = vunpack.c.l.b16 %v2002
      %v2050 = vunpack.c.l.b16 %v2003
      %v2051 = vunpack.c.l.b16 %v2004
      %v2052 = vunpack.c.l.b16 %v2005
      %v2053 = vunpack.c.l.b16 %v2006
      %v2054 = vunpack.c.l.b16 %v2007
      %v2055 = vunpack.c.l.b16 %v2008
      %v2056 = vunpack.c.l.b16 %v2009
      %v2057 = vunpack.c.l.b16 %v2010
      %v2058 = vunpack.c.l.b16 %v2011
      %v2059 = vunpack.c.l.b16 %v2012
      %v2060 = vunpack.c.l.b16 %v2013
      %v2061 = vpack.c.b16 %v2047, %v2046
      %v2062 = vpack.c.b16 %v2049, %v2048
      %v2063 = vpack.c.b16 %v2051, %v2050
      %v2064 = vpack.c.b16 %v2053, %v2052
      %v2065 = vpack.c.b16 %v2055, %v2054
      %v2066 = vpack.c.b16 %v2057, %v2056
      %v2067 = vpack.c.b16 %v2059, %v2058
      %v2068 = vpack.c.b16 %v2060, %v2060
      %vm2069 = vcmask 1045504
      %v2070 = vrot.slane %v2061, 2
      %v2071 = vrot.slane %v2062, 2
      %v2072 = vsel %vm2069, %v2070, %v2071
      %v2073 = vrot.slane %v2063, 2
      %v2074 = vsel %vm2069, %v2071, %v2073
      %v2075 = vrot.slane %v2064, 2
      %v2076 = vsel %vm2069, %v2073, %v2075
      %v2077 = vrot.slane %v2065, 2
      %v2078 = vsel %vm2069, %v2075, %v2077
      %v2079 = vrot.slane %v2066, 2
      %v2080 = vsel %vm2069, %v2077, %v2079
      %v2081 = vrot.slane %v2067, 2
      %v2082 = vsel %vm2069, %v2079, %v2081
      %v2083 = vrot.slane %v2068, 2
      %v2084 = vsel %vm2069, %v2081, %v2083
      %v2108 = vunpack.c.l.b16 %v2015
      %v2109 = vunpack.c.l.b16 %v2016
      %v2110 = vunpack.c.l.b16 %v2017
      %v2111 = vunpack.c.l.b16 %v2018
      %v2112 = vunpack.c.l.b16 %v2019
      %v2113 = vunpack.c.l.b16 %v2020
      %v2114 = vunpack.c.l.b16 %v2021
      %v2115 = vunpack.c.l.b16 %v2022
      %v2116 = vunpack.c.l.b16 %v2023
      %v2117 = vunpack.c.l.b16 %v2024
      %v2118 = vunpack.c.l.b16 %v2025
      %v2119 = vunpack.c.l.b16 %v2026
      %v2120 = vunpack.c.l.b16 %v2027
      %v2121 = vunpack.c.l.b16 %v2028
      %v2122 = vunpack.c.l.b16 %v2029
      %v2123 = vunpack.c.l.b16 %v2030
      %v2124 = vpack.c.b16 %v2109, %v2108
      %v2125 = vpack.c.b16 %v2111, %v2110
      %v2126 = vpack.c.b16 %v2113, %v2112
      %v2127 = vpack.c.b16 %v2115, %v2114
      %v2128 = vpack.c.b16 %v2117, %v2116
      %v2129 = vpack.c.b16 %v2119, %v2118
      %v2130 = vpack.c.b16 %v2121, %v2120
      %v2131 = vpack.c.b16 %v2123, %v2122
      %2140 = vmatprep.subr.bf16.mxu0 0
      %2141 = vmatpush1.bf16.msra.mxu0 %v2124
      %2142 = vmatprep.subr.bf16.mxu0 0
      %2143 = vmatpush1.bf16.msra.mxu0 %v2125
      %2144 = vmatprep.subr.bf16.mxu0 0
      %2145 = vmatpush1.bf16.msra.mxu0 %v2126
      %2146 = vmatprep.subr.bf16.mxu0 0
      %2147 = vmatpush1.bf16.msra.mxu0 %v2127
      %2148 = vmatprep.subr.bf16.mxu0 0
      %2149 = vmatpush1.bf16.msra.mxu0 %v2128
      %2150 = vmatprep.subr.bf16.mxu0 0
      %2151 = vmatpush1.bf16.msra.mxu0 %v2129
      %2152 = vmatprep.subr.bf16.mxu0 0
      %2153 = vmatpush1.bf16.msra.mxu0 %v2130
      %2154 = vmatprep.subr.bf16.mxu0 0
      %2155 = vmatpush1.bf16.msra.mxu0 %v2131
      %2156 = vmatprep.subr.bf16.mxu0 0
      %2157 = vmatpush1.bf16.msra.mxu0 0
      %2158 = vmatprep.subr.bf16.mxu0 0
      %2159 = vmatpush1.bf16.msra.mxu0 0
      %2160 = vmatprep.subr.bf16.mxu0 0
      %2161 = vmatpush1.bf16.msra.mxu0 0
      %2162 = vmatprep.subr.bf16.mxu0 0
      %2163 = vmatpush1.bf16.msra.mxu0 0
      %2164 = vmatprep.subr.bf16.mxu0 0
      %2165 = vmatpush1.bf16.msra.mxu0 0
      %2166 = vmatprep.subr.bf16.mxu0 0
      %2167 = vmatpush1.bf16.msra.mxu0 0
      %2168 = vmatprep.subr.bf16.mxu0 0
      %2169 = vmatpush1.bf16.msra.mxu0 0
      %2170 = vmatprep.subr.bf16.mxu0 0
      %2171 = vmatpush1.bf16.msra.mxu0 0
      %2172 = vmatprep.mubr.bf16.mxu0 0
      %2173 = vmatmul.mubr.bf16.gmra.mrb[0].mxu0 %v2072
      %v2174 = vpop.f32.mrb[0].mxu0
      %v2175 = vadd.f32 0.0, %v2174
      %v2176 = vpop.f32.mrb[0].mxu0
      %v2177 = vpop.f32.mrb[0].mxu0
      %v2178 = vadd.f32 0.0, %v2177
      %v2179 = vpop.f32.mrb[0].mxu0
      %2180 = vmatprep.mubr.bf16.mxu0 0
      %2181 = vmatmul.mubr.bf16.gmra.mrb[0].mxu0 %v2074
      %v2182 = vpop.f32.mrb[0].mxu0
      %v2183 = vadd.f32 0.0, %v2182
      %v2184 = vpop.f32.mrb[0].mxu0
      %v2185 = vpop.f32.mrb[0].mxu0
      %v2186 = vadd.f32 0.0, %v2185
      %v2187 = vpop.f32.mrb[0].mxu0
      %2188 = vmatprep.mubr.bf16.mxu0 0
      %2189 = vmatmul.mubr.bf16.gmra.mrb[0].mxu0 %v2076
      %v2190 = vpop.f32.mrb[0].mxu0
      %v2191 = vadd.f32 0.0, %v2190
      %v2192 = vpop.f32.mrb[0].mxu0
      %v2193 = vpop.f32.mrb[0].mxu0
      %v2194 = vadd.f32 0.0, %v2193
      %v2195 = vpop.f32.mrb[0].mxu0
      %2196 = vmatprep.mubr.bf16.mxu0 0
      %2197 = vmatmul.mubr.bf16.gmra.mrb[0].mxu0 %v2078
      %v2198 = vpop.f32.mrb[0].mxu0
      %v2199 = vadd.f32 0.0, %v2198
      %v2200 = vpop.f32.mrb[0].mxu0
      %v2201 = vpop.f32.mrb[0].mxu0
      %v2202 = vadd.f32 0.0, %v2201
      %v2203 = vpop.f32.mrb[0].mxu0
      %2204 = vmatprep.mubr.bf16.mxu0 0
      %2205 = vmatmul.mubr.bf16.gmra.mrb[0].mxu0 %v2080
      %v2206 = vpop.f32.mrb[0].mxu0
      %v2207 = vadd.f32 0.0, %v2206
      %v2208 = vpop.f32.mrb[0].mxu0
      %v2209 = vpop.f32.mrb[0].mxu0
      %v2210 = vadd.f32 0.0, %v2209
      %v2211 = vpop.f32.mrb[0].mxu0
      %2212 = vmatprep.mubr.bf16.mxu0 0
      %2213 = vmatmul.mubr.bf16.gmra.mrb[0].mxu0 %v2082
      %v2214 = vpop.f32.mrb[0].mxu0
      %v2215 = vadd.f32 0.0, %v2214
      %v2216 = vpop.f32.mrb[0].mxu0
      %v2217 = vpop.f32.mrb[0].mxu0
      %v2218 = vadd.f32 0.0, %v2217
      %v2219 = vpop.f32.mrb[0].mxu0
      %2220 = vmatprep.mubr.bf16.mxu0 0
      %2221 = vmatmul.mubr.bf16.gmra.mrb[0].mxu0 %v2084
      %v2222 = vpop.f32.mrb[0].mxu0
      %v2223 = vadd.f32 0.0, %v2222
      %v2224 = vpop.f32.mrb[0].mxu0
      %v2225 = vpop.f32.mrb[0].mxu0
      %v2226 = vadd.f32 0.0, %v2225
      %v2227 = vpop.f32.mrb[0].mxu0
      %2228 = vdwg.mxu0
      %v2229 = vadd.f32 %v1985, %v2175
      %v2230 = vadd.f32 %v1986, %v2178
      %v2231 = vadd.f32 %v1987, %v2183
      %v2232 = vadd.f32 %v1988, %v2186
      %v2233 = vadd.f32 %v1989, %v2191
      %v2234 = vadd.f32 %v1990, %v2194
      %v2235 = vadd.f32 %v1991, %v2199
      %v2236 = vadd.f32 %v1992, %v2202
      %v2237 = vadd.f32 %v1993, %v2207
      %v2238 = vadd.f32 %v1994, %v2210
      %v2239 = vadd.f32 %v1995, %v2215
      %v2240 = vadd.f32 %v1996, %v2218
      %v2241 = vadd.f32 %v1997, %v2223
      %v2242 = vadd.f32 %v1998, %v2226
      %2243 = vst [vmem:[#allocation2] sm:$0xff] %v2229
      %2244 = vst [vmem:[#allocation2 + $0x8] sm:$0xff] %v2230
      %2245 = vst [vmem:[#allocation2 + $0x10] sm:$0xff] %v2231
      %2246 = vst [vmem:[#allocation2 + $0x18] sm:$0xff] %v2232
      %2247 = vst [vmem:[#allocation2 + $0x20] sm:$0xff] %v2233
      %2248 = vst [vmem:[#allocation2 + $0x28] sm:$0xff] %v2234
      %2249 = vst [vmem:[#allocation2 + $0x30] sm:$0xff] %v2235
      %2250 = vst [vmem:[#allocation2 + $0x38] sm:$0xff] %v2236
      %2251 = vst [vmem:[#allocation2 + $0x40] sm:$0xff] %v2237
      %2252 = vst [vmem:[#allocation2 + $0x48] sm:$0xff] %v2238
      %2253 = vst [vmem:[#allocation2 + $0x50] sm:$0xff] %v2239
      %2254 = vst [vmem:[#allocation2 + $0x58] sm:$0xff] %v2240
      %2255 = vst [vmem:[#allocation2 + $0x60] sm:$0xff] %v2241
      %2256 = vst [vmem:[#allocation2 + $0x68] sm:$0xff] %v2242
      %v2257 = vld [vmem:[#allocation2] sm:$0xff]
      %v2258 = vld [vmem:[#allocation2 + $0x8] sm:$0xff]
      %v2259 = vld [vmem:[#allocation2 + $0x10] sm:$0xff]
      %v2260 = vld [vmem:[#allocation2 + $0x18] sm:$0xff]
      %v2261 = vld [vmem:[#allocation2 + $0x20] sm:$0xff]
      %v2262 = vld [vmem:[#allocation2 + $0x28] sm:$0xff]
      %v2263 = vld [vmem:[#allocation2 + $0x30] sm:$0xff]
      %v2264 = vld [vmem:[#allocation2 + $0x38] sm:$0xff]
      %v2265 = vld [vmem:[#allocation2 + $0x40] sm:$0xff]
      %v2266 = vld [vmem:[#allocation2 + $0x48] sm:$0xff]
      %v2267 = vld [vmem:[#allocation2 + $0x50] sm:$0xff]
      %v2268 = vld [vmem:[#allocation2 + $0x58] sm:$0xff]
      %v2269 = vld [vmem:[#allocation2 + $0x60] sm:$0xff]
      %v2270 = vld [vmem:[#allocation2 + $0x68] sm:$0xff]
      %v2271 = vld [vmem:[%s288 + $0x8] sm:$0xc]
      %v2272 = vld [vmem:[%s288 + $0xc] sm:$0xf]
      %v2273 = vld [vmem:[%s288 + $0x10] sm:$0xf]
      %v2274 = vld [vmem:[%s288 + $0x14] sm:$0xf]
      %v2275 = vld [vmem:[%s288 + $0x18] sm:$0xf]
      %v2276 = vld [vmem:[%s288 + $0x1c] sm:$0xf]
      %v2277 = vld [vmem:[%s288 + $0x20] sm:$0xf]
      %v2278 = vld [vmem:[%s288 + $0x24] sm:$0xf]
      %v2279 = vld [vmem:[%s288 + $0x28] sm:$0xf]
      %v2280 = vld [vmem:[%s288 + $0x2c] sm:$0xf]
      %v2281 = vld [vmem:[%s288 + $0x30] sm:$0xf]
      %v2282 = vld [vmem:[%s288 + $0x34] sm:$0xf]
      %v2283 = vld [vmem:[%s288 + $0x38] sm:$0xf]
      %v2284 = vld [vmem:[%s288 + $0x3c] sm:$0xf]
      %v2285 = vld [vmem:[%s288 + $0x40] sm:$0x3]
      %s2286 = scalar_lea.vmem %s292, 384
      %v2287 = vld [vmem:[%s2286] sm:$0xf]
      %v2288 = vld [vmem:[%s2286 + $0x4] sm:$0xf]
      %v2289 = vld [vmem:[%s2286 + $0x8] sm:$0xf]
      %v2290 = vld [vmem:[%s2286 + $0xc] sm:$0xf]
      %v2291 = vld [vmem:[%s2286 + $0x10] sm:$0xf]
      %v2292 = vld [vmem:[%s2286 + $0x14] sm:$0xf]
      %v2293 = vld [vmem:[%s2286 + $0x18] sm:$0xf]
      %v2294 = vld [vmem:[%s2286 + $0x1c] sm:$0xf]
      %v2295 = vld [vmem:[%s2286 + $0x20] sm:$0xf]
      %v2296 = vld [vmem:[%s2286 + $0x24] sm:$0xf]
      %v2297 = vld [vmem:[%s2286 + $0x28] sm:$0xf]
      %v2298 = vld [vmem:[%s2286 + $0x2c] sm:$0xf]
      %v2299 = vld [vmem:[%s2286 + $0x30] sm:$0xf]
      %v2300 = vld [vmem:[%s2286 + $0x34] sm:$0xf]
      %v2301 = vld [vmem:[%s2286 + $0x38] sm:$0xf]
      %v2302 = vld [vmem:[%s2286 + $0x3c] sm:$0xf]
      %v2318 = vunpack.c.l.b16 %v2271
      %v2319 = vunpack.c.l.b16 %v2272
      %v2320 = vunpack.c.l.b16 %v2273
      %v2321 = vunpack.c.l.b16 %v2274
      %v2322 = vunpack.c.l.b16 %v2275
      %v2323 = vunpack.c.l.b16 %v2276
      %v2324 = vunpack.c.l.b16 %v2277
      %v2325 = vunpack.c.l.b16 %v2278
      %v2326 = vunpack.c.l.b16 %v2279
      %v2327 = vunpack.c.l.b16 %v2280
      %v2328 = vunpack.c.l.b16 %v2281
      %v2329 = vunpack.c.l.b16 %v2282
      %v2330 = vunpack.c.l.b16 %v2283
      %v2331 = vunpack.c.l.b16 %v2284
      %v2332 = vunpack.c.l.b16 %v2285
      %v2333 = vpack.c.b16 %v2319, %v2318
      %v2334 = vpack.c.b16 %v2321, %v2320
      %v2335 = vpack.c.b16 %v2323, %v2322
      %v2336 = vpack.c.b16 %v2325, %v2324
      %v2337 = vpack.c.b16 %v2327, %v2326
      %v2338 = vpack.c.b16 %v2329, %v2328
      %v2339 = vpack.c.b16 %v2331, %v2330
      %v2340 = vpack.c.b16 %v2332, %v2332
      %v2341 = vrot.slane %v2333, 2
      %v2342 = vrot.slane %v2334, 2
      %v2343 = vsel %vm2069, %v2341, %v2342
      %v2344 = vrot.slane %v2335, 2
      %v2345 = vsel %vm2069, %v2342, %v2344
      %v2346 = vrot.slane %v2336, 2
      %v2347 = vsel %vm2069, %v2344, %v2346
      %v2348 = vrot.slane %v2337, 2
      %v2349 = vsel %vm2069, %v2346, %v2348
      %v2350 = vrot.slane %v2338, 2
      %v2351 = vsel %vm2069, %v2348, %v2350
      %v2352 = vrot.slane %v2339, 2
      %v2353 = vsel %vm2069, %v2350, %v2352
      %v2354 = vrot.slane %v2340, 2
      %v2355 = vsel %vm2069, %v2352, %v2354
      %v2379 = vunpack.c.l.b16 %v2287
      %v2380 = vunpack.c.l.b16 %v2288
      %v2381 = vunpack.c.l.b16 %v2289
      %v2382 = vunpack.c.l.b16 %v2290
      %v2383 = vunpack.c.l.b16 %v2291
      %v2384 = vunpack.c.l.b16 %v2292
      %v2385 = vunpack.c.l.b16 %v2293
      %v2386 = vunpack.c.l.b16 %v2294
      %v2387 = vunpack.c.l.b16 %v2295
      %v2388 = vunpack.c.l.b16 %v2296
      %v2389 = vunpack.c.l.b16 %v2297
      %v2390 = vunpack.c.l.b16 %v2298
      %v2391 = vunpack.c.l.b16 %v2299
      %v2392 = vunpack.c.l.b16 %v2300
      %v2393 = vunpack.c.l.b16 %v2301
      %v2394 = vunpack.c.l.b16 %v2302
      %v2395 = vpack.c.b16 %v2380, %v2379
      %v2396 = vpack.c.b16 %v2382, %v2381
      %v2397 = vpack.c.b16 %v2384, %v2383
      %v2398 = vpack.c.b16 %v2386, %v2385
      %v2399 = vpack.c.b16 %v2388, %v2387
      %v2400 = vpack.c.b16 %v2390, %v2389
      %v2401 = vpack.c.b16 %v2392, %v2391
      %v2402 = vpack.c.b16 %v2394, %v2393
      %2411 = vmatprep.subr.bf16.mxu0 0
      %2412 = vmatpush1.bf16.msra.mxu0 %v2395
      %2413 = vmatprep.subr.bf16.mxu0 0
      %2414 = vmatpush1.bf16.msra.mxu0 %v2396
      %2415 = vmatprep.subr.bf16.mxu0 0
      %2416 = vmatpush1.bf16.msra.mxu0 %v2397
      %2417 = vmatprep.subr.bf16.mxu0 0
      %2418 = vmatpush1.bf16.msra.mxu0 %v2398
      %2419 = vmatprep.subr.bf16.mxu0 0
      %2420 = vmatpush1.bf16.msra.mxu0 %v2399
      %2421 = vmatprep.subr.bf16.mxu0 0
      %2422 = vmatpush1.bf16.msra.mxu0 %v2400
      %2423 = vmatprep.subr.bf16.mxu0 0
      %2424 = vmatpush1.bf16.msra.mxu0 %v2401
      %2425 = vmatprep.subr.bf16.mxu0 0
      %2426 = vmatpush1.bf16.msra.mxu0 %v2402
      %2427 = vmatprep.subr.bf16.mxu0 0
      %2428 = vmatpush1.bf16.msra.mxu0 0
      %2429 = vmatprep.subr.bf16.mxu0 0
      %2430 = vmatpush1.bf16.msra.mxu0 0
      %2431 = vmatprep.subr.bf16.mxu0 0
      %2432 = vmatpush1.bf16.msra.mxu0 0
      %2433 = vmatprep.subr.bf16.mxu0 0
      %2434 = vmatpush1.bf16.msra.mxu0 0
      %2435 = vmatprep.subr.bf16.mxu0 0
      %2436 = vmatpush1.bf16.msra.mxu0 0
      %2437 = vmatprep.subr.bf16.mxu0 0
      %2438 = vmatpush1.bf16.msra.mxu0 0
      %2439 = vmatprep.subr.bf16.mxu0 0
      %2440 = vmatpush1.bf16.msra.mxu0 0
      %2441 = vmatprep.subr.bf16.mxu0 0
      %2442 = vmatpush1.bf16.msra.mxu0 0
      %2443 = vmatprep.mubr.bf16.mxu0 0
      %2444 = vmatmul.mubr.bf16.gmra.mrb[0].mxu0 %v2343
      %v2445 = vpop.f32.mrb[0].mxu0
      %v2446 = vadd.f32 0.0, %v2445
      %v2447 = vpop.f32.mrb[0].mxu0
      %v2448 = vpop.f32.mrb[0].mxu0
      %v2449 = vadd.f32 0.0, %v2448
      %v2450 = vpop.f32.mrb[0].mxu0
      %2451 = vmatprep.mubr.bf16.mxu0 0
      %2452 = vmatmul.mubr.bf16.gmra.mrb[0].mxu0 %v2345
      %v2453 = vpop.f32.mrb[0].mxu0
      %v2454 = vadd.f32 0.0, %v2453
      %v2455 = vpop.f32.mrb[0].mxu0
      %v2456 = vpop.f32.mrb[0].mxu0
      %v2457 = vadd.f32 0.0, %v2456
      %v2458 = vpop.f32.mrb[0].mxu0
      %2459 = vmatprep.mubr.bf16.mxu0 0
      %2460 = vmatmul.mubr.bf16.gmra.mrb[0].mxu0 %v2347
      %v2461 = vpop.f32.mrb[0].mxu0
      %v2462 = vadd.f32 0.0, %v2461
      %v2463 = vpop.f32.mrb[0].mxu0
      %v2464 = vpop.f32.mrb[0].mxu0
      %v2465 = vadd.f32 0.0, %v2464
      %v2466 = vpop.f32.mrb[0].mxu0
      %2467 = vmatprep.mubr.bf16.mxu0 0
      %2468 = vmatmul.mubr.bf16.gmra.mrb[0].mxu0 %v2349
      %v2469 = vpop.f32.mrb[0].mxu0
      %v2470 = vadd.f32 0.0, %v2469
      %v2471 = vpop.f32.mrb[0].mxu0
      %v2472 = vpop.f32.mrb[0].mxu0
      %v2473 = vadd.f32 0.0, %v2472
      %v2474 = vpop.f32.mrb[0].mxu0
      %2475 = vmatprep.mubr.bf16.mxu0 0
      %2476 = vmatmul.mubr.bf16.gmra.mrb[0].mxu0 %v2351
      %v2477 = vpop.f32.mrb[0].mxu0
      %v2478 = vadd.f32 0.0, %v2477
      %v2479 = vpop.f32.mrb[0].mxu0
      %v2480 = vpop.f32.mrb[0].mxu0
      %v2481 = vadd.f32 0.0, %v2480
      %v2482 = vpop.f32.mrb[0].mxu0
      %2483 = vmatprep.mubr.bf16.mxu0 0
      %2484 = vmatmul.mubr.bf16.gmra.mrb[0].mxu0 %v2353
      %v2485 = vpop.f32.mrb[0].mxu0
      %v2486 = vadd.f32 0.0, %v2485
      %v2487 = vpop.f32.mrb[0].mxu0
      %v2488 = vpop.f32.mrb[0].mxu0
      %v2489 = vadd.f32 0.0, %v2488
      %v2490 = vpop.f32.mrb[0].mxu0
      %2491 = vmatprep.mubr.bf16.mxu0 0
      %2492 = vmatmul.mubr.bf16.gmra.mrb[0].mxu0 %v2355
      %v2493 = vpop.f32.mrb[0].mxu0
      %v2494 = vadd.f32 0.0, %v2493
      %v2495 = vpop.f32.mrb[0].mxu0
      %v2496 = vpop.f32.mrb[0].mxu0
      %v2497 = vadd.f32 0.0, %v2496
      %v2498 = vpop.f32.mrb[0].mxu0
      %2499 = vdwg.mxu0
      %v2500 = vadd.f32 %v2257, %v2446
      %v2501 = vadd.f32 %v2258, %v2449
      %v2502 = vadd.f32 %v2259, %v2454
      %v2503 = vadd.f32 %v2260, %v2457
      %v2504 = vadd.f32 %v2261, %v2462
      %v2505 = vadd.f32 %v2262, %v2465
      %v2506 = vadd.f32 %v2263, %v2470
      %v2507 = vadd.f32 %v2264, %v2473
      %v2508 = vadd.f32 %v2265, %v2478
      %v2509 = vadd.f32 %v2266, %v2481
      %v2510 = vadd.f32 %v2267, %v2486
      %v2511 = vadd.f32 %v2268, %v2489
      %v2512 = vadd.f32 %v2269, %v2494
      %v2513 = vadd.f32 %v2270, %v2497
      %2514 = vst [vmem:[#allocation2] sm:$0xff] %v2500
      %2515 = vst [vmem:[#allocation2 + $0x8] sm:$0xff] %v2501
      %2516 = vst [vmem:[#allocation2 + $0x10] sm:$0xff] %v2502
      %2517 = vst [vmem:[#allocation2 + $0x18] sm:$0xff] %v2503
      %2518 = vst [vmem:[#allocation2 + $0x20] sm:$0xff] %v2504
      %2519 = vst [vmem:[#allocation2 + $0x28] sm:$0xff] %v2505
      %2520 = vst [vmem:[#allocation2 + $0x30] sm:$0xff] %v2506
      %2521 = vst [vmem:[#allocation2 + $0x38] sm:$0xff] %v2507
      %2522 = vst [vmem:[#allocation2 + $0x40] sm:$0xff] %v2508
      %2523 = vst [vmem:[#allocation2 + $0x48] sm:$0xff] %v2509
      %2524 = vst [vmem:[#allocation2 + $0x50] sm:$0xff] %v2510
      %2525 = vst [vmem:[#allocation2 + $0x58] sm:$0xff] %v2511
      %2526 = vst [vmem:[#allocation2 + $0x60] sm:$0xff] %v2512
      %2527 = vst [vmem:[#allocation2 + $0x68] sm:$0xff] %v2513
      %v2528 = vld [vmem:[#allocation2] sm:$0xff]
      %v2529 = vld [vmem:[#allocation2 + $0x8] sm:$0xff]
      %v2530 = vld [vmem:[#allocation2 + $0x10] sm:$0xff]
      %v2531 = vld [vmem:[#allocation2 + $0x18] sm:$0xff]
      %v2532 = vld [vmem:[#allocation2 + $0x20] sm:$0xff]
      %v2533 = vld [vmem:[#allocation2 + $0x28] sm:$0xff]
      %v2534 = vld [vmem:[#allocation2 + $0x30] sm:$0xff]
      %v2535 = vld [vmem:[#allocation2 + $0x38] sm:$0xff]
      %v2536 = vld [vmem:[#allocation2 + $0x40] sm:$0xff]
      %v2537 = vld [vmem:[#allocation2 + $0x48] sm:$0xff]
      %v2538 = vld [vmem:[#allocation2 + $0x50] sm:$0xff]
      %v2539 = vld [vmem:[#allocation2 + $0x58] sm:$0xff]
      %v2540 = vld [vmem:[#allocation2 + $0x60] sm:$0xff]
      %v2541 = vld [vmem:[#allocation2 + $0x68] sm:$0xff]
      %v2542 = vld [vmem:[%s288 + $0x8] sm:$0xc]
      %v2543 = vld [vmem:[%s288 + $0xc] sm:$0xf]
      %v2544 = vld [vmem:[%s288 + $0x10] sm:$0xf]
      %v2545 = vld [vmem:[%s288 + $0x14] sm:$0xf]
      %v2546 = vld [vmem:[%s288 + $0x18] sm:$0xf]
      %v2547 = vld [vmem:[%s288 + $0x1c] sm:$0xf]
      %v2548 = vld [vmem:[%s288 + $0x20] sm:$0xf]
      %v2549 = vld [vmem:[%s288 + $0x24] sm:$0xf]
      %v2550 = vld [vmem:[%s288 + $0x28] sm:$0xf]
      %v2551 = vld [vmem:[%s288 + $0x2c] sm:$0xf]
      %v2552 = vld [vmem:[%s288 + $0x30] sm:$0xf]
      %v2553 = vld [vmem:[%s288 + $0x34] sm:$0xf]
      %v2554 = vld [vmem:[%s288 + $0x38] sm:$0xf]
      %v2555 = vld [vmem:[%s288 + $0x3c] sm:$0xf]
      %v2556 = vld [vmem:[%s288 + $0x40] sm:$0x7]
      %s2557 = scalar_lea.vmem %s292, 448
      %v2558 = vld [vmem:[%s2557] sm:$0xf]
      %v2559 = vld [vmem:[%s2557 + $0x4] sm:$0xf]
      %v2560 = vld [vmem:[%s2557 + $0x8] sm:$0xf]
      %v2561 = vld [vmem:[%s2557 + $0xc] sm:$0xf]
      %v2562 = vld [vmem:[%s2557 + $0x10] sm:$0xf]
      %v2563 = vld [vmem:[%s2557 + $0x14] sm:$0xf]
      %v2564 = vld [vmem:[%s2557 + $0x18] sm:$0xf]
      %v2565 = vld [vmem:[%s2557 + $0x1c] sm:$0xf]
      %v2566 = vld [vmem:[%s2557 + $0x20] sm:$0xf]
      %v2567 = vld [vmem:[%s2557 + $0x24] sm:$0xf]
      %v2568 = vld [vmem:[%s2557 + $0x28] sm:$0xf]
      %v2569 = vld [vmem:[%s2557 + $0x2c] sm:$0xf]
      %v2570 = vld [vmem:[%s2557 + $0x30] sm:$0xf]
      %v2571 = vld [vmem:[%s2557 + $0x34] sm:$0xf]
      %v2572 = vld [vmem:[%s2557 + $0x38] sm:$0xf]
      %v2573 = vld [vmem:[%s2557 + $0x3c] sm:$0xf]
      %v2589 = vunpack.c.l.b16 %v2542
      %v2590 = vunpack.c.l.b16 %v2543
      %v2591 = vunpack.c.l.b16 %v2544
      %v2592 = vunpack.c.l.b16 %v2545
      %v2593 = vunpack.c.l.b16 %v2546
      %v2594 = vunpack.c.l.b16 %v2547
      %v2595 = vunpack.c.l.b16 %v2548
      %v2596 = vunpack.c.l.b16 %v2549
      %v2597 = vunpack.c.l.b16 %v2550
      %v2598 = vunpack.c.l.b16 %v2551
      %v2599 = vunpack.c.l.b16 %v2552
      %v2600 = vunpack.c.l.b16 %v2553
      %v2601 = vunpack.c.l.b16 %v2554
      %v2602 = vunpack.c.l.b16 %v2555
      %v2603 = vunpack.c.l.b16 %v2556
      %v2604 = vpack.c.b16 %v2590, %v2589
      %v2605 = vpack.c.b16 %v2592, %v2591
      %v2606 = vpack.c.b16 %v2594, %v2593
      %v2607 = vpack.c.b16 %v2596, %v2595
      %v2608 = vpack.c.b16 %v2598, %v2597
      %v2609 = vpack.c.b16 %v2600, %v2599
      %v2610 = vpack.c.b16 %v2602, %v2601
      %v2611 = vpack.c.b16 %v2603, %v2603
      %vm2612 = vsmask.f32 5376
      %v2614 = vshrl.u32 %v2604, 16
      %v2616 = vrot.slane %v2614, 2
      %v2617 = vshll.u32 %v2604, 16
      %v2619 = vrot.slane %v2617, 3
      %v2620 = vor.u32 %v2616, %v2619
      %v2622 = vshrl.u32 %v2605, 16
      %v2624 = vrot.slane %v2622, 2
      %v2625 = vshll.u32 %v2605, 16
      %v2627 = vrot.slane %v2625, 3
      %v2628 = vor.u32 %v2624, %v2627
      %v2629 = vsel %vm2612, %v2620, %v2628
      %v2631 = vshrl.u32 %v2606, 16
      %v2633 = vrot.slane %v2631, 2
      %v2634 = vshll.u32 %v2606, 16
      %v2636 = vrot.slane %v2634, 3
      %v2637 = vor.u32 %v2633, %v2636
      %v2638 = vsel %vm2612, %v2628, %v2637
      %v2640 = vshrl.u32 %v2607, 16
      %v2642 = vrot.slane %v2640, 2
      %v2643 = vshll.u32 %v2607, 16
      %v2645 = vrot.slane %v2643, 3
      %v2646 = vor.u32 %v2642, %v2645
      %v2647 = vsel %vm2612, %v2637, %v2646
      %v2649 = vshrl.u32 %v2608, 16
      %v2651 = vrot.slane %v2649, 2
      %v2652 = vshll.u32 %v2608, 16
      %v2654 = vrot.slane %v2652, 3
      %v2655 = vor.u32 %v2651, %v2654
      %v2656 = vsel %vm2612, %v2646, %v2655
      %v2658 = vshrl.u32 %v2609, 16
      %v2660 = vrot.slane %v2658, 2
      %v2661 = vshll.u32 %v2609, 16
      %v2663 = vrot.slane %v2661, 3
      %v2664 = vor.u32 %v2660, %v2663
      %v2665 = vsel %vm2612, %v2655, %v2664
      %v2667 = vshrl.u32 %v2610, 16
      %v2669 = vrot.slane %v2667, 2
      %v2670 = vshll.u32 %v2610, 16
      %v2672 = vrot.slane %v2670, 3
      %v2673 = vor.u32 %v2669, %v2672
      %v2674 = vsel %vm2612, %v2664, %v2673
      %v2676 = vshrl.u32 %v2611, 16
      %v2678 = vrot.slane %v2676, 2
      %v2679 = vshll.u32 %v2611, 16
      %v2681 = vrot.slane %v2679, 3
      %v2682 = vor.u32 %v2678, %v2681
      %v2683 = vsel %vm2612, %v2673, %v2682
      %v2707 = vunpack.c.l.b16 %v2558
      %v2708 = vunpack.c.l.b16 %v2559
      %v2709 = vunpack.c.l.b16 %v2560
      %v2710 = vunpack.c.l.b16 %v2561
      %v2711 = vunpack.c.l.b16 %v2562
      %v2712 = vunpack.c.l.b16 %v2563
      %v2713 = vunpack.c.l.b16 %v2564
      %v2714 = vunpack.c.l.b16 %v2565
      %v2715 = vunpack.c.l.b16 %v2566
      %v2716 = vunpack.c.l.b16 %v2567
      %v2717 = vunpack.c.l.b16 %v2568
      %v2718 = vunpack.c.l.b16 %v2569
      %v2719 = vunpack.c.l.b16 %v2570
      %v2720 = vunpack.c.l.b16 %v2571
      %v2721 = vunpack.c.l.b16 %v2572
      %v2722 = vunpack.c.l.b16 %v2573
      %v2723 = vpack.c.b16 %v2708, %v2707
      %v2724 = vpack.c.b16 %v2710, %v2709
      %v2725 = vpack.c.b16 %v2712, %v2711
      %v2726 = vpack.c.b16 %v2714, %v2713
      %v2727 = vpack.c.b16 %v2716, %v2715
      %v2728 = vpack.c.b16 %v2718, %v2717
      %v2729 = vpack.c.b16 %v2720, %v2719
      %v2730 = vpack.c.b16 %v2722, %v2721
      %2739 = vmatprep.subr.bf16.mxu0 0
      %2740 = vmatpush1.bf16.msra.mxu0 %v2723
      %2741 = vmatprep.subr.bf16.mxu0 0
      %2742 = vmatpush1.bf16.msra.mxu0 %v2724
      %2743 = vmatprep.subr.bf16.mxu0 0
      %2744 = vmatpush1.bf16.msra.mxu0 %v2725
      %2745 = vmatprep.subr.bf16.mxu0 0
      %2746 = vmatpush1.bf16.msra.mxu0 %v2726
      %2747 = vmatprep.subr.bf16.mxu0 0
      %2748 = vmatpush1.bf16.msra.mxu0 %v2727
      %2749 = vmatprep.subr.bf16.mxu0 0
      %2750 = vmatpush1.bf16.msra.mxu0 %v2728
      %2751 = vmatprep.subr.bf16.mxu0 0
      %2752 = vmatpush1.bf16.msra.mxu0 %v2729
      %2753 = vmatprep.subr.bf16.mxu0 0
      %2754 = vmatpush1.bf16.msra.mxu0 %v2730
      %2755 = vmatprep.subr.bf16.mxu0 0
      %2756 = vmatpush1.bf16.msra.mxu0 0
      %2757 = vmatprep.subr.bf16.mxu0 0
      %2758 = vmatpush1.bf16.msra.mxu0 0
      %2759 = vmatprep.subr.bf16.mxu0 0
      %2760 = vmatpush1.bf16.msra.mxu0 0
      %2761 = vmatprep.subr.bf16.mxu0 0
      %2762 = vmatpush1.bf16.msra.mxu0 0
      %2763 = vmatprep.subr.bf16.mxu0 0
      %2764 = vmatpush1.bf16.msra.mxu0 0
      %2765 = vmatprep.subr.bf16.mxu0 0
      %2766 = vmatpush1.bf16.msra.mxu0 0
      %2767 = vmatprep.subr.bf16.mxu0 0
      %2768 = vmatpush1.bf16.msra.mxu0 0
      %2769 = vmatprep.subr.bf16.mxu0 0
      %2770 = vmatpush1.bf16.msra.mxu0 0
      %2771 = vmatprep.mubr.bf16.mxu0 0
      %2772 = vmatmul.mubr.bf16.gmra.mrb[0].mxu0 %v2629
      %v2773 = vpop.f32.mrb[0].mxu0
      %v2774 = vadd.f32 0.0, %v2773
      %v2775 = vpop.f32.mrb[0].mxu0
      %v2776 = vpop.f32.mrb[0].mxu0
      %v2777 = vadd.f32 0.0, %v2776
      %v2778 = vpop.f32.mrb[0].mxu0
      %2779 = vmatprep.mubr.bf16.mxu0 0
      %2780 = vmatmul.mubr.bf16.gmra.mrb[0].mxu0 %v2638
      %v2781 = vpop.f32.mrb[0].mxu0
      %v2782 = vadd.f32 0.0, %v2781
      %v2783 = vpop.f32.mrb[0].mxu0
      %v2784 = vpop.f32.mrb[0].mxu0
      %v2785 = vadd.f32 0.0, %v2784
      %v2786 = vpop.f32.mrb[0].mxu0
      %2787 = vmatprep.mubr.bf16.mxu0 0
      %2788 = vmatmul.mubr.bf16.gmra.mrb[0].mxu0 %v2647
      %v2789 = vpop.f32.mrb[0].mxu0
      %v2790 = vadd.f32 0.0, %v2789
      %v2791 = vpop.f32.mrb[0].mxu0
      %v2792 = vpop.f32.mrb[0].mxu0
      %v2793 = vadd.f32 0.0, %v2792
      %v2794 = vpop.f32.mrb[0].mxu0
      %2795 = vmatprep.mubr.bf16.mxu0 0
      %2796 = vmatmul.mubr.bf16.gmra.mrb[0].mxu0 %v2656
      %v2797 = vpop.f32.mrb[0].mxu0
      %v2798 = vadd.f32 0.0, %v2797
      %v2799 = vpop.f32.mrb[0].mxu0
      %v2800 = vpop.f32.mrb[0].mxu0
      %v2801 = vadd.f32 0.0, %v2800
      %v2802 = vpop.f32.mrb[0].mxu0
      %2803 = vmatprep.mubr.bf16.mxu0 0
      %2804 = vmatmul.mubr.bf16.gmra.mrb[0].mxu0 %v2665
      %v2805 = vpop.f32.mrb[0].mxu0
      %v2806 = vadd.f32 0.0, %v2805
      %v2807 = vpop.f32.mrb[0].mxu0
      %v2808 = vpop.f32.mrb[0].mxu0
      %v2809 = vadd.f32 0.0, %v2808
      %v2810 = vpop.f32.mrb[0].mxu0
      %2811 = vmatprep.mubr.bf16.mxu0 0
      %2812 = vmatmul.mubr.bf16.gmra.mrb[0].mxu0 %v2674
      %v2813 = vpop.f32.mrb[0].mxu0
      %v2814 = vadd.f32 0.0, %v2813
      %v2815 = vpop.f32.mrb[0].mxu0
      %v2816 = vpop.f32.mrb[0].mxu0
      %v2817 = vadd.f32 0.0, %v2816
      %v2818 = vpop.f32.mrb[0].mxu0
      %2819 = vmatprep.mubr.bf16.mxu0 0
      %2820 = vmatmul.mubr.bf16.gmra.mrb[0].mxu0 %v2683
      %v2821 = vpop.f32.mrb[0].mxu0
      %v2822 = vadd.f32 0.0, %v2821
      %v2823 = vpop.f32.mrb[0].mxu0
      %v2824 = vpop.f32.mrb[0].mxu0
      %v2825 = vadd.f32 0.0, %v2824
      %v2826 = vpop.f32.mrb[0].mxu0
      %2827 = vdwg.mxu0
      %v2828 = vadd.f32 %v2528, %v2774
      %v2829 = vadd.f32 %v2529, %v2777
      %v2830 = vadd.f32 %v2530, %v2782
      %v2831 = vadd.f32 %v2531, %v2785
      %v2832 = vadd.f32 %v2532, %v2790
      %v2833 = vadd.f32 %v2533, %v2793
      %v2834 = vadd.f32 %v2534, %v2798
      %v2835 = vadd.f32 %v2535, %v2801
      %v2836 = vadd.f32 %v2536, %v2806
      %v2837 = vadd.f32 %v2537, %v2809
      %v2838 = vadd.f32 %v2538, %v2814
      %v2839 = vadd.f32 %v2539, %v2817
      %v2840 = vadd.f32 %v2540, %v2822
      %v2841 = vadd.f32 %v2541, %v2825
      %2842 = vst [vmem:[#allocation2] sm:$0xff] %v2828
      %2843 = vst [vmem:[#allocation2 + $0x8] sm:$0xff] %v2829
      %2844 = vst [vmem:[#allocation2 + $0x10] sm:$0xff] %v2830
      %2845 = vst [vmem:[#allocation2 + $0x18] sm:$0xff] %v2831
      %2846 = vst [vmem:[#allocation2 + $0x20] sm:$0xff] %v2832
      %2847 = vst [vmem:[#allocation2 + $0x28] sm:$0xff] %v2833
      %2848 = vst [vmem:[#allocation2 + $0x30] sm:$0xff] %v2834
      %2849 = vst [vmem:[#allocation2 + $0x38] sm:$0xff] %v2835
      %2850 = vst [vmem:[#allocation2 + $0x40] sm:$0xff] %v2836
      %2851 = vst [vmem:[#allocation2 + $0x48] sm:$0xff] %v2837
      %2852 = vst [vmem:[#allocation2 + $0x50] sm:$0xff] %v2838
      %2853 = vst [vmem:[#allocation2 + $0x58] sm:$0xff] %v2839
      %2854 = vst [vmem:[#allocation2 + $0x60] sm:$0xff] %v2840
      %2855 = vst [vmem:[#allocation2 + $0x68] sm:$0xff] %v2841
      %v2856 = vld [vmem:[#allocation2] sm:$0xff]
      %v2857 = vld [vmem:[#allocation2 + $0x8] sm:$0xff]
      %v2858 = vld [vmem:[#allocation2 + $0x10] sm:$0xff]
      %v2859 = vld [vmem:[#allocation2 + $0x18] sm:$0xff]
      %v2860 = vld [vmem:[#allocation2 + $0x20] sm:$0xff]
      %v2861 = vld [vmem:[#allocation2 + $0x28] sm:$0xff]
      %v2862 = vld [vmem:[#allocation2 + $0x30] sm:$0xff]
      %v2863 = vld [vmem:[#allocation2 + $0x38] sm:$0xff]
      %v2864 = vld [vmem:[#allocation2 + $0x40] sm:$0xff]
      %v2865 = vld [vmem:[#allocation2 + $0x48] sm:$0xff]
      %v2866 = vld [vmem:[#allocation2 + $0x50] sm:$0xff]
      %v2867 = vld [vmem:[#allocation2 + $0x58] sm:$0xff]
      %v2868 = vld [vmem:[#allocation2 + $0x60] sm:$0xff]
      %v2869 = vld [vmem:[#allocation2 + $0x68] sm:$0xff]
      %v2870 = vld [vmem:[%s288 + $0x8] sm:$0x8]
      %v2871 = vld [vmem:[%s288 + $0xc] sm:$0xf]
      %v2872 = vld [vmem:[%s288 + $0x10] sm:$0xf]
      %v2873 = vld [vmem:[%s288 + $0x14] sm:$0xf]
      %v2874 = vld [vmem:[%s288 + $0x18] sm:$0xf]
      %v2875 = vld [vmem:[%s288 + $0x1c] sm:$0xf]
      %v2876 = vld [vmem:[%s288 + $0x20] sm:$0xf]
      %v2877 = vld [vmem:[%s288 + $0x24] sm:$0xf]
      %v2878 = vld [vmem:[%s288 + $0x28] sm:$0xf]
      %v2879 = vld [vmem:[%s288 + $0x2c] sm:$0xf]
      %v2880 = vld [vmem:[%s288 + $0x30] sm:$0xf]
      %v2881 = vld [vmem:[%s288 + $0x34] sm:$0xf]
      %v2882 = vld [vmem:[%s288 + $0x38] sm:$0xf]
      %v2883 = vld [vmem:[%s288 + $0x3c] sm:$0xf]
      %v2884 = vld [vmem:[%s288 + $0x40] sm:$0x7]
      %s2885 = scalar_lea.vmem %s292, 512
      %v2886 = vld [vmem:[%s2885] sm:$0xf]
      %v2887 = vld [vmem:[%s2885 + $0x4] sm:$0xf]
      %v2888 = vld [vmem:[%s2885 + $0x8] sm:$0xf]
      %v2889 = vld [vmem:[%s2885 + $0xc] sm:$0xf]
      %v2890 = vld [vmem:[%s2885 + $0x10] sm:$0xf]
      %v2891 = vld [vmem:[%s2885 + $0x14] sm:$0xf]
      %v2892 = vld [vmem:[%s2885 + $0x18] sm:$0xf]
      %v2893 = vld [vmem:[%s2885 + $0x1c] sm:$0xf]
      %v2894 = vld [vmem:[%s2885 + $0x20] sm:$0xf]
      %v2895 = vld [vmem:[%s2885 + $0x24] sm:$0xf]
      %v2896 = vld [vmem:[%s2885 + $0x28] sm:$0xf]
      %v2897 = vld [vmem:[%s2885 + $0x2c] sm:$0xf]
      %v2898 = vld [vmem:[%s2885 + $0x30] sm:$0xf]
      %v2899 = vld [vmem:[%s2885 + $0x34] sm:$0xf]
      %v2900 = vld [vmem:[%s2885 + $0x38] sm:$0xf]
      %v2901 = vld [vmem:[%s2885 + $0x3c] sm:$0xf]
      %v2917 = vunpack.c.l.b16 %v2870
      %v2918 = vunpack.c.l.b16 %v2871
      %v2919 = vunpack.c.l.b16 %v2872
      %v2920 = vunpack.c.l.b16 %v2873
      %v2921 = vunpack.c.l.b16 %v2874
      %v2922 = vunpack.c.l.b16 %v2875
      %v2923 = vunpack.c.l.b16 %v2876
      %v2924 = vunpack.c.l.b16 %v2877
      %v2925 = vunpack.c.l.b16 %v2878
      %v2926 = vunpack.c.l.b16 %v2879
      %v2927 = vunpack.c.l.b16 %v2880
      %v2928 = vunpack.c.l.b16 %v2881
      %v2929 = vunpack.c.l.b16 %v2882
      %v2930 = vunpack.c.l.b16 %v2883
      %v2931 = vunpack.c.l.b16 %v2884
      %v2932 = vpack.c.b16 %v2918, %v2917
      %v2933 = vpack.c.b16 %v2920, %v2919
      %v2934 = vpack.c.b16 %v2922, %v2921
      %v2935 = vpack.c.b16 %v2924, %v2923
      %v2936 = vpack.c.b16 %v2926, %v2925
      %v2937 = vpack.c.b16 %v2928, %v2927
      %v2938 = vpack.c.b16 %v2930, %v2929
      %v2939 = vpack.c.b16 %v2931, %v2931
      %vm2940 = vcmask 1044480
      %v2941 = vrot.slane %v2932, 3
      %v2942 = vrot.slane %v2933, 3
      %v2943 = vsel %vm2940, %v2941, %v2942
      %v2944 = vrot.slane %v2934, 3
      %v2945 = vsel %vm2940, %v2942, %v2944
      %v2946 = vrot.slane %v2935, 3
      %v2947 = vsel %vm2940, %v2944, %v2946
      %v2948 = vrot.slane %v2936, 3
      %v2949 = vsel %vm2940, %v2946, %v2948
      %v2950 = vrot.slane %v2937, 3
      %v2951 = vsel %vm2940, %v2948, %v2950
      %v2952 = vrot.slane %v2938, 3
      %v2953 = vsel %vm2940, %v2950, %v2952
      %v2954 = vrot.slane %v2939, 3
      %v2955 = vsel %vm2940, %v2952, %v2954
      %v2979 = vunpack.c.l.b16 %v2886
      %v2980 = vunpack.c.l.b16 %v2887
      %v2981 = vunpack.c.l.b16 %v2888
      %v2982 = vunpack.c.l.b16 %v2889
      %v2983 = vunpack.c.l.b16 %v2890
      %v2984 = vunpack.c.l.b16 %v2891
      %v2985 = vunpack.c.l.b16 %v2892
      %v2986 = vunpack.c.l.b16 %v2893
      %v2987 = vunpack.c.l.b16 %v2894
      %v2988 = vunpack.c.l.b16 %v2895
      %v2989 = vunpack.c.l.b16 %v2896
      %v2990 = vunpack.c.l.b16 %v2897
      %v2991 = vunpack.c.l.b16 %v2898
      %v2992 = vunpack.c.l.b16 %v2899
      %v2993 = vunpack.c.l.b16 %v2900
      %v2994 = vunpack.c.l.b16 %v2901
      %v2995 = vpack.c.b16 %v2980, %v2979
      %v2996 = vpack.c.b16 %v2982, %v2981
      %v2997 = vpack.c.b16 %v2984, %v2983
      %v2998 = vpack.c.b16 %v2986, %v2985
      %v2999 = vpack.c.b16 %v2988, %v2987
      %v3000 = vpack.c.b16 %v2990, %v2989
      %v3001 = vpack.c.b16 %v2992, %v2991
      %v3002 = vpack.c.b16 %v2994, %v2993
      %3011 = vmatprep.subr.bf16.mxu0 0
      %3012 = vmatpush1.bf16.msra.mxu0 %v2995
      %3013 = vmatprep.subr.bf16.mxu0 0
      %3014 = vmatpush1.bf16.msra.mxu0 %v2996
      %3015 = vmatprep.subr.bf16.mxu0 0
      %3016 = vmatpush1.bf16.msra.mxu0 %v2997
      %3017 = vmatprep.subr.bf16.mxu0 0
      %3018 = vmatpush1.bf16.msra.mxu0 %v2998
      %3019 = vmatprep.subr.bf16.mxu0 0
      %3020 = vmatpush1.bf16.msra.mxu0 %v2999
      %3021 = vmatprep.subr.bf16.mxu0 0
      %3022 = vmatpush1.bf16.msra.mxu0 %v3000
      %3023 = vmatprep.subr.bf16.mxu0 0
      %3024 = vmatpush1.bf16.msra.mxu0 %v3001
      %3025 = vmatprep.subr.bf16.mxu0 0
      %3026 = vmatpush1.bf16.msra.mxu0 %v3002
      %3027 = vmatprep.subr.bf16.mxu0 0
      %3028 = vmatpush1.bf16.msra.mxu0 0
      %3029 = vmatprep.subr.bf16.mxu0 0
      %3030 = vmatpush1.bf16.msra.mxu0 0
      %3031 = vmatprep.subr.bf16.mxu0 0
      %3032 = vmatpush1.bf16.msra.mxu0 0
      %3033 = vmatprep.subr.bf16.mxu0 0
      %3034 = vmatpush1.bf16.msra.mxu0 0
      %3035 = vmatprep.subr.bf16.mxu0 0
      %3036 = vmatpush1.bf16.msra.mxu0 0
      %3037 = vmatprep.subr.bf16.mxu0 0
      %3038 = vmatpush1.bf16.msra.mxu0 0
      %3039 = vmatprep.subr.bf16.mxu0 0
      %3040 = vmatpush1.bf16.msra.mxu0 0
      %3041 = vmatprep.subr.bf16.mxu0 0
      %3042 = vmatpush1.bf16.msra.mxu0 0
      %3043 = vmatprep.mubr.bf16.mxu0 0
      %3044 = vmatmul.mubr.bf16.gmra.mrb[0].mxu0 %v2943
      %v3045 = vpop.f32.mrb[0].mxu0
      %v3046 = vadd.f32 0.0, %v3045
      %v3047 = vpop.f32.mrb[0].mxu0
      %v3048 = vpop.f32.mrb[0].mxu0
      %v3049 = vadd.f32 0.0, %v3048
      %v3050 = vpop.f32.mrb[0].mxu0
      %3051 = vmatprep.mubr.bf16.mxu0 0
      %3052 = vmatmul.mubr.bf16.gmra.mrb[0].mxu0 %v2945
      %v3053 = vpop.f32.mrb[0].mxu0
      %v3054 = vadd.f32 0.0, %v3053
      %v3055 = vpop.f32.mrb[0].mxu0
      %v3056 = vpop.f32.mrb[0].mxu0
      %v3057 = vadd.f32 0.0, %v3056
      %v3058 = vpop.f32.mrb[0].mxu0
      %3059 = vmatprep.mubr.bf16.mxu0 0
      %3060 = vmatmul.mubr.bf16.gmra.mrb[0].mxu0 %v2947
      %v3061 = vpop.f32.mrb[0].mxu0
      %v3062 = vadd.f32 0.0, %v3061
      %v3063 = vpop.f32.mrb[0].mxu0
      %v3064 = vpop.f32.mrb[0].mxu0
      %v3065 = vadd.f32 0.0, %v3064
      %v3066 = vpop.f32.mrb[0].mxu0
      %3067 = vmatprep.mubr.bf16.mxu0 0
      %3068 = vmatmul.mubr.bf16.gmra.mrb[0].mxu0 %v2949
      %v3069 = vpop.f32.mrb[0].mxu0
      %v3070 = vadd.f32 0.0, %v3069
      %v3071 = vpop.f32.mrb[0].mxu0
      %v3072 = vpop.f32.mrb[0].mxu0
      %v3073 = vadd.f32 0.0, %v3072
      %v3074 = vpop.f32.mrb[0].mxu0
      %3075 = vmatprep.mubr.bf16.mxu0 0
      %3076 = vmatmul.mubr.bf16.gmra.mrb[0].mxu0 %v2951
      %v3077 = vpop.f32.mrb[0].mxu0
      %v3078 = vadd.f32 0.0, %v3077
      %v3079 = vpop.f32.mrb[0].mxu0
      %v3080 = vpop.f32.mrb[0].mxu0
      %v3081 = vadd.f32 0.0, %v3080
      %v3082 = vpop.f32.mrb[0].mxu0
      %3083 = vmatprep.mubr.bf16.mxu0 0
      %3084 = vmatmul.mubr.bf16.gmra.mrb[0].mxu0 %v2953
      %v3085 = vpop.f32.mrb[0].mxu0
      %v3086 = vadd.f32 0.0, %v3085
      %v3087 = vpop.f32.mrb[0].mxu0
      %v3088 = vpop.f32.mrb[0].mxu0
      %v3089 = vadd.f32 0.0, %v3088
      %v3090 = vpop.f32.mrb[0].mxu0
      %3091 = vmatprep.mubr.bf16.mxu0 0
      %3092 = vmatmul.mubr.bf16.gmra.mrb[0].mxu0 %v2955
      %v3093 = vpop.f32.mrb[0].mxu0
      %v3094 = vadd.f32 0.0, %v3093
      %v3095 = vpop.f32.mrb[0].mxu0
      %v3096 = vpop.f32.mrb[0].mxu0
      %v3097 = vadd.f32 0.0, %v3096
      %v3098 = vpop.f32.mrb[0].mxu0
      %3099 = vdwg.mxu0
      %v3100 = vadd.f32 %v2856, %v3046
      %v3101 = vadd.f32 %v2857, %v3049
      %v3102 = vadd.f32 %v2858, %v3054
      %v3103 = vadd.f32 %v2859, %v3057
      %v3104 = vadd.f32 %v2860, %v3062
      %v3105 = vadd.f32 %v2861, %v3065
      %v3106 = vadd.f32 %v2862, %v3070
      %v3107 = vadd.f32 %v2863, %v3073
      %v3108 = vadd.f32 %v2864, %v3078
      %v3109 = vadd.f32 %v2865, %v3081
      %v3110 = vadd.f32 %v2866, %v3086
      %v3111 = vadd.f32 %v2867, %v3089
      %v3112 = vadd.f32 %v2868, %v3094
      %v3113 = vadd.f32 %v2869, %v3097
      %3114 = vst [vmem:[#allocation2] sm:$0xff] %v3100
      %3115 = vst [vmem:[#allocation2 + $0x8] sm:$0xff] %v3101
      %3116 = vst [vmem:[#allocation2 + $0x10] sm:$0xff] %v3102
      %3117 = vst [vmem:[#allocation2 + $0x18] sm:$0xff] %v3103
      %3118 = vst [vmem:[#allocation2 + $0x20] sm:$0xff] %v3104
      %3119 = vst [vmem:[#allocation2 + $0x28] sm:$0xff] %v3105
      %3120 = vst [vmem:[#allocation2 + $0x30] sm:$0xff] %v3106
      %3121 = vst [vmem:[#allocation2 + $0x38] sm:$0xff] %v3107
      %3122 = vst [vmem:[#allocation2 + $0x40] sm:$0xff] %v3108
      %3123 = vst [vmem:[#allocation2 + $0x48] sm:$0xff] %v3109
      %3124 = vst [vmem:[#allocation2 + $0x50] sm:$0xff] %v3110
      %3125 = vst [vmem:[#allocation2 + $0x58] sm:$0xff] %v3111
      %3126 = vst [vmem:[#allocation2 + $0x60] sm:$0xff] %v3112
      %3127 = vst [vmem:[#allocation2 + $0x68] sm:$0xff] %v3113
      %v3128 = vld [vmem:[#allocation2] sm:$0xff]
      %v3129 = vld [vmem:[#allocation2 + $0x8] sm:$0xff]
      %v3130 = vld [vmem:[#allocation2 + $0x10] sm:$0xff]
      %v3131 = vld [vmem:[#allocation2 + $0x18] sm:$0xff]
      %v3132 = vld [vmem:[#allocation2 + $0x20] sm:$0xff]
      %v3133 = vld [vmem:[#allocation2 + $0x28] sm:$0xff]
      %v3134 = vld [vmem:[#allocation2 + $0x30] sm:$0xff]
      %v3135 = vld [vmem:[#allocation2 + $0x38] sm:$0xff]
      %v3136 = vld [vmem:[#allocation2 + $0x40] sm:$0xff]
      %v3137 = vld [vmem:[#allocation2 + $0x48] sm:$0xff]
      %v3138 = vld [vmem:[#allocation2 + $0x50] sm:$0xff]
      %v3139 = vld [vmem:[#allocation2 + $0x58] sm:$0xff]
      %v3140 = vld [vmem:[#allocation2 + $0x60] sm:$0xff]
      %v3141 = vld [vmem:[#allocation2 + $0x68] sm:$0xff]
      %v3142 = vmax.f32 %v3128, 0.0
      %v3143 = vmax.f32 %v3129, 0.0
      %v3144 = vmax.f32 %v3130, 0.0
      %v3145 = vmax.f32 %v3131, 0.0
      %v3146 = vmax.f32 %v3132, 0.0
      %v3147 = vmax.f32 %v3133, 0.0
      %v3148 = vmax.f32 %v3134, 0.0
      %v3149 = vmax.f32 %v3135, 0.0
      %v3150 = vmax.f32 %v3136, 0.0
      %v3151 = vmax.f32 %v3137, 0.0
      %v3152 = vmax.f32 %v3138, 0.0
      %v3153 = vmax.f32 %v3139, 0.0
      %v3154 = vmax.f32 %v3140, 0.0
      %v3155 = vmax.f32 %v3141, 0.0
      %3156 = vst [vmem:[%s312] sm:$0xff] %v3142
      %3157 = vst [vmem:[%s312 + $0x8] sm:$0xff] %v3143
      %3158 = vst [vmem:[%s312 + $0x10] sm:$0xff] %v3144
      %3159 = vst [vmem:[%s312 + $0x18] sm:$0xff] %v3145
      %3160 = vst [vmem:[%s312 + $0x20] sm:$0xff] %v3146
      %3161 = vst [vmem:[%s312 + $0x28] sm:$0xff] %v3147
      %3162 = vst [vmem:[%s312 + $0x30] sm:$0xff] %v3148
      %3163 = vst [vmem:[%s312 + $0x38] sm:$0xff] %v3149
      %3164 = vst [vmem:[%s312 + $0x40] sm:$0xff] %v3150
      %3165 = vst [vmem:[%s312 + $0x48] sm:$0xff] %v3151
      %3166 = vst [vmem:[%s312 + $0x50] sm:$0xff] %v3152
      %3167 = vst [vmem:[%s312 + $0x58] sm:$0xff] %v3153
      %3168 = vst [vmem:[%s312 + $0x60] sm:$0xff] %v3154
      %3169 = vst [vmem:[%s312 + $0x68] sm:$0xff] %v3155
      %p3170 = scmp.lt.s32.totalorder %s21, 1
      %s3171 = scalar_select %p3170, %s21, 1
      %p3172 = scmp.lt.s32.totalorder %s20, 0
      %s3173 = scalar_select %p3172, %s20, 0
      %s3174 = smul.addr %s3171, 14
      %s3175 = sadd.s32 %s3173, %s3174
      %s3176 = smul.addr %s3175, 8
      %s3177 = scalar_lea.vmem %s5, %s3176
      // Predicated region
      $region41: #{basic_block_forward.3} parent=39 // pred_check
        %p3178 = pneg %p178
      $region42: #{basic_block_forward.3} parent=39 // pred_check_branch
        %3180 = sbr.rel (%p3178) target = $region44
      $region43: #{basic_block_forward.3} parent=39 // pred_region
        _
      $region44: #{basic_block_forward.3} parent=39 // pred_fallthru
        _
    $region40: #{basic_block_forward.3} parent=5 // pred_fallthru
      _
    %p3181 = scmp.le.s32.totalorder 2, %s11
    // Predicated region
    $region45: #{basic_block_forward.3} parent=5 // pred_check
      %p3182 = pneg %p3181
    $region46: #{basic_block_forward.3} parent=5 // pred_check_branch
      %3184 = sbr.rel (%p3182) target = $region48
    $region47: #{basic_block_forward.3} parent=5 // pred_region
      %s3185 = ssub.s32 %s11, 2
      // Predicated region
      $region49: #{basic_block_forward.3} parent=47 // pred_check
        %p3186 = pneg %p184
      $region50: #{basic_block_forward.3} parent=47 // pred_check_branch
        %3188 = sbr.rel (%p3186) target = $region52
      $region51: #{basic_block_forward.3} parent=47 // pred_region
        %p3189 = scmp.lt.s32.totalorder %s23, 1
        %s3190 = scalar_select %p3189, %s23, 1
        %p3191 = scmp.lt.s32.totalorder %s22, 0
        %s3192 = scalar_select %p3191, %s22, 0
        %s3193 = smul.addr %s3190, 14
        %s3194 = sadd.s32 %s3192, %s3193
        %s3195 = smul.addr %s3194, 8
        %s3196 = scalar_lea.vmem %s5, %s3195
      $region52: #{basic_block_forward.3} parent=47 // pred_fallthru
        _
    $region48: #{basic_block_forward.3} parent=5 // pred_fallthru
      _
  $region6: #{basic_block_forward.3} parent=0 // loop_footer
    %s15 = sadd.s32 1, %s11
  $region7: #{basic_block_forward.3} parent=0 // loop_footer_branch
    %10 = sbr.rel target = $region3
  $region8: #{basic_block_forward.3} parent=0 // loop_exit
    _

</llo_original>
